<compile_context>
chip_gen: v7x
topology: tpu7x:2x2x1
jax: 0.10.0
libtpu: 0.0.40
codegen_flags: <defaults>
</compile_context>

<pallas_src>
import functools

import jax
import jax.numpy as jnp
import numpy as np
from jax import lax
from jax.experimental import pallas as pl
from jax.experimental.pallas import tpu as pltpu


def _disblock_kernel(xp_ref, w1c_ref, b1_ref, w2_ref, bout_ref, o_ref, hpad_ref):
    """One batch tile (TB samples) per grid step.

    xp_ref  : (TB, H, W, 9*Cin)    precomputed conv1 im2col patches (MXU dtype)
    w1c_ref : (9*Cin, 2*Cout)      fused [conv1 | 1x1-shortcut] weight (MXU dtype)
    b1_ref  : (1, Cout)            conv1 bias (f32, applied before ReLU)
    w2_ref  : (9, Cout, Cout)      conv2 weight, one (Cout, Cout) block per 3x3 tap
    bout_ref: (1, Cout)            b2 + bsc, applied after pooling (f32)
    o_ref   : (TB, H//2, W//2, Cout)  output block (f32)
    hpad_ref: VMEM (TB, H+2, W+2, Cout) f32 scratch: zero-padded conv1 activation
    """
    TB, H, W, K1 = xp_ref.shape
    Hp, Wp = H + 2, W + 2
    Hh, Wh = H // 2, W // 2
    Cout = b1_ref.shape[1]
    M = TB * H * W
    mxu = w1c_ref.dtype

    # ---- fused conv1 (3x3 SAME) + 1x1 shortcut: ONE MXU matmul, N = 2*Cout -----
    patches1 = xp_ref[...].reshape(M, K1)
    hc = jnp.dot(patches1, w1c_ref[...], preferred_element_type=jnp.float32)
    h = jnp.maximum(hc[:, :Cout] + b1_ref[...], 0.0)        # conv1 + b1 -> ReLU (f32)
    sc = hc[:, Cout:]                                        # x @ wsc (bias folded post-pool)

    # ---- stage padded ReLU activation in VMEM scratch ---------------------------
    # Only the thin border strips are re-zeroed each step (interior is overwritten),
    # so correctness holds however the parallel grid axis is split across cores.
    hpad_ref[:, 0:1, :, :] = jnp.zeros((TB, 1, Wp, Cout), jnp.float32)
    hpad_ref[:, H + 1:H + 2, :, :] = jnp.zeros((TB, 1, Wp, Cout), jnp.float32)
    hpad_ref[:, :, 0:1, :] = jnp.zeros((TB, Hp, 1, Cout), jnp.float32)
    hpad_ref[:, :, W + 1:W + 2, :] = jnp.zeros((TB, Hp, 1, Cout), jnp.float32)
    hpad_ref[:, 1:H + 1, 1:W + 1, :] = h.reshape(TB, H, W, Cout)
    hpad = hpad_ref[...]

    # ---- conv2 (3x3 SAME): nine K=Cout tap matmuls, f32 accumulation ------------
    # No (M, 9*Cout) im2col tensor: peak live intermediate is one (M, Cout) slice.
    acc = sc
    for dy in range(3):
        for dx in range(3):
            tap = hpad[:, dy:dy + H, dx:dx + W, :].reshape(M, Cout)
            acc = acc + jnp.dot(tap.astype(mxu), w2_ref[3 * dy + dx],
                                preferred_element_type=jnp.float32)

    # ---- fused 2x2 average pool (sum * 0.25) + folded (b2 + bsc) bias -----------
    c = acc.reshape(TB, H, W, Cout)
    ph = c.reshape(TB, Hh, 2, W, Cout).sum(axis=2)           # H pair-sum: layout-free
    pw = ph.reshape(TB, Hh, Wh, 2, Cout).sum(axis=3)         # W pair-sum on half the data
    out = pw * 0.25 + bout_ref[...].reshape(1, 1, 1, Cout)
    o_ref[...] = out.astype(o_ref.dtype)


def _pick_batch_tile(n):
    """Batch tile: prefer >=4 even grid steps (v7x dual TC balance + pipelining)."""
    for tb in (4, 2, 1):
        g = n // tb
        if n % tb == 0 and g >= 4 and g % 2 == 0:
            return tb
    for tb in (8, 4, 2, 1):
        if n % tb == 0 and n // tb >= 2:
            return tb
    for tb in (8, 4, 2, 1):
        if n % tb == 0:
            return tb
    return 1


@functools.partial(jax.jit, static_argnames=("mxu_dtype",))
def optimized_dis_block(x_nchw, w1, b1, w2, b2, wsc, bsc, *, mxu_dtype=jnp.bfloat16):
    """x_nchw: (N, Cin, H, W) float32.  Conv weights in PyTorch OIHW layout."""
    N, Cin, H, W = x_nchw.shape
    Cout = w1.shape[0]
    assert H % 2 == 0 and W % 2 == 0
    Hh, Wh = H // 2, W // 2
    TB = _pick_batch_tile(N)
    G = N // TB

    # ---- conv1 im2col patches precomputed outside the kernel (Cin is tiny) -----
    x = jnp.transpose(x_nchw, (0, 2, 3, 1)).astype(jnp.float32)          # NHWC
    xp = jnp.pad(x, ((0, 0), (1, 1), (1, 1), (0, 0)))
    x_patches = jnp.concatenate(
        [xp[:, dy:dy + H, dx:dx + W, :] for dy in range(3) for dx in range(3)],
        axis=-1).astype(mxu_dtype)                                       # (N, H, W, 9*Cin)

    # ---- fused conv1 + shortcut weight: (9*Cin, 2*Cout) -------------------------
    # Left half = conv1 im2col weight; right half = zero except the center-tap rows
    # [4*Cin:5*Cin] which hold the 1x1 shortcut weight.
    w1_2d = jnp.transpose(w1, (2, 3, 1, 0)).reshape(9 * Cin, Cout).astype(jnp.float32)
    wsc_2d = jnp.transpose(wsc[:, :, 0, 0], (1, 0)).astype(jnp.float32)  # (Cin, Cout)
    sc_cols = jnp.zeros((9 * Cin, Cout), jnp.float32).at[4 * Cin:5 * Cin, :].set(wsc_2d)
    w1c = jnp.concatenate([w1_2d, sc_cols], axis=1).astype(mxu_dtype)    # (9*Cin, 2*Cout)

    # ---- conv2 weight as 9 per-tap (Cout, Cout) blocks, dy-major / dx order -----
    w2_3d = jnp.transpose(w2, (2, 3, 1, 0)).reshape(9, Cout, Cout).astype(mxu_dtype)

    b1r = b1.reshape(1, Cout).astype(jnp.float32)
    bout = (b2 + bsc).reshape(1, Cout).astype(jnp.float32)   # biases commute with avg-pool

    out = pl.pallas_call(
        _disblock_kernel,
        out_shape=jax.ShapeDtypeStruct((N, Hh, Wh, Cout), jnp.float32),
        grid_spec=pltpu.PrefetchScalarGridSpec(
            num_scalar_prefetch=0,
            grid=(G,),
            in_specs=[
                pl.BlockSpec((TB, H, W, 9 * Cin), lambda n: (n, 0, 0, 0)),
                pl.BlockSpec((9 * Cin, 2 * Cout), lambda n: (0, 0)),
                pl.BlockSpec((1, Cout), lambda n: (0, 0)),
                pl.BlockSpec((9, Cout, Cout), lambda n: (0, 0, 0)),
                pl.BlockSpec((1, Cout), lambda n: (0, 0)),
            ],
            out_specs=pl.BlockSpec((TB, Hh, Wh, Cout), lambda n: (n, 0, 0, 0)),
            scratch_shapes=[
                pltpu.VMEM((TB, H + 2, W + 2, Cout), jnp.float32),
            ],
        ),
        compiler_params=pltpu.CompilerParams(
            dimension_semantics=("parallel",),
            vmem_limit_bytes=48 * 1024 * 1024,
        ),
    )(x_patches, w1c, b1r, w2_3d, bout)

    # (N, Hh, Wh, Cout) -> NCHW
    return jnp.transpose(out, (0, 3, 1, 2))


def _reference_forward(x, w1, b1, w2, b2, wsc, bsc):
    """Pure-JAX NCHW reference mirroring the PyTorch module (f32)."""
    dn = ("NCHW", "OIHW", "NCHW")

    def conv(a, w, b, pad):
        y = lax.conv_general_dilated(a, w, (1, 1), [(pad, pad), (pad, pad)],
                                     dimension_numbers=dn)
        return y + b[None, :, None, None]

    def avgpool2(a):
        n, c, h, w = a.shape
        return a.reshape(n, c, h // 2, 2, w // 2, 2).mean(axis=(3, 5))

    h = conv(x, w1, b1, 1)
    h = jnp.maximum(h, 0.0)
    h = conv(h, w2, b2, 1)
    res = avgpool2(h)
    sc = conv(avgpool2(x), wsc, bsc, 0)
    return res + sc


if __name__ == "__main__":
    key = jax.random.PRNGKey(0)
    N, Cin, Cout, H, W = 2, 4, 8, 16, 16

    ks = jax.random.split(key, 7)
    x = jax.random.normal(ks[0], (N, Cin, H, W), jnp.float32)
    w1 = 0.1 * jax.random.normal(ks[1], (Cout, Cin, 3, 3), jnp.float32)
    b1 = 0.05 * jax.random.normal(ks[2], (Cout,), jnp.float32)
    w2 = 0.1 * jax.random.normal(ks[3], (Cout, Cout, 3, 3), jnp.float32)
    b2 = 0.05 * jax.random.normal(ks[4], (Cout,), jnp.float32)
    wsc = 0.1 * jax.random.normal(ks[5], (Cout, Cin, 1, 1), jnp.float32)
    bsc = 0.05 * jax.random.normal(ks[6], (Cout,), jnp.float32)

    ref = jax.block_until_ready(_reference_forward(x, w1, b1, w2, b2, wsc, bsc))

    # f32 MXU path: tight check of the kernel structure.
    out_f32 = jax.block_until_ready(
        optimized_dis_block(x, w1, b1, w2, b2, wsc, bsc, mxu_dtype=jnp.float32))
    np.testing.assert_allclose(np.asarray(out_f32), np.asarray(ref),
                               rtol=1e-4, atol=1e-4)

    # Default bf16-MXU path (f32 accumulation): looser check.
    out = jax.block_until_ready(optimized_dis_block(x, w1, b1, w2, b2, wsc, bsc))
    np.testing.assert_allclose(np.asarray(out), np.asarray(ref),
                               rtol=5e-2, atol=5e-2)

    assert out.shape == (N, Cout, H // 2, W // 2)
    print("KERNEL_OK")
</pallas_src>

<mosaic_0001>
module attributes {stable_mosaic.version = 11 : i64} {
  func.func @_disblock_kernel(%arg0: i32, %arg1: memref<1x16x16x36xf32, #tpu.memory_space<vmem>>, %arg2: memref<36x16xf32, #tpu.memory_space<vmem>>, %arg3: memref<1x8xf32, #tpu.memory_space<vmem>>, %arg4: memref<9x8x8xf32, #tpu.memory_space<vmem>>, %arg5: memref<1x8xf32, #tpu.memory_space<vmem>>, %arg6: memref<1x8x8x8xf32, #tpu.memory_space<vmem>>, %arg7: memref<1x18x18x8xf32, #tpu.memory_space<vmem>>) attributes {dimension_semantics = [#tpu.dimension_semantics<parallel>], iteration_bounds = array<i64: 2>, scalar_prefetch = 0 : i64, scratch_operands = 1 : i64, tpu.core_type = #tpu.core_type<tc>, window_params = [{transform_indices = @transform_0, window_bounds = array<i64: 1, 16, 16, 36>}, {pipeline_mode = #tpu.pipeline_mode<synchronous>, transform_indices = @transform_1, window_bounds = array<i64: 36, 16>}, {pipeline_mode = #tpu.pipeline_mode<synchronous>, transform_indices = @transform_2, window_bounds = array<i64: 1, 8>}, {pipeline_mode = #tpu.pipeline_mode<synchronous>, transform_indices = @transform_3, window_bounds = array<i64: 9, 8, 8>}, {pipeline_mode = #tpu.pipeline_mode<synchronous>, transform_indices = @transform_4, window_bounds = array<i64: 1, 8>}, {transform_indices = @transform_5, window_bounds = array<i64: 1, 8, 8, 8>}]} {
    %c0 = arith.constant 0 : index
    %c0_0 = arith.constant 0 : index
    %c0_1 = arith.constant 0 : index
    %c0_2 = arith.constant 0 : index
    %0 = vector.load %arg1[%c0, %c0_0, %c0_1, %c0_2] : memref<1x16x16x36xf32, #tpu.memory_space<vmem>>, vector<1x16x16x36xf32>
    %1 = vector.shape_cast %0 : vector<1x16x16x36xf32> to vector<256x36xf32>
    %c0_3 = arith.constant 0 : index
    %c0_4 = arith.constant 0 : index
    %2 = vector.load %arg2[%c0_3, %c0_4] : memref<36x16xf32, #tpu.memory_space<vmem>>, vector<36x16xf32>
    %cst = arith.constant dense<0.000000e+00> : vector<256x16xf32>
    %3 = tpu.matmul %1, %2, %cst {dimension_numbers = #tpu.dot_dimension_numbers<[1], [0], [0], [1], [0, 0, 1, 1], [], []>} : vector<256x36xf32>, vector<36x16xf32>, vector<256x16xf32> -> vector<256x16xf32>
    %4 = vector.extract_strided_slice %3 {offsets = [0, 0], sizes = [256, 8], strides = [1, 1]} : vector<256x16xf32> to vector<256x8xf32>
    %c0_5 = arith.constant 0 : index
    %c0_6 = arith.constant 0 : index
    %5 = vector.load %arg3[%c0_5, %c0_6] : memref<1x8xf32, #tpu.memory_space<vmem>>, vector<1x8xf32>
    %6 = vector.broadcast %5 : vector<1x8xf32> to vector<256x8xf32>
    %7 = arith.addf %4, %6 : vector<256x8xf32>
    %cst_7 = arith.constant 0.000000e+00 : f32
    %8 = vector.broadcast %cst_7 : f32 to vector<256x8xf32>
    %9 = arith.maximumf %7, %8 : vector<256x8xf32>
    %10 = vector.extract_strided_slice %3 {offsets = [0, 8], sizes = [256, 8], strides = [1, 1]} : vector<256x16xf32> to vector<256x8xf32>
    %cst_8 = arith.constant 0.000000e+00 : f32
    %11 = vector.broadcast %cst_8 : f32 to vector<1x1x18x8xf32>
    %c0_9 = arith.constant 0 : index
    %c0_10 = arith.constant 0 : index
    %c0_11 = arith.constant 0 : index
    %c0_12 = arith.constant 0 : index
    %12 = vector.load %arg7[%c0_9, %c0_10, %c0_11, %c0_12] : memref<1x18x18x8xf32, #tpu.memory_space<vmem>>, vector<1x1x18x8xf32>
    tpu.vector_store %arg7[%c0_9, %c0_10, %c0_11, %c0_12], %11 {strides = array<i32>} : memref<1x18x18x8xf32, #tpu.memory_space<vmem>>, vector<1x1x18x8xf32>,
    %cst_13 = arith.constant 0.000000e+00 : f32
    %13 = vector.broadcast %cst_13 : f32 to vector<1x1x18x8xf32>
    %c0_14 = arith.constant 0 : index
    %c17 = arith.constant 17 : index
    %c0_15 = arith.constant 0 : index
    %c0_16 = arith.constant 0 : index
    %14 = vector.load %arg7[%c0_14, %c17, %c0_15, %c0_16] : memref<1x18x18x8xf32, #tpu.memory_space<vmem>>, vector<1x1x18x8xf32>
    tpu.vector_store %arg7[%c0_14, %c17, %c0_15, %c0_16], %13 {strides = array<i32>} : memref<1x18x18x8xf32, #tpu.memory_space<vmem>>, vector<1x1x18x8xf32>,
    %cst_17 = arith.constant 0.000000e+00 : f32
    %15 = vector.broadcast %cst_17 : f32 to vector<1x18x1x8xf32>
    %c0_18 = arith.constant 0 : index
    %c0_19 = arith.constant 0 : index
    %c0_20 = arith.constant 0 : index
    %c0_21 = arith.constant 0 : index
    %16 = vector.load %arg7[%c0_18, %c0_19, %c0_20, %c0_21] : memref<1x18x18x8xf32, #tpu.memory_space<vmem>>, vector<1x18x1x8xf32>
    tpu.vector_store %arg7[%c0_18, %c0_19, %c0_20, %c0_21], %15 {strides = array<i32>} : memref<1x18x18x8xf32, #tpu.memory_space<vmem>>, vector<1x18x1x8xf32>,
    %cst_22 = arith.constant 0.000000e+00 : f32
    %17 = vector.broadcast %cst_22 : f32 to vector<1x18x1x8xf32>
    %c0_23 = arith.constant 0 : index
    %c0_24 = arith.constant 0 : index
    %c17_25 = arith.constant 17 : index
    %c0_26 = arith.constant 0 : index
    %18 = vector.load %arg7[%c0_23, %c0_24, %c17_25, %c0_26] : memref<1x18x18x8xf32, #tpu.memory_space<vmem>>, vector<1x18x1x8xf32>
    tpu.vector_store %arg7[%c0_23, %c0_24, %c17_25, %c0_26], %17 {strides = array<i32>} : memref<1x18x18x8xf32, #tpu.memory_space<vmem>>, vector<1x18x1x8xf32>,
    %19 = vector.shape_cast %9 : vector<256x8xf32> to vector<1x16x16x8xf32>
    %c0_27 = arith.constant 0 : index
    %c1 = arith.constant 1 : index
    %c1_28 = arith.constant 1 : index
    %c0_29 = arith.constant 0 : index
    %20 = vector.load %arg7[%c0_27, %c1, %c1_28, %c0_29] : memref<1x18x18x8xf32, #tpu.memory_space<vmem>>, vector<1x16x16x8xf32>
    tpu.vector_store %arg7[%c0_27, %c1, %c1_28, %c0_29], %19 {strides = array<i32>} : memref<1x18x18x8xf32, #tpu.memory_space<vmem>>, vector<1x16x16x8xf32>,
    %c0_30 = arith.constant 0 : index
    %c0_31 = arith.constant 0 : index
    %c0_32 = arith.constant 0 : index
    %c0_33 = arith.constant 0 : index
    %21 = vector.load %arg7[%c0_30, %c0_31, %c0_32, %c0_33] : memref<1x18x18x8xf32, #tpu.memory_space<vmem>>, vector<1x18x18x8xf32>
    %22 = vector.extract_strided_slice %21 {offsets = [0, 0, 0, 0], sizes = [1, 16, 16, 8], strides = [1, 1, 1, 1]} : vector<1x18x18x8xf32> to vector<1x16x16x8xf32>
    %23 = vector.shape_cast %22 : vector<1x16x16x8xf32> to vector<256x8xf32>
    %c0_34 = arith.constant 0 : index
    %c0_35 = arith.constant 0 : index
    %c0_36 = arith.constant 0 : index
    %24 = vector.load %arg4[%c0_34, %c0_35, %c0_36] : memref<9x8x8xf32, #tpu.memory_space<vmem>>, vector<1x8x8xf32>
    %25 = vector.shape_cast %24 : vector<1x8x8xf32> to vector<8x8xf32>
    %cst_37 = arith.constant dense<0.000000e+00> : vector<256x8xf32>
    %26 = tpu.matmul %23, %25, %cst_37 {dimension_numbers = #tpu.dot_dimension_numbers<[1], [0], [0], [1], [0, 0, 1, 1], [], []>} : vector<256x8xf32>, vector<8x8xf32>, vector<256x8xf32> -> vector<256x8xf32>
    %27 = arith.addf %10, %26 : vector<256x8xf32>
    %28 = vector.extract_strided_slice %21 {offsets = [0, 0, 1, 0], sizes = [1, 16, 16, 8], strides = [1, 1, 1, 1]} : vector<1x18x18x8xf32> to vector<1x16x16x8xf32>
    %29 = vector.shape_cast %28 : vector<1x16x16x8xf32> to vector<256x8xf32>
    %c1_38 = arith.constant 1 : index
    %c0_39 = arith.constant 0 : index
    %c0_40 = arith.constant 0 : index
    %30 = vector.load %arg4[%c1_38, %c0_39, %c0_40] : memref<9x8x8xf32, #tpu.memory_space<vmem>>, vector<1x8x8xf32>
    %31 = vector.shape_cast %30 : vector<1x8x8xf32> to vector<8x8xf32>
    %cst_41 = arith.constant dense<0.000000e+00> : vector<256x8xf32>
    %32 = tpu.matmul %29, %31, %cst_41 {dimension_numbers = #tpu.dot_dimension_numbers<[1], [0], [0], [1], [0, 0, 1, 1], [], []>} : vector<256x8xf32>, vector<8x8xf32>, vector<256x8xf32> -> vector<256x8xf32>
    %33 = arith.addf %27, %32 : vector<256x8xf32>
    %34 = vector.extract_strided_slice %21 {offsets = [0, 0, 2, 0], sizes = [1, 16, 16, 8], strides = [1, 1, 1, 1]} : vector<1x18x18x8xf32> to vector<1x16x16x8xf32>
    %35 = vector.shape_cast %34 : vector<1x16x16x8xf32> to vector<256x8xf32>
    %c2 = arith.constant 2 : index
    %c0_42 = arith.constant 0 : index
    %c0_43 = arith.constant 0 : index
    %36 = vector.load %arg4[%c2, %c0_42, %c0_43] : memref<9x8x8xf32, #tpu.memory_space<vmem>>, vector<1x8x8xf32>
    %37 = vector.shape_cast %36 : vector<1x8x8xf32> to vector<8x8xf32>
    %cst_44 = arith.constant dense<0.000000e+00> : vector<256x8xf32>
    %38 = tpu.matmul %35, %37, %cst_44 {dimension_numbers = #tpu.dot_dimension_numbers<[1], [0], [0], [1], [0, 0, 1, 1], [], []>} : vector<256x8xf32>, vector<8x8xf32>, vector<256x8xf32> -> vector<256x8xf32>
    %39 = arith.addf %33, %38 : vector<256x8xf32>
    %40 = vector.extract_strided_slice %21 {offsets = [0, 1, 0, 0], sizes = [1, 16, 16, 8], strides = [1, 1, 1, 1]} : vector<1x18x18x8xf32> to vector<1x16x16x8xf32>
    %41 = vector.shape_cast %40 : vector<1x16x16x8xf32> to vector<256x8xf32>
    %c3 = arith.constant 3 : index
    %c0_45 = arith.constant 0 : index
    %c0_46 = arith.constant 0 : index
    %42 = vector.load %arg4[%c3, %c0_45, %c0_46] : memref<9x8x8xf32, #tpu.memory_space<vmem>>, vector<1x8x8xf32>
    %43 = vector.shape_cast %42 : vector<1x8x8xf32> to vector<8x8xf32>
    %cst_47 = arith.constant dense<0.000000e+00> : vector<256x8xf32>
    %44 = tpu.matmul %41, %43, %cst_47 {dimension_numbers = #tpu.dot_dimension_numbers<[1], [0], [0], [1], [0, 0, 1, 1], [], []>} : vector<256x8xf32>, vector<8x8xf32>, vector<256x8xf32> -> vector<256x8xf32>
    %45 = arith.addf %39, %44 : vector<256x8xf32>
    %46 = vector.extract_strided_slice %21 {offsets = [0, 1, 1, 0], sizes = [1, 16, 16, 8], strides = [1, 1, 1, 1]} : vector<1x18x18x8xf32> to vector<1x16x16x8xf32>
    %47 = vector.shape_cast %46 : vector<1x16x16x8xf32> to vector<256x8xf32>
    %c4 = arith.constant 4 : index
    %c0_48 = arith.constant 0 : index
    %c0_49 = arith.constant 0 : index
    %48 = vector.load %arg4[%c4, %c0_48, %c0_49] : memref<9x8x8xf32, #tpu.memory_space<vmem>>, vector<1x8x8xf32>
    %49 = vector.shape_cast %48 : vector<1x8x8xf32> to vector<8x8xf32>
    %cst_50 = arith.constant dense<0.000000e+00> : vector<256x8xf32>
    %50 = tpu.matmul %47, %49, %cst_50 {dimension_numbers = #tpu.dot_dimension_numbers<[1], [0], [0], [1], [0, 0, 1, 1], [], []>} : vector<256x8xf32>, vector<8x8xf32>, vector<256x8xf32> -> vector<256x8xf32>
    %51 = arith.addf %45, %50 : vector<256x8xf32>
    %52 = vector.extract_strided_slice %21 {offsets = [0, 1, 2, 0], sizes = [1, 16, 16, 8], strides = [1, 1, 1, 1]} : vector<1x18x18x8xf32> to vector<1x16x16x8xf32>
    %53 = vector.shape_cast %52 : vector<1x16x16x8xf32> to vector<256x8xf32>
    %c5 = arith.constant 5 : index
    %c0_51 = arith.constant 0 : index
    %c0_52 = arith.constant 0 : index
    %54 = vector.load %arg4[%c5, %c0_51, %c0_52] : memref<9x8x8xf32, #tpu.memory_space<vmem>>, vector<1x8x8xf32>
    %55 = vector.shape_cast %54 : vector<1x8x8xf32> to vector<8x8xf32>
    %cst_53 = arith.constant dense<0.000000e+00> : vector<256x8xf32>
    %56 = tpu.matmul %53, %55, %cst_53 {dimension_numbers = #tpu.dot_dimension_numbers<[1], [0], [0], [1], [0, 0, 1, 1], [], []>} : vector<256x8xf32>, vector<8x8xf32>, vector<256x8xf32> -> vector<256x8xf32>
    %57 = arith.addf %51, %56 : vector<256x8xf32>
    %58 = vector.extract_strided_slice %21 {offsets = [0, 2, 0, 0], sizes = [1, 16, 16, 8], strides = [1, 1, 1, 1]} : vector<1x18x18x8xf32> to vector<1x16x16x8xf32>
    %59 = vector.shape_cast %58 : vector<1x16x16x8xf32> to vector<256x8xf32>
    %c6 = arith.constant 6 : index
    %c0_54 = arith.constant 0 : index
    %c0_55 = arith.constant 0 : index
    %60 = vector.load %arg4[%c6, %c0_54, %c0_55] : memref<9x8x8xf32, #tpu.memory_space<vmem>>, vector<1x8x8xf32>
    %61 = vector.shape_cast %60 : vector<1x8x8xf32> to vector<8x8xf32>
    %cst_56 = arith.constant dense<0.000000e+00> : vector<256x8xf32>
    %62 = tpu.matmul %59, %61, %cst_56 {dimension_numbers = #tpu.dot_dimension_numbers<[1], [0], [0], [1], [0, 0, 1, 1], [], []>} : vector<256x8xf32>, vector<8x8xf32>, vector<256x8xf32> -> vector<256x8xf32>
    %63 = arith.addf %57, %62 : vector<256x8xf32>
    %64 = vector.extract_strided_slice %21 {offsets = [0, 2, 1, 0], sizes = [1, 16, 16, 8], strides = [1, 1, 1, 1]} : vector<1x18x18x8xf32> to vector<1x16x16x8xf32>
    %65 = vector.shape_cast %64 : vector<1x16x16x8xf32> to vector<256x8xf32>
    %c7 = arith.constant 7 : index
    %c0_57 = arith.constant 0 : index
    %c0_58 = arith.constant 0 : index
    %66 = vector.load %arg4[%c7, %c0_57, %c0_58] : memref<9x8x8xf32, #tpu.memory_space<vmem>>, vector<1x8x8xf32>
    %67 = vector.shape_cast %66 : vector<1x8x8xf32> to vector<8x8xf32>
    %cst_59 = arith.constant dense<0.000000e+00> : vector<256x8xf32>
    %68 = tpu.matmul %65, %67, %cst_59 {dimension_numbers = #tpu.dot_dimension_numbers<[1], [0], [0], [1], [0, 0, 1, 1], [], []>} : vector<256x8xf32>, vector<8x8xf32>, vector<256x8xf32> -> vector<256x8xf32>
    %69 = arith.addf %63, %68 : vector<256x8xf32>
    %70 = vector.extract_strided_slice %21 {offsets = [0, 2, 2, 0], sizes = [1, 16, 16, 8], strides = [1, 1, 1, 1]} : vector<1x18x18x8xf32> to vector<1x16x16x8xf32>
    %71 = vector.shape_cast %70 : vector<1x16x16x8xf32> to vector<256x8xf32>
    %c8 = arith.constant 8 : index
    %c0_60 = arith.constant 0 : index
    %c0_61 = arith.constant 0 : index
    %72 = vector.load %arg4[%c8, %c0_60, %c0_61] : memref<9x8x8xf32, #tpu.memory_space<vmem>>, vector<1x8x8xf32>
    %73 = vector.shape_cast %72 : vector<1x8x8xf32> to vector<8x8xf32>
    %cst_62 = arith.constant dense<0.000000e+00> : vector<256x8xf32>
    %74 = tpu.matmul %71, %73, %cst_62 {dimension_numbers = #tpu.dot_dimension_numbers<[1], [0], [0], [1], [0, 0, 1, 1], [], []>} : vector<256x8xf32>, vector<8x8xf32>, vector<256x8xf32> -> vector<256x8xf32>
    %75 = arith.addf %69, %74 : vector<256x8xf32>
    %76 = vector.shape_cast %75 : vector<256x8xf32> to vector<1x16x16x8xf32>
    %77 = vector.shape_cast %76 : vector<1x16x16x8xf32> to vector<1x8x2x16x8xf32>
    %cst_63 = arith.constant dense<0.000000e+00> : vector<1x8x16x8xf32>
    %78 = vector.multi_reduction <add>, %77, %cst_63 [2] : vector<1x8x2x16x8xf32> to vector<1x8x16x8xf32>
    %79 = vector.shape_cast %78 : vector<1x8x16x8xf32> to vector<1x8x8x2x8xf32>
    %cst_64 = arith.constant dense<0.000000e+00> : vector<1x8x8x8xf32>
    %80 = vector.multi_reduction <add>, %79, %cst_64 [3] : vector<1x8x8x2x8xf32> to vector<1x8x8x8xf32>
    %cst_65 = arith.constant 2.500000e-01 : f32
    %81 = vector.broadcast %cst_65 : f32 to vector<1x8x8x8xf32>
    %82 = arith.mulf %80, %81 : vector<1x8x8x8xf32>
    %c0_66 = arith.constant 0 : index
    %c0_67 = arith.constant 0 : index
    %83 = vector.load %arg5[%c0_66, %c0_67] : memref<1x8xf32, #tpu.memory_space<vmem>>, vector<1x8xf32>
    %84 = vector.shape_cast %83 : vector<1x8xf32> to vector<1x1x1x8xf32>
    %85 = vector.broadcast %84 : vector<1x1x1x8xf32> to vector<1x8x8x8xf32>
    %86 = arith.addf %82, %85 : vector<1x8x8x8xf32>
    %c0_68 = arith.constant 0 : index
    %c0_69 = arith.constant 0 : index
    %c0_70 = arith.constant 0 : index
    %c0_71 = arith.constant 0 : index
    %87 = vector.load %arg6[%c0_68, %c0_69, %c0_70, %c0_71] : memref<1x8x8x8xf32, #tpu.memory_space<vmem>>, vector<1x8x8x8xf32>
    tpu.vector_store %arg6[%c0_68, %c0_69, %c0_70, %c0_71], %86 {strides = array<i32>} : memref<1x8x8x8xf32, #tpu.memory_space<vmem>>, vector<1x8x8x8xf32>,
    return
  }
  func.func @transform_0(%arg0: i32) -> (i32, i32, i32, i32) {
    %c0_i32 = arith.constant 0 : i32
    %c0_i32_0 = arith.constant 0 : i32
    %c0_i32_1 = arith.constant 0 : i32
    %c0_i32_2 = arith.constant 0 : i32
    return %arg0, %c0_i32, %c0_i32_0, %c0_i32_1 : i32, i32, i32, i32
  }
  func.func @transform_1(%arg0: i32) -> (i32, i32) {
    %c0_i32 = arith.constant 0 : i32
    %c0_i32_0 = arith.constant 0 : i32
    %c0_i32_1 = arith.constant 0 : i32
    return %c0_i32, %c0_i32_0 : i32, i32
  }
  func.func @transform_2(%arg0: i32) -> (i32, i32) {
    %c0_i32 = arith.constant 0 : i32
    %c0_i32_0 = arith.constant 0 : i32
    %c0_i32_1 = arith.constant 0 : i32
    return %c0_i32, %c0_i32_0 : i32, i32
  }
  func.func @transform_3(%arg0: i32) -> (i32, i32, i32) {
    %c0_i32 = arith.constant 0 : i32
    %c0_i32_0 = arith.constant 0 : i32
    %c0_i32_1 = arith.constant 0 : i32
    %c0_i32_2 = arith.constant 0 : i32
    return %c0_i32, %c0_i32_0, %c0_i32_1 : i32, i32, i32
  }
  func.func @transform_4(%arg0: i32) -> (i32, i32) {
    %c0_i32 = arith.constant 0 : i32
    %c0_i32_0 = arith.constant 0 : i32
    %c0_i32_1 = arith.constant 0 : i32
    return %c0_i32, %c0_i32_0 : i32, i32
  }
  func.func @transform_5(%arg0: i32) -> (i32, i32, i32, i32) {
    %c0_i32 = arith.constant 0 : i32
    %c0_i32_0 = arith.constant 0 : i32
    %c0_i32_1 = arith.constant 0 : i32
    %c0_i32_2 = arith.constant 0 : i32
    return %arg0, %c0_i32, %c0_i32_0, %c0_i32_1 : i32, i32, i32, i32
  }
}

</mosaic_0001>

<llo_original>
// kernel: optimized_dis_block.1
$region0: #{optimized_dis_block.1}
  #allocation0 [shape = 'u32[]', space=smem, size = 0x4, offset = 0x4, fixed_abs, tag = 'smem constant byte address 0x4 - core index']
  #allocation1 [shape = 'u32[144,128]{1,0:T(1,128)}', space=vmem, size = 0x12000, scoped, tag = 'internal scratch']
  #allocation2 [shape = 'f32[1,18,18,8]{3,2,1,0:T(8,128)}', space=vmem, size = 0x36000, scoped, tag = 'scratch operand']
  %s0 = inlined_call_operand.vmem [shape: f32[2,16,16,36], index: 0, kind: input, shape index: {}]
  %s1 = inlined_call_operand.vmem [shape: f32[36,16], index: 1, kind: input, shape index: {}]
  %s2 = inlined_call_operand.vmem [shape: f32[1,8], index: 2, kind: input, shape index: {}]
  %s3 = inlined_call_operand.vmem [shape: f32[9,8,8], index: 3, kind: input, shape index: {}]
  %s4 = inlined_call_operand.vmem [shape: f32[1,8], index: 4, kind: input, shape index: {}]
  %s5 = inlined_call_operand.vmem [shape: f32[2,8,8,8], index: 5, kind: output, shape index: {}]
  %s6 = sld [smem:[#allocation0]]
  $region53: #{optimized_dis_block.1} parent=0
    _
  %s8 = ssub.s32 1, %s6
  %s9 = scalar_select 0, %s8, %s6
  loop: start=0, step=1, limit=4
  $region2: #{optimized_dis_block.1} parent=0 // loop_pre_header
    _
  $region3: #{optimized_dis_block.1} parent=0 // loop_header
    %s11 = sphi 0, %s15
    %p12 = scmp.ge.s32.totalorder %s11, 4
    %s21 = sphi 0, %s23
    %s24 = sphi 0, %s21
    %s25 = sphi 0, %s24
    %s41 = sphi 0, %s25
    %s45 = sphi 0, %s45
    %s47 = sphi 0, %s45
    %s48 = sphi 0, %s47
    %s62 = sphi 0, %s48
    %s66 = sphi 0, %s66
    %s68 = sphi 0, %s66
    %s69 = sphi 0, %s68
    %s83 = sphi 0, %s69
    %s87 = sphi 0, %s87
    %s89 = sphi 0, %s87
    %s90 = sphi 0, %s89
    %s104 = sphi 0, %s90
    %s108 = sphi 0, %s108
    %s110 = sphi 0, %s108
    %s111 = sphi 0, %s110
    %s125 = sphi 0, %s111
    %s131 = sphi 0, %s133
    %s134 = sphi 0, %s131
    %s135 = sphi 0, %s134
    %s151 = sphi 0, %s135
  $region4: #{optimized_dis_block.1} parent=0 // loop_header_branch
    %14 = sbr.rel (%p12) target = $region8
  $region5: #{optimized_dis_block.1} parent=0 // loop_body
    %s16 = ssub.s32 %s11, 1
    %s17 = ssub.s32 %s11, 2
    %s18 = sadd.s32 %s11, 1
    %s19 = ssub.s32 %s11, %s18
    %p20 = scmp.eq.s32.totalorder %s19, 0
    %s22 = sadd.s32 %s21, 1
    %s23 = scalar_select %p20, %s21, %s22
    %p26 = pneg %p20
    %p27 = scmp.eq.s32.totalorder %s11, 1
    %p28 = por %p26, %p27
    %p29 = scmp.ne.s32.totalorder %s21, %s24
    %p30 = scmp.eq.s32.totalorder %s11, 0
    %p31 = por %p29, %p30
    %p32 = scmp.ne.s32.totalorder %s21, %s24
    %p33 = scmp.eq.s32.totalorder %s16, 1
    %p34 = por %p32, %p33
    %p35 = scmp.ne.s32.totalorder %s24, %s25
    %p36 = scmp.eq.s32.totalorder %s16, 0
    %p37 = por %p35, %p36
    %p38 = scmp.ne.s32.totalorder %s24, %s25
    %p39 = scmp.eq.s32.totalorder %s17, 1
    %p40 = por %p38, %p39
    %p42 = scmp.ne.s32.totalorder %s25, %s41
    %p43 = scmp.eq.s32.totalorder %s17, 0
    %p44 = por %p42, %p43
    %s46 = sadd.s32 %s45, 1
    %p49 = scmp.eq.s32.totalorder %s11, 1
    %p50 = scmp.ne.s32.totalorder %s45, %s47
    %p51 = scmp.eq.s32.totalorder %s11, 0
    %p52 = por %p50, %p51
    %p53 = scmp.ne.s32.totalorder %s45, %s47
    %p54 = scmp.eq.s32.totalorder %s16, 1
    %p55 = por %p53, %p54
    %p56 = scmp.ne.s32.totalorder %s47, %s48
    %p57 = scmp.eq.s32.totalorder %s16, 0
    %p58 = por %p56, %p57
    %p59 = scmp.ne.s32.totalorder %s47, %s48
    %p60 = scmp.eq.s32.totalorder %s17, 1
    %p61 = por %p59, %p60
    %p63 = scmp.ne.s32.totalorder %s48, %s62
    %p64 = scmp.eq.s32.totalorder %s17, 0
    %p65 = por %p63, %p64
    %s67 = sadd.s32 %s66, 1
    %p70 = scmp.eq.s32.totalorder %s11, 1
    %p71 = scmp.ne.s32.totalorder %s66, %s68
    %p72 = scmp.eq.s32.totalorder %s11, 0
    %p73 = por %p71, %p72
    %p74 = scmp.ne.s32.totalorder %s66, %s68
    %p75 = scmp.eq.s32.totalorder %s16, 1
    %p76 = por %p74, %p75
    %p77 = scmp.ne.s32.totalorder %s68, %s69
    %p78 = scmp.eq.s32.totalorder %s16, 0
    %p79 = por %p77, %p78
    %p80 = scmp.ne.s32.totalorder %s68, %s69
    %p81 = scmp.eq.s32.totalorder %s17, 1
    %p82 = por %p80, %p81
    %p84 = scmp.ne.s32.totalorder %s69, %s83
    %p85 = scmp.eq.s32.totalorder %s17, 0
    %p86 = por %p84, %p85
    %s88 = sadd.s32 %s87, 1
    %p91 = scmp.eq.s32.totalorder %s11, 1
    %p92 = scmp.ne.s32.totalorder %s87, %s89
    %p93 = scmp.eq.s32.totalorder %s11, 0
    %p94 = por %p92, %p93
    %p95 = scmp.ne.s32.totalorder %s87, %s89
    %p96 = scmp.eq.s32.totalorder %s16, 1
    %p97 = por %p95, %p96
    %p98 = scmp.ne.s32.totalorder %s89, %s90
    %p99 = scmp.eq.s32.totalorder %s16, 0
    %p100 = por %p98, %p99
    %p101 = scmp.ne.s32.totalorder %s89, %s90
    %p102 = scmp.eq.s32.totalorder %s17, 1
    %p103 = por %p101, %p102
    %p105 = scmp.ne.s32.totalorder %s90, %s104
    %p106 = scmp.eq.s32.totalorder %s17, 0
    %p107 = por %p105, %p106
    %s109 = sadd.s32 %s108, 1
    %p112 = scmp.eq.s32.totalorder %s11, 1
    %p113 = scmp.ne.s32.totalorder %s108, %s110
    %p114 = scmp.eq.s32.totalorder %s11, 0
    %p115 = por %p113, %p114
    %p116 = scmp.ne.s32.totalorder %s108, %s110
    %p117 = scmp.eq.s32.totalorder %s16, 1
    %p118 = por %p116, %p117
    %p119 = scmp.ne.s32.totalorder %s110, %s111
    %p120 = scmp.eq.s32.totalorder %s16, 0
    %p121 = por %p119, %p120
    %p122 = scmp.ne.s32.totalorder %s110, %s111
    %p123 = scmp.eq.s32.totalorder %s17, 1
    %p124 = por %p122, %p123
    %p126 = scmp.ne.s32.totalorder %s111, %s125
    %p127 = scmp.eq.s32.totalorder %s17, 0
    %p128 = por %p126, %p127
    %s129 = ssub.s32 %s11, %s18
    %p130 = scmp.eq.s32.totalorder %s129, 0
    %s132 = sadd.s32 %s131, 1
    %s133 = scalar_select %p130, %s131, %s132
    %p136 = pneg %p130
    %p137 = scmp.eq.s32.totalorder %s11, 1
    %p138 = por %p136, %p137
    %p139 = scmp.ne.s32.totalorder %s131, %s134
    %p140 = scmp.eq.s32.totalorder %s11, 0
    %p141 = por %p139, %p140
    %p142 = scmp.ne.s32.totalorder %s131, %s134
    %p143 = scmp.eq.s32.totalorder %s16, 1
    %p144 = por %p142, %p143
    %p145 = scmp.ne.s32.totalorder %s134, %s135
    %p146 = scmp.eq.s32.totalorder %s16, 0
    %p147 = por %p145, %p146
    %p148 = scmp.ne.s32.totalorder %s134, %s135
    %p149 = scmp.eq.s32.totalorder %s17, 1
    %p150 = por %p148, %p149
    %p152 = scmp.ne.s32.totalorder %s135, %s151
    %p153 = scmp.eq.s32.totalorder %s17, 0
    %p154 = por %p152, %p153
    %p155 = scmp.le.s32.totalorder 1, %s11
    %p156 = scmp.lt.s32.totalorder %s11, 3
    %p157 = pnand %p155, %p156
    %p158 = pneg %p157
    // Predicated region
    $region9: #{optimized_dis_block.1} parent=5 // pred_check
      _
    $region10: #{optimized_dis_block.1} parent=5 // pred_check_branch
      %160 = sbr.rel (%p157) target = $region12
    $region11: #{optimized_dis_block.1} parent=5 // pred_region
      %s161 = ssub.s32 %s11, 1
      // Predicated region
      $region13: #{optimized_dis_block.1} parent=11 // pred_check
        %p162 = pneg %p58
      $region14: #{optimized_dis_block.1} parent=11 // pred_check_branch
        %164 = sbr.rel (%p162) target = $region16
      $region15: #{optimized_dis_block.1} parent=11 // pred_region
        _
      $region16: #{optimized_dis_block.1} parent=11 // pred_fallthru
        _
      // Predicated region
      $region17: #{optimized_dis_block.1} parent=11 // pred_check
        %p165 = pneg %p79
      $region18: #{optimized_dis_block.1} parent=11 // pred_check_branch
        %167 = sbr.rel (%p165) target = $region20
      $region19: #{optimized_dis_block.1} parent=11 // pred_region
        _
      $region20: #{optimized_dis_block.1} parent=11 // pred_fallthru
        _
      // Predicated region
      $region21: #{optimized_dis_block.1} parent=11 // pred_check
        %p168 = pneg %p100
      $region22: #{optimized_dis_block.1} parent=11 // pred_check_branch
        %170 = sbr.rel (%p168) target = $region24
      $region23: #{optimized_dis_block.1} parent=11 // pred_region
        _
      $region24: #{optimized_dis_block.1} parent=11 // pred_fallthru
        _
      // Predicated region
      $region25: #{optimized_dis_block.1} parent=11 // pred_check
        %p171 = pneg %p121
      $region26: #{optimized_dis_block.1} parent=11 // pred_check_branch
        %173 = sbr.rel (%p171) target = $region28
      $region27: #{optimized_dis_block.1} parent=11 // pred_region
        _
      $region28: #{optimized_dis_block.1} parent=11 // pred_fallthru
        _
    $region12: #{optimized_dis_block.1} parent=5 // pred_fallthru
      _
    %p174 = scmp.lt.s32.totalorder %s11, 2
    // Predicated region
    $region29: #{optimized_dis_block.1} parent=5 // pred_check
      %p175 = pneg %p174
    $region30: #{optimized_dis_block.1} parent=5 // pred_check_branch
      %177 = sbr.rel (%p175) target = $region32
    $region31: #{optimized_dis_block.1} parent=5 // pred_region
      // Predicated region
      $region33: #{optimized_dis_block.1} parent=31 // pred_check
        %p178 = pneg %p31
      $region34: #{optimized_dis_block.1} parent=31 // pred_check_branch
        %180 = sbr.rel (%p178) target = $region36
      $region35: #{optimized_dis_block.1} parent=31 // pred_region
        %p181 = scmp.lt.s32.totalorder %s11, 1
        %s182 = scalar_select %p181, %s11, 1
        %s183 = smul.addr %s182, 32
        %s184 = smul.addr %s183, 8
        %s185 = scalar_lea.vmem %s0, %s184
      $region36: #{optimized_dis_block.1} parent=31 // pred_fallthru
        _
    $region32: #{optimized_dis_block.1} parent=5 // pred_fallthru
      _
    %p186 = scmp.le.s32.totalorder 1, %s11
    %p187 = scmp.lt.s32.totalorder %s11, 3
    %p188 = pnand %p186, %p187
    %p189 = pneg %p188
    // Predicated region
    $region37: #{optimized_dis_block.1} parent=5 // pred_check
      _
    $region38: #{optimized_dis_block.1} parent=5 // pred_check_branch
      %191 = sbr.rel (%p188) target = $region40
    $region39: #{optimized_dis_block.1} parent=5 // pred_region
      %s192 = ssub.s32 %s11, 1
      %p193 = scmp.lt.s32.totalorder %s16, 1
      %s194 = scalar_select %p193, %s16, 1
      %s195 = smul.addr %s194, 32
      %s196 = smul.addr %s195, 8
      %s197 = scalar_lea.vmem %s0, %s196
      %p198 = pneg %p37
      %p199 = pneg %p34
      %p200 = pneg %p58
      %p201 = pneg %p55
      %p202 = pneg %p79
      %p203 = pneg %p76
      %p204 = pneg %p100
      %p205 = pneg %p97
      %p206 = pneg %p121
      %p207 = pneg %p118
      %p208 = pneg %p147
      %p209 = pneg %p144
      %p210 = scmp.lt.s32.totalorder %s16, 1
      %s211 = scalar_select %p210, %s16, 1
      %s212 = smul.addr %s211, 8
      %s213 = smul.addr %s212, 8
      %s214 = scalar_lea.vmem %s5, %s213
      %p215 = scmp.lt.s32.totalorder %s16, 1
      %s216 = scalar_select %p215, %s16, 1
      %s217 = smul.addr %s216, 32
      %s218 = smul.addr %s217, 8
      %s219 = scalar_lea.vmem %s0, %s218
      %p220 = scmp.lt.s32.totalorder %s16, 1
      %s221 = scalar_select %p220, %s16, 1
      %s222 = smul.addr %s221, 8
      %s223 = smul.addr %s222, 8
      %s224 = scalar_lea.vmem %s5, %s223
      %v225 = vld [vmem:[%s219] sm:$0xff]
      %v226 = vld [vmem:[%s219 + $0x8] sm:$0xff]
      %v227 = vld [vmem:[%s219 + $0x10] sm:$0xff]
      %v228 = vld [vmem:[%s219 + $0x18] sm:$0xff]
      %v229 = vld [vmem:[%s219 + $0x20] sm:$0xff]
      %v230 = vld [vmem:[%s219 + $0x28] sm:$0xff]
      %v231 = vld [vmem:[%s219 + $0x30] sm:$0xff]
      %v232 = vld [vmem:[%s219 + $0x38] sm:$0xff]
      %v233 = vld [vmem:[%s219 + $0x40] sm:$0xff]
      %v234 = vld [vmem:[%s219 + $0x48] sm:$0xff]
      %v235 = vld [vmem:[%s219 + $0x50] sm:$0xff]
      %v236 = vld [vmem:[%s219 + $0x58] sm:$0xff]
      %v237 = vld [vmem:[%s219 + $0x60] sm:$0xff]
      %v238 = vld [vmem:[%s219 + $0x68] sm:$0xff]
      %v239 = vld [vmem:[%s219 + $0x70] sm:$0xff]
      %v240 = vld [vmem:[%s219 + $0x78] sm:$0xff]
      %v241 = vld [vmem:[%s219 + $0x80] sm:$0xff]
      %v242 = vld [vmem:[%s219 + $0x88] sm:$0xff]
      %v243 = vld [vmem:[%s219 + $0x90] sm:$0xff]
      %v244 = vld [vmem:[%s219 + $0x98] sm:$0xff]
      %v245 = vld [vmem:[%s219 + $0xa0] sm:$0xff]
      %v246 = vld [vmem:[%s219 + $0xa8] sm:$0xff]
      %v247 = vld [vmem:[%s219 + $0xb0] sm:$0xff]
      %v248 = vld [vmem:[%s219 + $0xb8] sm:$0xff]
      %v249 = vld [vmem:[%s219 + $0xc0] sm:$0xff]
      %v250 = vld [vmem:[%s219 + $0xc8] sm:$0xff]
      %v251 = vld [vmem:[%s219 + $0xd0] sm:$0xff]
      %v252 = vld [vmem:[%s219 + $0xd8] sm:$0xff]
      %v253 = vld [vmem:[%s219 + $0xe0] sm:$0xff]
      %v254 = vld [vmem:[%s219 + $0xe8] sm:$0xff]
      %v255 = vld [vmem:[%s219 + $0xf0] sm:$0xff]
      %v256 = vld [vmem:[%s219 + $0xf8] sm:$0xff]
      %v257 = vld [vmem:[%s1] sm:$0xff]
      %v258 = vld [vmem:[%s1 + $0x8] sm:$0xff]
      %v259 = vld [vmem:[%s1 + $0x10] sm:$0xff]
      %v260 = vld [vmem:[%s1 + $0x18] sm:$0xff]
      %v261 = vld [vmem:[%s1 + $0x20] sm:$0xf]
      %vm262 = vcmask 293888
      %v264 = vsel %vm262, %v225, 0
      %v267 = vsel %vm262, %v226, 0
      %v270 = vsel %vm262, %v227, 0
      %v273 = vsel %vm262, %v228, 0
      %v276 = vsel %vm262, %v229, 0
      %v279 = vsel %vm262, %v230, 0
      %v282 = vsel %vm262, %v231, 0
      %v285 = vsel %vm262, %v232, 0
      %v288 = vsel %vm262, %v233, 0
      %v291 = vsel %vm262, %v234, 0
      %v294 = vsel %vm262, %v235, 0
      %v297 = vsel %vm262, %v236, 0
      %v300 = vsel %vm262, %v237, 0
      %v303 = vsel %vm262, %v238, 0
      %v306 = vsel %vm262, %v239, 0
      %v309 = vsel %vm262, %v240, 0
      %v312 = vsel %vm262, %v241, 0
      %v315 = vsel %vm262, %v242, 0
      %v318 = vsel %vm262, %v243, 0
      %v321 = vsel %vm262, %v244, 0
      %v324 = vsel %vm262, %v245, 0
      %v327 = vsel %vm262, %v246, 0
      %v330 = vsel %vm262, %v247, 0
      %v333 = vsel %vm262, %v248, 0
      %v336 = vsel %vm262, %v249, 0
      %v339 = vsel %vm262, %v250, 0
      %v342 = vsel %vm262, %v251, 0
      %v345 = vsel %vm262, %v252, 0
      %v348 = vsel %vm262, %v253, 0
      %v351 = vsel %vm262, %v254, 0
      %v354 = vsel %vm262, %v255, 0
      %v357 = vsel %vm262, %v256, 0
      %vm359 = vcmask 1043456
      %v361 = vsel %vm359, %v261, 0
      %363 = vmatprep.subr.mxu0 0.0
      %364 = vmatpush1.msra.mxu0 %v257
      %365 = vmatprep.subr.mxu0 0.0
      %366 = vmatpush1.msra.mxu0 %v258
      %367 = vmatprep.subr.mxu0 0.0
      %368 = vmatpush1.msra.mxu0 %v259
      %369 = vmatprep.subr.mxu0 0.0
      %370 = vmatpush1.msra.mxu0 %v260
      %371 = vmatprep.subr.mxu0 0.0
      %372 = vmatpush1.msra.mxu0 %v361
      %373 = vmatprep.subr.mxu0 0.0
      %374 = vmatpush1.msra.mxu0 0.0
      %375 = vmatprep.subr.mxu0 0.0
      %376 = vmatpush1.msra.mxu0 0.0
      %377 = vmatprep.subr.mxu0 0.0
      %378 = vmatpush1.msra.mxu0 0.0
      %379 = vmatprep.subr.mxu0 0.0
      %380 = vmatpush1.msra.mxu0 0.0
      %381 = vmatprep.subr.mxu0 0.0
      %382 = vmatpush1.msra.mxu0 0.0
      %383 = vmatprep.subr.mxu0 0.0
      %384 = vmatpush1.msra.mxu0 0.0
      %385 = vmatprep.subr.mxu0 0.0
      %386 = vmatpush1.msra.mxu0 0.0
      %387 = vmatprep.subr.mxu0 0.0
      %388 = vmatpush1.msra.mxu0 0.0
      %389 = vmatprep.subr.mxu0 0.0
      %390 = vmatpush1.msra.mxu0 0.0
      %391 = vmatprep.subr.mxu0 0.0
      %392 = vmatpush1.msra.mxu0 0.0
      %393 = vmatprep.subr.mxu0 0.0
      %394 = vmatpush1.msra.mxu0 0.0
      %395 = vmatprep.subr.mxu0 0.0
      %396 = vmatpush1.msra.mxu0 0.0
      %397 = vmatprep.subr.mxu0 0.0
      %398 = vmatpush1.msra.mxu0 0.0
      %399 = vmatprep.subr.mxu0 0.0
      %400 = vmatpush1.msra.mxu0 0.0
      %401 = vmatprep.subr.mxu0 0.0
      %402 = vmatpush1.msra.mxu0 0.0
      %403 = vmatprep.subr.mxu0 0.0
      %404 = vmatpush1.msra.mxu0 0.0
      %405 = vmatprep.subr.mxu0 0.0
      %406 = vmatpush1.msra.mxu0 0.0
      %407 = vmatprep.subr.mxu0 0.0
      %408 = vmatpush1.msra.mxu0 0.0
      %409 = vmatprep.subr.mxu0 0.0
      %410 = vmatpush1.msra.mxu0 0.0
      %411 = vmatprep.subr.mxu0 0.0
      %412 = vmatpush1.msra.mxu0 0.0
      %413 = vmatprep.subr.mxu0 0.0
      %414 = vmatpush1.msra.mxu0 0.0
      %415 = vmatprep.subr.mxu0 0.0
      %416 = vmatpush1.msra.mxu0 0.0
      %417 = vmatprep.subr.mxu0 0.0
      %418 = vmatpush1.msra.mxu0 0.0
      %419 = vmatprep.subr.mxu0 0.0
      %420 = vmatpush1.msra.mxu0 0.0
      %421 = vmatprep.subr.mxu0 0.0
      %422 = vmatpush1.msra.mxu0 0.0
      %423 = vmatprep.subr.mxu0 0.0
      %424 = vmatpush1.msra.mxu0 0.0
      %425 = vmatprep.subr.mxu0 0.0
      %426 = vmatpush1.msra.mxu0 0.0
      %427 = vmatprep.mubr.f32.mxu0 0.0
      %428 = vmatmul.mubr.f32.gmra.mrb[0].mxu0 %v264
      %v429 = vpop.f32.mrb[0].mxu0
      %v430 = vadd.f32 0.0, %v429
      %v431 = vpop.f32.mrb[0].mxu0
      %432 = vmatprep.mubr.f32.mxu0 0.0
      %433 = vmatmul.mubr.f32.gmra.mrb[0].mxu0 %v267
      %v434 = vpop.f32.mrb[0].mxu0
      %v435 = vadd.f32 0.0, %v434
      %v436 = vpop.f32.mrb[0].mxu0
      %437 = vmatprep.mubr.f32.mxu0 0.0
      %438 = vmatmul.mubr.f32.gmra.mrb[0].mxu0 %v270
      %v439 = vpop.f32.mrb[0].mxu0
      %v440 = vadd.f32 0.0, %v439
      %v441 = vpop.f32.mrb[0].mxu0
      %442 = vmatprep.mubr.f32.mxu0 0.0
      %443 = vmatmul.mubr.f32.gmra.mrb[0].mxu0 %v273
      %v444 = vpop.f32.mrb[0].mxu0
      %v445 = vadd.f32 0.0, %v444
      %v446 = vpop.f32.mrb[0].mxu0
      %447 = vmatprep.mubr.f32.mxu0 0.0
      %448 = vmatmul.mubr.f32.gmra.mrb[0].mxu0 %v276
      %v449 = vpop.f32.mrb[0].mxu0
      %v450 = vadd.f32 0.0, %v449
      %v451 = vpop.f32.mrb[0].mxu0
      %452 = vmatprep.mubr.f32.mxu0 0.0
      %453 = vmatmul.mubr.f32.gmra.mrb[0].mxu0 %v279
      %v454 = vpop.f32.mrb[0].mxu0
      %v455 = vadd.f32 0.0, %v454
      %v456 = vpop.f32.mrb[0].mxu0
      %457 = vmatprep.mubr.f32.mxu0 0.0
      %458 = vmatmul.mubr.f32.gmra.mrb[0].mxu0 %v282
      %v459 = vpop.f32.mrb[0].mxu0
      %v460 = vadd.f32 0.0, %v459
      %v461 = vpop.f32.mrb[0].mxu0
      %462 = vmatprep.mubr.f32.mxu0 0.0
      %463 = vmatmul.mubr.f32.gmra.mrb[0].mxu0 %v285
      %v464 = vpop.f32.mrb[0].mxu0
      %v465 = vadd.f32 0.0, %v464
      %v466 = vpop.f32.mrb[0].mxu0
      %467 = vmatprep.mubr.f32.mxu0 0.0
      %468 = vmatmul.mubr.f32.gmra.mrb[0].mxu0 %v288
      %v469 = vpop.f32.mrb[0].mxu0
      %v470 = vadd.f32 0.0, %v469
      %v471 = vpop.f32.mrb[0].mxu0
      %472 = vmatprep.mubr.f32.mxu0 0.0
      %473 = vmatmul.mubr.f32.gmra.mrb[0].mxu0 %v291
      %v474 = vpop.f32.mrb[0].mxu0
      %v475 = vadd.f32 0.0, %v474
      %v476 = vpop.f32.mrb[0].mxu0
      %477 = vmatprep.mubr.f32.mxu0 0.0
      %478 = vmatmul.mubr.f32.gmra.mrb[0].mxu0 %v294
      %v479 = vpop.f32.mrb[0].mxu0
      %v480 = vadd.f32 0.0, %v479
      %v481 = vpop.f32.mrb[0].mxu0
      %482 = vmatprep.mubr.f32.mxu0 0.0
      %483 = vmatmul.mubr.f32.gmra.mrb[0].mxu0 %v297
      %v484 = vpop.f32.mrb[0].mxu0
      %v485 = vadd.f32 0.0, %v484
      %v486 = vpop.f32.mrb[0].mxu0
      %487 = vmatprep.mubr.f32.mxu0 0.0
      %488 = vmatmul.mubr.f32.gmra.mrb[0].mxu0 %v300
      %v489 = vpop.f32.mrb[0].mxu0
      %v490 = vadd.f32 0.0, %v489
      %v491 = vpop.f32.mrb[0].mxu0
      %492 = vmatprep.mubr.f32.mxu0 0.0
      %493 = vmatmul.mubr.f32.gmra.mrb[0].mxu0 %v303
      %v494 = vpop.f32.mrb[0].mxu0
      %v495 = vadd.f32 0.0, %v494
      %v496 = vpop.f32.mrb[0].mxu0
      %497 = vmatprep.mubr.f32.mxu0 0.0
      %498 = vmatmul.mubr.f32.gmra.mrb[0].mxu0 %v306
      %v499 = vpop.f32.mrb[0].mxu0
      %v500 = vadd.f32 0.0, %v499
      %v501 = vpop.f32.mrb[0].mxu0
      %502 = vmatprep.mubr.f32.mxu0 0.0
      %503 = vmatmul.mubr.f32.gmra.mrb[0].mxu0 %v309
      %v504 = vpop.f32.mrb[0].mxu0
      %v505 = vadd.f32 0.0, %v504
      %v506 = vpop.f32.mrb[0].mxu0
      %507 = vmatprep.mubr.f32.mxu0 0.0
      %508 = vmatmul.mubr.f32.gmra.mrb[0].mxu0 %v312
      %v509 = vpop.f32.mrb[0].mxu0
      %v510 = vadd.f32 0.0, %v509
      %v511 = vpop.f32.mrb[0].mxu0
      %512 = vmatprep.mubr.f32.mxu0 0.0
      %513 = vmatmul.mubr.f32.gmra.mrb[0].mxu0 %v315
      %v514 = vpop.f32.mrb[0].mxu0
      %v515 = vadd.f32 0.0, %v514
      %v516 = vpop.f32.mrb[0].mxu0
      %517 = vmatprep.mubr.f32.mxu0 0.0
      %518 = vmatmul.mubr.f32.gmra.mrb[0].mxu0 %v318
      %v519 = vpop.f32.mrb[0].mxu0
      %v520 = vadd.f32 0.0, %v519
      %v521 = vpop.f32.mrb[0].mxu0
      %522 = vmatprep.mubr.f32.mxu0 0.0
      %523 = vmatmul.mubr.f32.gmra.mrb[0].mxu0 %v321
      %v524 = vpop.f32.mrb[0].mxu0
      %v525 = vadd.f32 0.0, %v524
      %v526 = vpop.f32.mrb[0].mxu0
      %527 = vmatprep.mubr.f32.mxu0 0.0
      %528 = vmatmul.mubr.f32.gmra.mrb[0].mxu0 %v324
      %v529 = vpop.f32.mrb[0].mxu0
      %v530 = vadd.f32 0.0, %v529
      %v531 = vpop.f32.mrb[0].mxu0
      %532 = vmatprep.mubr.f32.mxu0 0.0
      %533 = vmatmul.mubr.f32.gmra.mrb[0].mxu0 %v327
      %v534 = vpop.f32.mrb[0].mxu0
      %v535 = vadd.f32 0.0, %v534
      %v536 = vpop.f32.mrb[0].mxu0
      %537 = vmatprep.mubr.f32.mxu0 0.0
      %538 = vmatmul.mubr.f32.gmra.mrb[0].mxu0 %v330
      %v539 = vpop.f32.mrb[0].mxu0
      %v540 = vadd.f32 0.0, %v539
      %v541 = vpop.f32.mrb[0].mxu0
      %542 = vmatprep.mubr.f32.mxu0 0.0
      %543 = vmatmul.mubr.f32.gmra.mrb[0].mxu0 %v333
      %v544 = vpop.f32.mrb[0].mxu0
      %v545 = vadd.f32 0.0, %v544
      %v546 = vpop.f32.mrb[0].mxu0
      %547 = vmatprep.mubr.f32.mxu0 0.0
      %548 = vmatmul.mubr.f32.gmra.mrb[0].mxu0 %v336
      %v549 = vpop.f32.mrb[0].mxu0
      %v550 = vadd.f32 0.0, %v549
      %v551 = vpop.f32.mrb[0].mxu0
      %552 = vmatprep.mubr.f32.mxu0 0.0
      %553 = vmatmul.mubr.f32.gmra.mrb[0].mxu0 %v339
      %v554 = vpop.f32.mrb[0].mxu0
      %v555 = vadd.f32 0.0, %v554
      %v556 = vpop.f32.mrb[0].mxu0
      %557 = vmatprep.mubr.f32.mxu0 0.0
      %558 = vmatmul.mubr.f32.gmra.mrb[0].mxu0 %v342
      %v559 = vpop.f32.mrb[0].mxu0
      %v560 = vadd.f32 0.0, %v559
      %v561 = vpop.f32.mrb[0].mxu0
      %562 = vmatprep.mubr.f32.mxu0 0.0
      %563 = vmatmul.mubr.f32.gmra.mrb[0].mxu0 %v345
      %v564 = vpop.f32.mrb[0].mxu0
      %v565 = vadd.f32 0.0, %v564
      %v566 = vpop.f32.mrb[0].mxu0
      %567 = vmatprep.mubr.f32.mxu0 0.0
      %568 = vmatmul.mubr.f32.gmra.mrb[0].mxu0 %v348
      %v569 = vpop.f32.mrb[0].mxu0
      %v570 = vadd.f32 0.0, %v569
      %v571 = vpop.f32.mrb[0].mxu0
      %572 = vmatprep.mubr.f32.mxu0 0.0
      %573 = vmatmul.mubr.f32.gmra.mrb[0].mxu0 %v351
      %v574 = vpop.f32.mrb[0].mxu0
      %v575 = vadd.f32 0.0, %v574
      %v576 = vpop.f32.mrb[0].mxu0
      %577 = vmatprep.mubr.f32.mxu0 0.0
      %578 = vmatmul.mubr.f32.gmra.mrb[0].mxu0 %v354
      %v579 = vpop.f32.mrb[0].mxu0
      %v580 = vadd.f32 0.0, %v579
      %v581 = vpop.f32.mrb[0].mxu0
      %582 = vmatprep.mubr.f32.mxu0 0.0
      %583 = vmatmul.mubr.f32.gmra.mrb[0].mxu0 %v357
      %v584 = vpop.f32.mrb[0].mxu0
      %v585 = vadd.f32 0.0, %v584
      %v586 = vpop.f32.mrb[0].mxu0
      %587 = vdwg.mxu0
      %v588 = vld [vmem:[%s2] sm:$0x1]
      %v590 = vlaneseq
      %v591 = vshrl.u32 %v590, 7
      %v592 = vsub.s32 0, %v591
      %v593 = vrot.slane %v588, %v592
      %v595 = vadd.f32 %v430, %v593
      %v596 = vadd.f32 %v435, %v593
      %v597 = vadd.f32 %v440, %v593
      %v598 = vadd.f32 %v445, %v593
      %v599 = vadd.f32 %v450, %v593
      %v600 = vadd.f32 %v455, %v593
      %v601 = vadd.f32 %v460, %v593
      %v602 = vadd.f32 %v465, %v593
      %v603 = vadd.f32 %v470, %v593
      %v604 = vadd.f32 %v475, %v593
      %v605 = vadd.f32 %v480, %v593
      %v606 = vadd.f32 %v485, %v593
      %v607 = vadd.f32 %v490, %v593
      %v608 = vadd.f32 %v495, %v593
      %v609 = vadd.f32 %v500, %v593
      %v610 = vadd.f32 %v505, %v593
      %v611 = vadd.f32 %v510, %v593
      %v612 = vadd.f32 %v515, %v593
      %v613 = vadd.f32 %v520, %v593
      %v614 = vadd.f32 %v525, %v593
      %v615 = vadd.f32 %v530, %v593
      %v616 = vadd.f32 %v535, %v593
      %v617 = vadd.f32 %v540, %v593
      %v618 = vadd.f32 %v545, %v593
      %v619 = vadd.f32 %v550, %v593
      %v620 = vadd.f32 %v555, %v593
      %v621 = vadd.f32 %v560, %v593
      %v622 = vadd.f32 %v565, %v593
      %v623 = vadd.f32 %v570, %v593
      %v624 = vadd.f32 %v575, %v593
      %v625 = vadd.f32 %v580, %v593
      %v626 = vadd.f32 %v585, %v593
      %v627 = vmax.f32 %v595, 0.0
      %v628 = vmax.f32 %v596, 0.0
      %v629 = vmax.f32 %v597, 0.0
      %v630 = vmax.f32 %v598, 0.0
      %v631 = vmax.f32 %v599, 0.0
      %v632 = vmax.f32 %v600, 0.0
      %v633 = vmax.f32 %v601, 0.0
      %v634 = vmax.f32 %v602, 0.0
      %v635 = vmax.f32 %v603, 0.0
      %v636 = vmax.f32 %v604, 0.0
      %v637 = vmax.f32 %v605, 0.0
      %v638 = vmax.f32 %v606, 0.0
      %v639 = vmax.f32 %v607, 0.0
      %v640 = vmax.f32 %v608, 0.0
      %v641 = vmax.f32 %v609, 0.0
      %v642 = vmax.f32 %v610, 0.0
      %v643 = vmax.f32 %v611, 0.0
      %v644 = vmax.f32 %v612, 0.0
      %v645 = vmax.f32 %v613, 0.0
      %v646 = vmax.f32 %v614, 0.0
      %v647 = vmax.f32 %v615, 0.0
      %v648 = vmax.f32 %v616, 0.0
      %v649 = vmax.f32 %v617, 0.0
      %v650 = vmax.f32 %v618, 0.0
      %v651 = vmax.f32 %v619, 0.0
      %v652 = vmax.f32 %v620, 0.0
      %v653 = vmax.f32 %v621, 0.0
      %v654 = vmax.f32 %v622, 0.0
      %v655 = vmax.f32 %v623, 0.0
      %v656 = vmax.f32 %v624, 0.0
      %v657 = vmax.f32 %v625, 0.0
      %v658 = vmax.f32 %v626, 0.0
      %vm659 = vcmask 64512
      %660 = vst.msk [vmem:[#allocation2] sm:$0xff] %vm659, 0.0
      %661 = vst.msk [vmem:[#allocation2 + $0x8] sm:$0xff] %vm659, 0.0
      %vm662 = vcmask 58368
      %663 = vst.msk [vmem:[#allocation2 + $0x10] sm:$0x3] %vm662, 0.0
      %s664 = scalar_lea.vmem [#allocation2], 408
      %665 = vst.msk [vmem:[%s664] sm:$0xff] %vm659, 0.0
      %666 = vst.msk [vmem:[%s664 + $0x8] sm:$0xff] %vm659, 0.0
      %667 = vst.msk [vmem:[%s664 + $0x10] sm:$0x3] %vm662, 0.0
      %vm668 = vcmask 57344
      %669 = vst.msk [vmem:[#allocation2] sm:$0x1] %vm668, 0.0
      %670 = vst.msk [vmem:[#allocation2 + $0x18] sm:$0x1] %vm668, 0.0
      %671 = vst.msk [vmem:[#allocation2 + $0x30] sm:$0x1] %vm668, 0.0
      %672 = vst.msk [vmem:[#allocation2 + $0x48] sm:$0x1] %vm668, 0.0
      %673 = vst.msk [vmem:[#allocation2 + $0x60] sm:$0x1] %vm668, 0.0
      %674 = vst.msk [vmem:[#allocation2 + $0x78] sm:$0x1] %vm668, 0.0
      %675 = vst.msk [vmem:[#allocation2 + $0x90] sm:$0x1] %vm668, 0.0
      %676 = vst.msk [vmem:[#allocation2 + $0xa8] sm:$0x1] %vm668, 0.0
      %677 = vst.msk [vmem:[#allocation2 + $0xc0] sm:$0x1] %vm668, 0.0
      %678 = vst.msk [vmem:[#allocation2 + $0xd8] sm:$0x1] %vm668, 0.0
      %679 = vst.msk [vmem:[#allocation2 + $0xf0] sm:$0x1] %vm668, 0.0
      %680 = vst.msk [vmem:[#allocation2 + $0x108] sm:$0x1] %vm668, 0.0
      %681 = vst.msk [vmem:[#allocation2 + $0x120] sm:$0x1] %vm668, 0.0
      %682 = vst.msk [vmem:[#allocation2 + $0x138] sm:$0x1] %vm668, 0.0
      %683 = vst.msk [vmem:[#allocation2 + $0x150] sm:$0x1] %vm668, 0.0
      %684 = vst.msk [vmem:[#allocation2 + $0x168] sm:$0x1] %vm668, 0.0
      %685 = vst.msk [vmem:[#allocation2 + $0x180] sm:$0x1] %vm668, 0.0
      %686 = vst.msk [vmem:[#allocation2 + $0x198] sm:$0x1] %vm668, 0.0
      %687 = vst.msk [vmem:[#allocation2 + $0x11] sm:$0x1] %vm668, 0.0
      %688 = vst.msk [vmem:[#allocation2 + $0x29] sm:$0x1] %vm668, 0.0
      %689 = vst.msk [vmem:[#allocation2 + $0x41] sm:$0x1] %vm668, 0.0
      %690 = vst.msk [vmem:[#allocation2 + $0x59] sm:$0x1] %vm668, 0.0
      %691 = vst.msk [vmem:[#allocation2 + $0x71] sm:$0x1] %vm668, 0.0
      %692 = vst.msk [vmem:[#allocation2 + $0x89] sm:$0x1] %vm668, 0.0
      %693 = vst.msk [vmem:[#allocation2 + $0xa1] sm:$0x1] %vm668, 0.0
      %694 = vst.msk [vmem:[#allocation2 + $0xb9] sm:$0x1] %vm668, 0.0
      %695 = vst.msk [vmem:[#allocation2 + $0xd1] sm:$0x1] %vm668, 0.0
      %696 = vst.msk [vmem:[#allocation2 + $0xe9] sm:$0x1] %vm668, 0.0
      %697 = vst.msk [vmem:[#allocation2 + $0x101] sm:$0x1] %vm668, 0.0
      %698 = vst.msk [vmem:[#allocation2 + $0x119] sm:$0x1] %vm668, 0.0
      %699 = vst.msk [vmem:[#allocation2 + $0x131] sm:$0x1] %vm668, 0.0
      %700 = vst.msk [vmem:[#allocation2 + $0x149] sm:$0x1] %vm668, 0.0
      %701 = vst.msk [vmem:[#allocation2 + $0x161] sm:$0x1] %vm668, 0.0
      %702 = vst.msk [vmem:[#allocation2 + $0x179] sm:$0x1] %vm668, 0.0
      %703 = vst.msk [vmem:[#allocation2 + $0x191] sm:$0x1] %vm668, 0.0
      %704 = vst.msk [vmem:[#allocation2 + $0x1a9] sm:$0x1] %vm668, 0.0
      %s705 = scalar_lea.vmem [#allocation2], 24
      %706 = vst.msk [vmem:[%s705 + $0x1] sm:$0xff] %vm659, %v627
      %707 = vst.msk [vmem:[%s705 + $0x9] sm:$0xff] %vm659, %v628
      %708 = vst.msk [vmem:[%s705 + $0x19] sm:$0xff] %vm659, %v629
      %709 = vst.msk [vmem:[%s705 + $0x21] sm:$0xff] %vm659, %v630
      %710 = vst.msk [vmem:[%s705 + $0x31] sm:$0xff] %vm659, %v631
      %711 = vst.msk [vmem:[%s705 + $0x39] sm:$0xff] %vm659, %v632
      %712 = vst.msk [vmem:[%s705 + $0x49] sm:$0xff] %vm659, %v633
      %713 = vst.msk [vmem:[%s705 + $0x51] sm:$0xff] %vm659, %v634
      %714 = vst.msk [vmem:[%s705 + $0x61] sm:$0xff] %vm659, %v635
      %715 = vst.msk [vmem:[%s705 + $0x69] sm:$0xff] %vm659, %v636
      %716 = vst.msk [vmem:[%s705 + $0x79] sm:$0xff] %vm659, %v637
      %717 = vst.msk [vmem:[%s705 + $0x81] sm:$0xff] %vm659, %v638
      %718 = vst.msk [vmem:[%s705 + $0x91] sm:$0xff] %vm659, %v639
      %719 = vst.msk [vmem:[%s705 + $0x99] sm:$0xff] %vm659, %v640
      %720 = vst.msk [vmem:[%s705 + $0xa9] sm:$0xff] %vm659, %v641
      %721 = vst.msk [vmem:[%s705 + $0xb1] sm:$0xff] %vm659, %v642
      %722 = vst.msk [vmem:[%s705 + $0xc1] sm:$0xff] %vm659, %v643
      %723 = vst.msk [vmem:[%s705 + $0xc9] sm:$0xff] %vm659, %v644
      %724 = vst.msk [vmem:[%s705 + $0xd9] sm:$0xff] %vm659, %v645
      %725 = vst.msk [vmem:[%s705 + $0xe1] sm:$0xff] %vm659, %v646
      %726 = vst.msk [vmem:[%s705 + $0xf1] sm:$0xff] %vm659, %v647
      %727 = vst.msk [vmem:[%s705 + $0xf9] sm:$0xff] %vm659, %v648
      %728 = vst.msk [vmem:[%s705 + $0x109] sm:$0xff] %vm659, %v649
      %729 = vst.msk [vmem:[%s705 + $0x111] sm:$0xff] %vm659, %v650
      %730 = vst.msk [vmem:[%s705 + $0x121] sm:$0xff] %vm659, %v651
      %731 = vst.msk [vmem:[%s705 + $0x129] sm:$0xff] %vm659, %v652
      %732 = vst.msk [vmem:[%s705 + $0x139] sm:$0xff] %vm659, %v653
      %733 = vst.msk [vmem:[%s705 + $0x141] sm:$0xff] %vm659, %v654
      %734 = vst.msk [vmem:[%s705 + $0x151] sm:$0xff] %vm659, %v655
      %735 = vst.msk [vmem:[%s705 + $0x159] sm:$0xff] %vm659, %v656
      %736 = vst.msk [vmem:[%s705 + $0x169] sm:$0xff] %vm659, %v657
      %737 = vst.msk [vmem:[%s705 + $0x171] sm:$0xff] %vm659, %v658
      %v738 = vld [vmem:[#allocation2] sm:$0xff]
      %v739 = vld [vmem:[#allocation2 + $0x8] sm:$0xff]
      %v740 = vld [vmem:[#allocation2 + $0x10] sm:$0x3]
      %v741 = vld [vmem:[#allocation2 + $0x18] sm:$0xff]
      %v742 = vld [vmem:[#allocation2 + $0x20] sm:$0xff]
      %v743 = vld [vmem:[#allocation2 + $0x28] sm:$0x3]
      %v744 = vld [vmem:[#allocation2 + $0x30] sm:$0xff]
      %v745 = vld [vmem:[#allocation2 + $0x38] sm:$0xff]
      %v746 = vld [vmem:[#allocation2 + $0x40] sm:$0x3]
      %v747 = vld [vmem:[#allocation2 + $0x48] sm:$0xff]
      %v748 = vld [vmem:[#allocation2 + $0x50] sm:$0xff]
      %v749 = vld [vmem:[#allocation2 + $0x58] sm:$0x3]
      %v750 = vld [vmem:[#allocation2 + $0x60] sm:$0xff]
      %v751 = vld [vmem:[#allocation2 + $0x68] sm:$0xff]
      %v752 = vld [vmem:[#allocation2 + $0x70] sm:$0x3]
      %v753 = vld [vmem:[#allocation2 + $0x78] sm:$0xff]
      %v754 = vld [vmem:[#allocation2 + $0x80] sm:$0xff]
      %v755 = vld [vmem:[#allocation2 + $0x88] sm:$0x3]
      %v756 = vld [vmem:[#allocation2 + $0x90] sm:$0xff]
      %v757 = vld [vmem:[#allocation2 + $0x98] sm:$0xff]
      %v758 = vld [vmem:[#allocation2 + $0xa0] sm:$0x3]
      %v759 = vld [vmem:[#allocation2 + $0xa8] sm:$0xff]
      %v760 = vld [vmem:[#allocation2 + $0xb0] sm:$0xff]
      %v761 = vld [vmem:[#allocation2 + $0xb8] sm:$0x3]
      %v762 = vld [vmem:[#allocation2 + $0xc0] sm:$0xff]
      %v763 = vld [vmem:[#allocation2 + $0xc8] sm:$0xff]
      %v764 = vld [vmem:[#allocation2 + $0xd0] sm:$0x3]
      %v765 = vld [vmem:[#allocation2 + $0xd8] sm:$0xff]
      %v766 = vld [vmem:[#allocation2 + $0xe0] sm:$0xff]
      %v767 = vld [vmem:[#allocation2 + $0xe8] sm:$0x3]
      %v768 = vld [vmem:[#allocation2 + $0xf0] sm:$0xff]
      %v769 = vld [vmem:[#allocation2 + $0xf8] sm:$0xff]
      %v770 = vld [vmem:[#allocation2 + $0x100] sm:$0x3]
      %v771 = vld [vmem:[#allocation2 + $0x108] sm:$0xff]
      %v772 = vld [vmem:[#allocation2 + $0x110] sm:$0xff]
      %v773 = vld [vmem:[#allocation2 + $0x118] sm:$0x3]
      %v774 = vld [vmem:[#allocation2 + $0x120] sm:$0xff]
      %v775 = vld [vmem:[#allocation2 + $0x128] sm:$0xff]
      %v776 = vld [vmem:[#allocation2 + $0x130] sm:$0x3]
      %v777 = vld [vmem:[#allocation2 + $0x138] sm:$0xff]
      %v778 = vld [vmem:[#allocation2 + $0x140] sm:$0xff]
      %v779 = vld [vmem:[#allocation2 + $0x148] sm:$0x3]
      %v780 = vld [vmem:[#allocation2 + $0x150] sm:$0xff]
      %v781 = vld [vmem:[#allocation2 + $0x158] sm:$0xff]
      %v782 = vld [vmem:[#allocation2 + $0x160] sm:$0x3]
      %v783 = vld [vmem:[#allocation2 + $0x168] sm:$0xff]
      %v784 = vld [vmem:[#allocation2 + $0x170] sm:$0xff]
      %v785 = vld [vmem:[#allocation2 + $0x178] sm:$0x3]
      %v786 = vld [vmem:[#allocation2 + $0x180] sm:$0xff]
      %v787 = vld [vmem:[#allocation2 + $0x188] sm:$0xff]
      %v788 = vld [vmem:[#allocation2 + $0x190] sm:$0x3]
      %v789 = vld [vmem:[#allocation2 + $0x198] sm:$0xff]
      %v790 = vld [vmem:[#allocation2 + $0x1a0] sm:$0xff]
      %v791 = vld [vmem:[#allocation2 + $0x1a8] sm:$0x3]
      %v792 = vld [vmem:[%s3] sm:$0xff]
      %v794 = vsel %vm659, %v738, 0
      %v797 = vsel %vm659, %v739, 0
      %v800 = vsel %vm659, %v741, 0
      %v803 = vsel %vm659, %v742, 0
      %v806 = vsel %vm659, %v744, 0
      %v809 = vsel %vm659, %v745, 0
      %v812 = vsel %vm659, %v747, 0
      %v815 = vsel %vm659, %v748, 0
      %v818 = vsel %vm659, %v750, 0
      %v821 = vsel %vm659, %v751, 0
      %v824 = vsel %vm659, %v753, 0
      %v827 = vsel %vm659, %v754, 0
      %v830 = vsel %vm659, %v756, 0
      %v833 = vsel %vm659, %v757, 0
      %v836 = vsel %vm659, %v759, 0
      %v839 = vsel %vm659, %v760, 0
      %v842 = vsel %vm659, %v762, 0
      %v845 = vsel %vm659, %v763, 0
      %v848 = vsel %vm659, %v765, 0
      %v851 = vsel %vm659, %v766, 0
      %v854 = vsel %vm659, %v768, 0
      %v857 = vsel %vm659, %v769, 0
      %v860 = vsel %vm659, %v771, 0
      %v863 = vsel %vm659, %v772, 0
      %v866 = vsel %vm659, %v774, 0
      %v869 = vsel %vm659, %v775, 0
      %v872 = vsel %vm659, %v777, 0
      %v875 = vsel %vm659, %v778, 0
      %v878 = vsel %vm659, %v780, 0
      %v881 = vsel %vm659, %v781, 0
      %v884 = vsel %vm659, %v783, 0
      %v887 = vsel %vm659, %v784, 0
      %889 = vmatprep.subr.mxu0 0.0
      %890 = vmatpush1.msra.mxu0 %v792
      %891 = vmatprep.subr.mxu0 0.0
      %892 = vmatpush1.msra.mxu0 0.0
      %893 = vmatprep.subr.mxu0 0.0
      %894 = vmatpush1.msra.mxu0 0.0
      %895 = vmatprep.subr.mxu0 0.0
      %896 = vmatpush1.msra.mxu0 0.0
      %897 = vmatprep.subr.mxu0 0.0
      %898 = vmatpush1.msra.mxu0 0.0
      %899 = vmatprep.subr.mxu0 0.0
      %900 = vmatpush1.msra.mxu0 0.0
      %901 = vmatprep.subr.mxu0 0.0
      %902 = vmatpush1.msra.mxu0 0.0
      %903 = vmatprep.subr.mxu0 0.0
      %904 = vmatpush1.msra.mxu0 0.0
      %905 = vmatprep.subr.mxu0 0.0
      %906 = vmatpush1.msra.mxu0 0.0
      %907 = vmatprep.subr.mxu0 0.0
      %908 = vmatpush1.msra.mxu0 0.0
      %909 = vmatprep.subr.mxu0 0.0
      %910 = vmatpush1.msra.mxu0 0.0
      %911 = vmatprep.subr.mxu0 0.0
      %912 = vmatpush1.msra.mxu0 0.0
      %913 = vmatprep.subr.mxu0 0.0
      %914 = vmatpush1.msra.mxu0 0.0
      %915 = vmatprep.subr.mxu0 0.0
      %916 = vmatpush1.msra.mxu0 0.0
      %917 = vmatprep.subr.mxu0 0.0
      %918 = vmatpush1.msra.mxu0 0.0
      %919 = vmatprep.subr.mxu0 0.0
      %920 = vmatpush1.msra.mxu0 0.0
      %921 = vmatprep.subr.mxu0 0.0
      %922 = vmatpush1.msra.mxu0 0.0
      %923 = vmatprep.subr.mxu0 0.0
      %924 = vmatpush1.msra.mxu0 0.0
      %925 = vmatprep.subr.mxu0 0.0
      %926 = vmatpush1.msra.mxu0 0.0
      %927 = vmatprep.subr.mxu0 0.0
      %928 = vmatpush1.msra.mxu0 0.0
      %929 = vmatprep.subr.mxu0 0.0
      %930 = vmatpush1.msra.mxu0 0.0
      %931 = vmatprep.subr.mxu0 0.0
      %932 = vmatpush1.msra.mxu0 0.0
      %933 = vmatprep.subr.mxu0 0.0
      %934 = vmatpush1.msra.mxu0 0.0
      %935 = vmatprep.subr.mxu0 0.0
      %936 = vmatpush1.msra.mxu0 0.0
      %937 = vmatprep.subr.mxu0 0.0
      %938 = vmatpush1.msra.mxu0 0.0
      %939 = vmatprep.subr.mxu0 0.0
      %940 = vmatpush1.msra.mxu0 0.0
      %941 = vmatprep.subr.mxu0 0.0
      %942 = vmatpush1.msra.mxu0 0.0
      %943 = vmatprep.subr.mxu0 0.0
      %944 = vmatpush1.msra.mxu0 0.0
      %945 = vmatprep.subr.mxu0 0.0
      %946 = vmatpush1.msra.mxu0 0.0
      %947 = vmatprep.subr.mxu0 0.0
      %948 = vmatpush1.msra.mxu0 0.0
      %949 = vmatprep.subr.mxu0 0.0
      %950 = vmatpush1.msra.mxu0 0.0
      %951 = vmatprep.subr.mxu0 0.0
      %952 = vmatpush1.msra.mxu0 0.0
      %953 = vmatprep.mubr.f32.mxu0 0.0
      %954 = vmatmul.mubr.f32.gmra.mrb[0].mxu0 %v794
      %v955 = vpop.f32.mrb[0].mxu0
      %v956 = vadd.f32 0.0, %v955
      %v957 = vpop.f32.mrb[0].mxu0
      %958 = vmatprep.mubr.f32.mxu0 0.0
      %959 = vmatmul.mubr.f32.gmra.mrb[0].mxu0 %v797
      %v960 = vpop.f32.mrb[0].mxu0
      %v961 = vadd.f32 0.0, %v960
      %v962 = vpop.f32.mrb[0].mxu0
      %963 = vmatprep.mubr.f32.mxu0 0.0
      %964 = vmatmul.mubr.f32.gmra.mrb[0].mxu0 %v800
      %v965 = vpop.f32.mrb[0].mxu0
      %v966 = vadd.f32 0.0, %v965
      %v967 = vpop.f32.mrb[0].mxu0
      %968 = vmatprep.mubr.f32.mxu0 0.0
      %969 = vmatmul.mubr.f32.gmra.mrb[0].mxu0 %v803
      %v970 = vpop.f32.mrb[0].mxu0
      %v971 = vadd.f32 0.0, %v970
      %v972 = vpop.f32.mrb[0].mxu0
      %973 = vmatprep.mubr.f32.mxu0 0.0
      %974 = vmatmul.mubr.f32.gmra.mrb[0].mxu0 %v806
      %v975 = vpop.f32.mrb[0].mxu0
      %v976 = vadd.f32 0.0, %v975
      %v977 = vpop.f32.mrb[0].mxu0
      %978 = vmatprep.mubr.f32.mxu0 0.0
      %979 = vmatmul.mubr.f32.gmra.mrb[0].mxu0 %v809
      %v980 = vpop.f32.mrb[0].mxu0
      %v981 = vadd.f32 0.0, %v980
      %v982 = vpop.f32.mrb[0].mxu0
      %983 = vmatprep.mubr.f32.mxu0 0.0
      %984 = vmatmul.mubr.f32.gmra.mrb[0].mxu0 %v812
      %v985 = vpop.f32.mrb[0].mxu0
      %v986 = vadd.f32 0.0, %v985
      %v987 = vpop.f32.mrb[0].mxu0
      %988 = vmatprep.mubr.f32.mxu0 0.0
      %989 = vmatmul.mubr.f32.gmra.mrb[0].mxu0 %v815
      %v990 = vpop.f32.mrb[0].mxu0
      %v991 = vadd.f32 0.0, %v990
      %v992 = vpop.f32.mrb[0].mxu0
      %993 = vmatprep.mubr.f32.mxu0 0.0
      %994 = vmatmul.mubr.f32.gmra.mrb[0].mxu0 %v818
      %v995 = vpop.f32.mrb[0].mxu0
      %v996 = vadd.f32 0.0, %v995
      %v997 = vpop.f32.mrb[0].mxu0
      %998 = vmatprep.mubr.f32.mxu0 0.0
      %999 = vmatmul.mubr.f32.gmra.mrb[0].mxu0 %v821
      %v1000 = vpop.f32.mrb[0].mxu0
      %v1001 = vadd.f32 0.0, %v1000
      %v1002 = vpop.f32.mrb[0].mxu0
      %1003 = vmatprep.mubr.f32.mxu0 0.0
      %1004 = vmatmul.mubr.f32.gmra.mrb[0].mxu0 %v824
      %v1005 = vpop.f32.mrb[0].mxu0
      %v1006 = vadd.f32 0.0, %v1005
      %v1007 = vpop.f32.mrb[0].mxu0
      %1008 = vmatprep.mubr.f32.mxu0 0.0
      %1009 = vmatmul.mubr.f32.gmra.mrb[0].mxu0 %v827
      %v1010 = vpop.f32.mrb[0].mxu0
      %v1011 = vadd.f32 0.0, %v1010
      %v1012 = vpop.f32.mrb[0].mxu0
      %1013 = vmatprep.mubr.f32.mxu0 0.0
      %1014 = vmatmul.mubr.f32.gmra.mrb[0].mxu0 %v830
      %v1015 = vpop.f32.mrb[0].mxu0
      %v1016 = vadd.f32 0.0, %v1015
      %v1017 = vpop.f32.mrb[0].mxu0
      %1018 = vmatprep.mubr.f32.mxu0 0.0
      %1019 = vmatmul.mubr.f32.gmra.mrb[0].mxu0 %v833
      %v1020 = vpop.f32.mrb[0].mxu0
      %v1021 = vadd.f32 0.0, %v1020
      %v1022 = vpop.f32.mrb[0].mxu0
      %1023 = vmatprep.mubr.f32.mxu0 0.0
      %1024 = vmatmul.mubr.f32.gmra.mrb[0].mxu0 %v836
      %v1025 = vpop.f32.mrb[0].mxu0
      %v1026 = vadd.f32 0.0, %v1025
      %v1027 = vpop.f32.mrb[0].mxu0
      %1028 = vmatprep.mubr.f32.mxu0 0.0
      %1029 = vmatmul.mubr.f32.gmra.mrb[0].mxu0 %v839
      %v1030 = vpop.f32.mrb[0].mxu0
      %v1031 = vadd.f32 0.0, %v1030
      %v1032 = vpop.f32.mrb[0].mxu0
      %1033 = vmatprep.mubr.f32.mxu0 0.0
      %1034 = vmatmul.mubr.f32.gmra.mrb[0].mxu0 %v842
      %v1035 = vpop.f32.mrb[0].mxu0
      %v1036 = vadd.f32 0.0, %v1035
      %v1037 = vpop.f32.mrb[0].mxu0
      %1038 = vmatprep.mubr.f32.mxu0 0.0
      %1039 = vmatmul.mubr.f32.gmra.mrb[0].mxu0 %v845
      %v1040 = vpop.f32.mrb[0].mxu0
      %v1041 = vadd.f32 0.0, %v1040
      %v1042 = vpop.f32.mrb[0].mxu0
      %1043 = vmatprep.mubr.f32.mxu0 0.0
      %1044 = vmatmul.mubr.f32.gmra.mrb[0].mxu0 %v848
      %v1045 = vpop.f32.mrb[0].mxu0
      %v1046 = vadd.f32 0.0, %v1045
      %v1047 = vpop.f32.mrb[0].mxu0
      %1048 = vmatprep.mubr.f32.mxu0 0.0
      %1049 = vmatmul.mubr.f32.gmra.mrb[0].mxu0 %v851
      %v1050 = vpop.f32.mrb[0].mxu0
      %v1051 = vadd.f32 0.0, %v1050
      %v1052 = vpop.f32.mrb[0].mxu0
      %1053 = vmatprep.mubr.f32.mxu0 0.0
      %1054 = vmatmul.mubr.f32.gmra.mrb[0].mxu0 %v854
      %v1055 = vpop.f32.mrb[0].mxu0
      %v1056 = vadd.f32 0.0, %v1055
      %v1057 = vpop.f32.mrb[0].mxu0
      %1058 = vmatprep.mubr.f32.mxu0 0.0
      %1059 = vmatmul.mubr.f32.gmra.mrb[0].mxu0 %v857
      %v1060 = vpop.f32.mrb[0].mxu0
      %v1061 = vadd.f32 0.0, %v1060
      %v1062 = vpop.f32.mrb[0].mxu0
      %1063 = vmatprep.mubr.f32.mxu0 0.0
      %1064 = vmatmul.mubr.f32.gmra.mrb[0].mxu0 %v860
      %v1065 = vpop.f32.mrb[0].mxu0
      %v1066 = vadd.f32 0.0, %v1065
      %v1067 = vpop.f32.mrb[0].mxu0
      %1068 = vmatprep.mubr.f32.mxu0 0.0
      %1069 = vmatmul.mubr.f32.gmra.mrb[0].mxu0 %v863
      %v1070 = vpop.f32.mrb[0].mxu0
      %v1071 = vadd.f32 0.0, %v1070
      %v1072 = vpop.f32.mrb[0].mxu0
      %1073 = vmatprep.mubr.f32.mxu0 0.0
      %1074 = vmatmul.mubr.f32.gmra.mrb[0].mxu0 %v866
      %v1075 = vpop.f32.mrb[0].mxu0
      %v1076 = vadd.f32 0.0, %v1075
      %v1077 = vpop.f32.mrb[0].mxu0
      %1078 = vmatprep.mubr.f32.mxu0 0.0
      %1079 = vmatmul.mubr.f32.gmra.mrb[0].mxu0 %v869
      %v1080 = vpop.f32.mrb[0].mxu0
      %v1081 = vadd.f32 0.0, %v1080
      %v1082 = vpop.f32.mrb[0].mxu0
      %1083 = vmatprep.mubr.f32.mxu0 0.0
      %1084 = vmatmul.mubr.f32.gmra.mrb[0].mxu0 %v872
      %v1085 = vpop.f32.mrb[0].mxu0
      %v1086 = vadd.f32 0.0, %v1085
      %v1087 = vpop.f32.mrb[0].mxu0
      %1088 = vmatprep.mubr.f32.mxu0 0.0
      %1089 = vmatmul.mubr.f32.gmra.mrb[0].mxu0 %v875
      %v1090 = vpop.f32.mrb[0].mxu0
      %v1091 = vadd.f32 0.0, %v1090
      %v1092 = vpop.f32.mrb[0].mxu0
      %1093 = vmatprep.mubr.f32.mxu0 0.0
      %1094 = vmatmul.mubr.f32.gmra.mrb[0].mxu0 %v878
      %v1095 = vpop.f32.mrb[0].mxu0
      %v1096 = vadd.f32 0.0, %v1095
      %v1097 = vpop.f32.mrb[0].mxu0
      %1098 = vmatprep.mubr.f32.mxu0 0.0
      %1099 = vmatmul.mubr.f32.gmra.mrb[0].mxu0 %v881
      %v1100 = vpop.f32.mrb[0].mxu0
      %v1101 = vadd.f32 0.0, %v1100
      %v1102 = vpop.f32.mrb[0].mxu0
      %1103 = vmatprep.mubr.f32.mxu0 0.0
      %1104 = vmatmul.mubr.f32.gmra.mrb[0].mxu0 %v884
      %v1105 = vpop.f32.mrb[0].mxu0
      %v1106 = vadd.f32 0.0, %v1105
      %v1107 = vpop.f32.mrb[0].mxu0
      %1108 = vmatprep.mubr.f32.mxu0 0.0
      %1109 = vmatmul.mubr.f32.gmra.mrb[0].mxu0 %v887
      %v1110 = vpop.f32.mrb[0].mxu0
      %v1111 = vadd.f32 0.0, %v1110
      %v1112 = vpop.f32.mrb[0].mxu0
      %1113 = vdwg.mxu0
      %1146 = vrot.lane.b32.xlu0 %v956, 8
      %v1147 = vpop.permute.xlu0 %1146
      %1148 = vrot.lane.b32.xlu0 %v961, 8
      %v1149 = vpop.permute.xlu0 %1148
      %1150 = vrot.lane.b32.xlu0 %v966, 8
      %v1151 = vpop.permute.xlu0 %1150
      %1152 = vrot.lane.b32.xlu0 %v971, 8
      %v1153 = vpop.permute.xlu0 %1152
      %1154 = vrot.lane.b32.xlu0 %v976, 8
      %v1155 = vpop.permute.xlu0 %1154
      %1156 = vrot.lane.b32.xlu0 %v981, 8
      %v1157 = vpop.permute.xlu0 %1156
      %1158 = vrot.lane.b32.xlu0 %v986, 8
      %v1159 = vpop.permute.xlu0 %1158
      %1160 = vrot.lane.b32.xlu0 %v991, 8
      %v1161 = vpop.permute.xlu0 %1160
      %1162 = vrot.lane.b32.xlu0 %v996, 8
      %v1163 = vpop.permute.xlu0 %1162
      %1164 = vrot.lane.b32.xlu0 %v1001, 8
      %v1165 = vpop.permute.xlu0 %1164
      %1166 = vrot.lane.b32.xlu0 %v1006, 8
      %v1167 = vpop.permute.xlu0 %1166
      %1168 = vrot.lane.b32.xlu0 %v1011, 8
      %v1169 = vpop.permute.xlu0 %1168
      %1170 = vrot.lane.b32.xlu0 %v1016, 8
      %v1171 = vpop.permute.xlu0 %1170
      %1172 = vrot.lane.b32.xlu0 %v1021, 8
      %v1173 = vpop.permute.xlu0 %1172
      %1174 = vrot.lane.b32.xlu0 %v1026, 8
      %v1175 = vpop.permute.xlu0 %1174
      %1176 = vrot.lane.b32.xlu0 %v1031, 8
      %v1177 = vpop.permute.xlu0 %1176
      %1178 = vrot.lane.b32.xlu0 %v1036, 8
      %v1179 = vpop.permute.xlu0 %1178
      %1180 = vrot.lane.b32.xlu0 %v1041, 8
      %v1181 = vpop.permute.xlu0 %1180
      %1182 = vrot.lane.b32.xlu0 %v1046, 8
      %v1183 = vpop.permute.xlu0 %1182
      %1184 = vrot.lane.b32.xlu0 %v1051, 8
      %v1185 = vpop.permute.xlu0 %1184
      %1186 = vrot.lane.b32.xlu0 %v1056, 8
      %v1187 = vpop.permute.xlu0 %1186
      %1188 = vrot.lane.b32.xlu0 %v1061, 8
      %v1189 = vpop.permute.xlu0 %1188
      %1190 = vrot.lane.b32.xlu0 %v1066, 8
      %v1191 = vpop.permute.xlu0 %1190
      %1192 = vrot.lane.b32.xlu0 %v1071, 8
      %v1193 = vpop.permute.xlu0 %1192
      %1194 = vrot.lane.b32.xlu0 %v1076, 8
      %v1195 = vpop.permute.xlu0 %1194
      %1196 = vrot.lane.b32.xlu0 %v1081, 8
      %v1197 = vpop.permute.xlu0 %1196
      %1198 = vrot.lane.b32.xlu0 %v1086, 8
      %v1199 = vpop.permute.xlu0 %1198
      %1200 = vrot.lane.b32.xlu0 %v1091, 8
      %v1201 = vpop.permute.xlu0 %1200
      %1202 = vrot.lane.b32.xlu0 %v1096, 8
      %v1203 = vpop.permute.xlu0 %1202
      %1204 = vrot.lane.b32.xlu0 %v1101, 8
      %v1205 = vpop.permute.xlu0 %1204
      %1206 = vrot.lane.b32.xlu0 %v1106, 8
      %v1207 = vpop.permute.xlu0 %1206
      %1208 = vrot.lane.b32.xlu0 %v1111, 8
      %v1209 = vpop.permute.xlu0 %1208
      %v1242 = vadd.f32 %v430, %v1147
      %v1243 = vadd.f32 %v435, %v1149
      %v1244 = vadd.f32 %v440, %v1151
      %v1245 = vadd.f32 %v445, %v1153
      %v1246 = vadd.f32 %v450, %v1155
      %v1247 = vadd.f32 %v455, %v1157
      %v1248 = vadd.f32 %v460, %v1159
      %v1249 = vadd.f32 %v465, %v1161
      %v1250 = vadd.f32 %v470, %v1163
      %v1251 = vadd.f32 %v475, %v1165
      %v1252 = vadd.f32 %v480, %v1167
      %v1253 = vadd.f32 %v485, %v1169
      %v1254 = vadd.f32 %v490, %v1171
      %v1255 = vadd.f32 %v495, %v1173
      %v1256 = vadd.f32 %v500, %v1175
      %v1257 = vadd.f32 %v505, %v1177
      %v1258 = vadd.f32 %v510, %v1179
      %v1259 = vadd.f32 %v515, %v1181
      %v1260 = vadd.f32 %v520, %v1183
      %v1261 = vadd.f32 %v525, %v1185
      %v1262 = vadd.f32 %v530, %v1187
      %v1263 = vadd.f32 %v535, %v1189
      %v1264 = vadd.f32 %v540, %v1191
      %v1265 = vadd.f32 %v545, %v1193
      %v1266 = vadd.f32 %v550, %v1195
      %v1267 = vadd.f32 %v555, %v1197
      %v1268 = vadd.f32 %v560, %v1199
      %v1269 = vadd.f32 %v565, %v1201
      %v1270 = vadd.f32 %v570, %v1203
      %v1271 = vadd.f32 %v575, %v1205
      %v1272 = vadd.f32 %v580, %v1207
      %v1273 = vadd.f32 %v585, %v1209
      %vm1290 = vcmask 1046528
      %v1291 = vrot.slane %v738, 1
      %v1292 = vrot.slane %v739, 1
      %v1293 = vsel %vm1290, %v1291, %v1292
      %v1294 = vrot.slane %v740, 1
      %v1295 = vsel %vm1290, %v1292, %v1294
      %v1296 = vrot.slane %v741, 1
      %v1297 = vrot.slane %v742, 1
      %v1298 = vsel %vm1290, %v1296, %v1297
      %v1299 = vrot.slane %v743, 1
      %v1300 = vsel %vm1290, %v1297, %v1299
      %v1301 = vrot.slane %v744, 1
      %v1302 = vrot.slane %v745, 1
      %v1303 = vsel %vm1290, %v1301, %v1302
      %v1304 = vrot.slane %v746, 1
      %v1305 = vsel %vm1290, %v1302, %v1304
      %v1306 = vrot.slane %v747, 1
      %v1307 = vrot.slane %v748, 1
      %v1308 = vsel %vm1290, %v1306, %v1307
      %v1309 = vrot.slane %v749, 1
      %v1310 = vsel %vm1290, %v1307, %v1309
      %v1311 = vrot.slane %v750, 1
      %v1312 = vrot.slane %v751, 1
      %v1313 = vsel %vm1290, %v1311, %v1312
      %v1314 = vrot.slane %v752, 1
      %v1315 = vsel %vm1290, %v1312, %v1314
      %v1316 = vrot.slane %v753, 1
      %v1317 = vrot.slane %v754, 1
      %v1318 = vsel %vm1290, %v1316, %v1317
      %v1319 = vrot.slane %v755, 1
      %v1320 = vsel %vm1290, %v1317, %v1319
      %v1321 = vrot.slane %v756, 1
      %v1322 = vrot.slane %v757, 1
      %v1323 = vsel %vm1290, %v1321, %v1322
      %v1324 = vrot.slane %v758, 1
      %v1325 = vsel %vm1290, %v1322, %v1324
      %v1326 = vrot.slane %v759, 1
      %v1327 = vrot.slane %v760, 1
      %v1328 = vsel %vm1290, %v1326, %v1327
      %v1329 = vrot.slane %v761, 1
      %v1330 = vsel %vm1290, %v1327, %v1329
      %v1331 = vrot.slane %v762, 1
      %v1332 = vrot.slane %v763, 1
      %v1333 = vsel %vm1290, %v1331, %v1332
      %v1334 = vrot.slane %v764, 1
      %v1335 = vsel %vm1290, %v1332, %v1334
      %v1336 = vrot.slane %v765, 1
      %v1337 = vrot.slane %v766, 1
      %v1338 = vsel %vm1290, %v1336, %v1337
      %v1339 = vrot.slane %v767, 1
      %v1340 = vsel %vm1290, %v1337, %v1339
      %v1341 = vrot.slane %v768, 1
      %v1342 = vrot.slane %v769, 1
      %v1343 = vsel %vm1290, %v1341, %v1342
      %v1344 = vrot.slane %v770, 1
      %v1345 = vsel %vm1290, %v1342, %v1344
      %v1346 = vrot.slane %v771, 1
      %v1347 = vrot.slane %v772, 1
      %v1348 = vsel %vm1290, %v1346, %v1347
      %v1349 = vrot.slane %v773, 1
      %v1350 = vsel %vm1290, %v1347, %v1349
      %v1351 = vrot.slane %v774, 1
      %v1352 = vrot.slane %v775, 1
      %v1353 = vsel %vm1290, %v1351, %v1352
      %v1354 = vrot.slane %v776, 1
      %v1355 = vsel %vm1290, %v1352, %v1354
      %v1356 = vrot.slane %v777, 1
      %v1357 = vrot.slane %v778, 1
      %v1358 = vsel %vm1290, %v1356, %v1357
      %v1359 = vrot.slane %v779, 1
      %v1360 = vsel %vm1290, %v1357, %v1359
      %v1361 = vrot.slane %v780, 1
      %v1362 = vrot.slane %v781, 1
      %v1363 = vsel %vm1290, %v1361, %v1362
      %v1364 = vrot.slane %v782, 1
      %v1365 = vsel %vm1290, %v1362, %v1364
      %v1366 = vrot.slane %v783, 1
      %v1367 = vrot.slane %v784, 1
      %v1368 = vsel %vm1290, %v1366, %v1367
      %v1369 = vrot.slane %v785, 1
      %v1370 = vsel %vm1290, %v1367, %v1369
      %s1371 = scalar_lea.vmem %s3, 8
      %v1372 = vld [vmem:[%s1371] sm:$0xff]
      %v1373 = vsel %vm659, %v1293, 0
      %v1375 = vsel %vm659, %v1295, 0
      %v1377 = vsel %vm659, %v1298, 0
      %v1379 = vsel %vm659, %v1300, 0
      %v1381 = vsel %vm659, %v1303, 0
      %v1383 = vsel %vm659, %v1305, 0
      %v1385 = vsel %vm659, %v1308, 0
      %v1387 = vsel %vm659, %v1310, 0
      %v1389 = vsel %vm659, %v1313, 0
      %v1391 = vsel %vm659, %v1315, 0
      %v1393 = vsel %vm659, %v1318, 0
      %v1395 = vsel %vm659, %v1320, 0
      %v1397 = vsel %vm659, %v1323, 0
      %v1399 = vsel %vm659, %v1325, 0
      %v1401 = vsel %vm659, %v1328, 0
      %v1403 = vsel %vm659, %v1330, 0
      %v1405 = vsel %vm659, %v1333, 0
      %v1407 = vsel %vm659, %v1335, 0
      %v1409 = vsel %vm659, %v1338, 0
      %v1411 = vsel %vm659, %v1340, 0
      %v1413 = vsel %vm659, %v1343, 0
      %v1415 = vsel %vm659, %v1345, 0
      %v1417 = vsel %vm659, %v1348, 0
      %v1419 = vsel %vm659, %v1350, 0
      %v1421 = vsel %vm659, %v1353, 0
      %v1423 = vsel %vm659, %v1355, 0
      %v1425 = vsel %vm659, %v1358, 0
      %v1427 = vsel %vm659, %v1360, 0
      %v1429 = vsel %vm659, %v1363, 0
      %v1431 = vsel %vm659, %v1365, 0
      %v1433 = vsel %vm659, %v1368, 0
      %v1435 = vsel %vm659, %v1370, 0
      %1437 = vmatprep.subr.mxu0 0.0
      %1438 = vmatpush1.msra.mxu0 %v1372
      %1439 = vmatprep.subr.mxu0 0.0
      %1440 = vmatpush1.msra.mxu0 0.0
      %1441 = vmatprep.subr.mxu0 0.0
      %1442 = vmatpush1.msra.mxu0 0.0
      %1443 = vmatprep.subr.mxu0 0.0
      %1444 = vmatpush1.msra.mxu0 0.0
      %1445 = vmatprep.subr.mxu0 0.0
      %1446 = vmatpush1.msra.mxu0 0.0
      %1447 = vmatprep.subr.mxu0 0.0
      %1448 = vmatpush1.msra.mxu0 0.0
      %1449 = vmatprep.subr.mxu0 0.0
      %1450 = vmatpush1.msra.mxu0 0.0
      %1451 = vmatprep.subr.mxu0 0.0
      %1452 = vmatpush1.msra.mxu0 0.0
      %1453 = vmatprep.subr.mxu0 0.0
      %1454 = vmatpush1.msra.mxu0 0.0
      %1455 = vmatprep.subr.mxu0 0.0
      %1456 = vmatpush1.msra.mxu0 0.0
      %1457 = vmatprep.subr.mxu0 0.0
      %1458 = vmatpush1.msra.mxu0 0.0
      %1459 = vmatprep.subr.mxu0 0.0
      %1460 = vmatpush1.msra.mxu0 0.0
      %1461 = vmatprep.subr.mxu0 0.0
      %1462 = vmatpush1.msra.mxu0 0.0
      %1463 = vmatprep.subr.mxu0 0.0
      %1464 = vmatpush1.msra.mxu0 0.0
      %1465 = vmatprep.subr.mxu0 0.0
      %1466 = vmatpush1.msra.mxu0 0.0
      %1467 = vmatprep.subr.mxu0 0.0
      %1468 = vmatpush1.msra.mxu0 0.0
      %1469 = vmatprep.subr.mxu0 0.0
      %1470 = vmatpush1.msra.mxu0 0.0
      %1471 = vmatprep.subr.mxu0 0.0
      %1472 = vmatpush1.msra.mxu0 0.0
      %1473 = vmatprep.subr.mxu0 0.0
      %1474 = vmatpush1.msra.mxu0 0.0
      %1475 = vmatprep.subr.mxu0 0.0
      %1476 = vmatpush1.msra.mxu0 0.0
      %1477 = vmatprep.subr.mxu0 0.0
      %1478 = vmatpush1.msra.mxu0 0.0
      %1479 = vmatprep.subr.mxu0 0.0
      %1480 = vmatpush1.msra.mxu0 0.0
      %1481 = vmatprep.subr.mxu0 0.0
      %1482 = vmatpush1.msra.mxu0 0.0
      %1483 = vmatprep.subr.mxu0 0.0
      %1484 = vmatpush1.msra.mxu0 0.0
      %1485 = vmatprep.subr.mxu0 0.0
      %1486 = vmatpush1.msra.mxu0 0.0
      %1487 = vmatprep.subr.mxu0 0.0
      %1488 = vmatpush1.msra.mxu0 0.0
      %1489 = vmatprep.subr.mxu0 0.0
      %1490 = vmatpush1.msra.mxu0 0.0
      %1491 = vmatprep.subr.mxu0 0.0
      %1492 = vmatpush1.msra.mxu0 0.0
      %1493 = vmatprep.subr.mxu0 0.0
      %1494 = vmatpush1.msra.mxu0 0.0
      %1495 = vmatprep.subr.mxu0 0.0
      %1496 = vmatpush1.msra.mxu0 0.0
      %1497 = vmatprep.subr.mxu0 0.0
      %1498 = vmatpush1.msra.mxu0 0.0
      %1499 = vmatprep.subr.mxu0 0.0
      %1500 = vmatpush1.msra.mxu0 0.0
      %1501 = vmatprep.mubr.f32.mxu0 0.0
      %1502 = vmatmul.mubr.f32.gmra.mrb[0].mxu0 %v1373
      %v1503 = vpop.f32.mrb[0].mxu0
      %v1504 = vadd.f32 0.0, %v1503
      %v1505 = vpop.f32.mrb[0].mxu0
      %1506 = vmatprep.mubr.f32.mxu0 0.0
      %1507 = vmatmul.mubr.f32.gmra.mrb[0].mxu0 %v1375
      %v1508 = vpop.f32.mrb[0].mxu0
      %v1509 = vadd.f32 0.0, %v1508
      %v1510 = vpop.f32.mrb[0].mxu0
      %1511 = vmatprep.mubr.f32.mxu0 0.0
      %1512 = vmatmul.mubr.f32.gmra.mrb[0].mxu0 %v1377
      %v1513 = vpop.f32.mrb[0].mxu0
      %v1514 = vadd.f32 0.0, %v1513
      %v1515 = vpop.f32.mrb[0].mxu0
      %1516 = vmatprep.mubr.f32.mxu0 0.0
      %1517 = vmatmul.mubr.f32.gmra.mrb[0].mxu0 %v1379
      %v1518 = vpop.f32.mrb[0].mxu0
      %v1519 = vadd.f32 0.0, %v1518
      %v1520 = vpop.f32.mrb[0].mxu0
      %1521 = vmatprep.mubr.f32.mxu0 0.0
      %1522 = vmatmul.mubr.f32.gmra.mrb[0].mxu0 %v1381
      %v1523 = vpop.f32.mrb[0].mxu0
      %v1524 = vadd.f32 0.0, %v1523
      %v1525 = vpop.f32.mrb[0].mxu0
      %1526 = vmatprep.mubr.f32.mxu0 0.0
      %1527 = vmatmul.mubr.f32.gmra.mrb[0].mxu0 %v1383
      %v1528 = vpop.f32.mrb[0].mxu0
      %v1529 = vadd.f32 0.0, %v1528
      %v1530 = vpop.f32.mrb[0].mxu0
      %1531 = vmatprep.mubr.f32.mxu0 0.0
      %1532 = vmatmul.mubr.f32.gmra.mrb[0].mxu0 %v1385
      %v1533 = vpop.f32.mrb[0].mxu0
      %v1534 = vadd.f32 0.0, %v1533
      %v1535 = vpop.f32.mrb[0].mxu0
      %1536 = vmatprep.mubr.f32.mxu0 0.0
      %1537 = vmatmul.mubr.f32.gmra.mrb[0].mxu0 %v1387
      %v1538 = vpop.f32.mrb[0].mxu0
      %v1539 = vadd.f32 0.0, %v1538
      %v1540 = vpop.f32.mrb[0].mxu0
      %1541 = vmatprep.mubr.f32.mxu0 0.0
      %1542 = vmatmul.mubr.f32.gmra.mrb[0].mxu0 %v1389
      %v1543 = vpop.f32.mrb[0].mxu0
      %v1544 = vadd.f32 0.0, %v1543
      %v1545 = vpop.f32.mrb[0].mxu0
      %1546 = vmatprep.mubr.f32.mxu0 0.0
      %1547 = vmatmul.mubr.f32.gmra.mrb[0].mxu0 %v1391
      %v1548 = vpop.f32.mrb[0].mxu0
      %v1549 = vadd.f32 0.0, %v1548
      %v1550 = vpop.f32.mrb[0].mxu0
      %1551 = vmatprep.mubr.f32.mxu0 0.0
      %1552 = vmatmul.mubr.f32.gmra.mrb[0].mxu0 %v1393
      %v1553 = vpop.f32.mrb[0].mxu0
      %v1554 = vadd.f32 0.0, %v1553
      %v1555 = vpop.f32.mrb[0].mxu0
      %1556 = vmatprep.mubr.f32.mxu0 0.0
      %1557 = vmatmul.mubr.f32.gmra.mrb[0].mxu0 %v1395
      %v1558 = vpop.f32.mrb[0].mxu0
      %v1559 = vadd.f32 0.0, %v1558
      %v1560 = vpop.f32.mrb[0].mxu0
      %1561 = vmatprep.mubr.f32.mxu0 0.0
      %1562 = vmatmul.mubr.f32.gmra.mrb[0].mxu0 %v1397
      %v1563 = vpop.f32.mrb[0].mxu0
      %v1564 = vadd.f32 0.0, %v1563
      %v1565 = vpop.f32.mrb[0].mxu0
      %1566 = vmatprep.mubr.f32.mxu0 0.0
      %1567 = vmatmul.mubr.f32.gmra.mrb[0].mxu0 %v1399
      %v1568 = vpop.f32.mrb[0].mxu0
      %v1569 = vadd.f32 0.0, %v1568
      %v1570 = vpop.f32.mrb[0].mxu0
      %1571 = vmatprep.mubr.f32.mxu0 0.0
      %1572 = vmatmul.mubr.f32.gmra.mrb[0].mxu0 %v1401
      %v1573 = vpop.f32.mrb[0].mxu0
      %v1574 = vadd.f32 0.0, %v1573
      %v1575 = vpop.f32.mrb[0].mxu0
      %1576 = vmatprep.mubr.f32.mxu0 0.0
      %1577 = vmatmul.mubr.f32.gmra.mrb[0].mxu0 %v1403
      %v1578 = vpop.f32.mrb[0].mxu0
      %v1579 = vadd.f32 0.0, %v1578
      %v1580 = vpop.f32.mrb[0].mxu0
      %1581 = vmatprep.mubr.f32.mxu0 0.0
      %1582 = vmatmul.mubr.f32.gmra.mrb[0].mxu0 %v1405
      %v1583 = vpop.f32.mrb[0].mxu0
      %v1584 = vadd.f32 0.0, %v1583
      %v1585 = vpop.f32.mrb[0].mxu0
      %1586 = vmatprep.mubr.f32.mxu0 0.0
      %1587 = vmatmul.mubr.f32.gmra.mrb[0].mxu0 %v1407
      %v1588 = vpop.f32.mrb[0].mxu0
      %v1589 = vadd.f32 0.0, %v1588
      %v1590 = vpop.f32.mrb[0].mxu0
      %1591 = vmatprep.mubr.f32.mxu0 0.0
      %1592 = vmatmul.mubr.f32.gmra.mrb[0].mxu0 %v1409
      %v1593 = vpop.f32.mrb[0].mxu0
      %v1594 = vadd.f32 0.0, %v1593
      %v1595 = vpop.f32.mrb[0].mxu0
      %1596 = vmatprep.mubr.f32.mxu0 0.0
      %1597 = vmatmul.mubr.f32.gmra.mrb[0].mxu0 %v1411
      %v1598 = vpop.f32.mrb[0].mxu0
      %v1599 = vadd.f32 0.0, %v1598
      %v1600 = vpop.f32.mrb[0].mxu0
      %1601 = vmatprep.mubr.f32.mxu0 0.0
      %1602 = vmatmul.mubr.f32.gmra.mrb[0].mxu0 %v1413
      %v1603 = vpop.f32.mrb[0].mxu0
      %v1604 = vadd.f32 0.0, %v1603
      %v1605 = vpop.f32.mrb[0].mxu0
      %1606 = vmatprep.mubr.f32.mxu0 0.0
      %1607 = vmatmul.mubr.f32.gmra.mrb[0].mxu0 %v1415
      %v1608 = vpop.f32.mrb[0].mxu0
      %v1609 = vadd.f32 0.0, %v1608
      %v1610 = vpop.f32.mrb[0].mxu0
      %1611 = vmatprep.mubr.f32.mxu0 0.0
      %1612 = vmatmul.mubr.f32.gmra.mrb[0].mxu0 %v1417
      %v1613 = vpop.f32.mrb[0].mxu0
      %v1614 = vadd.f32 0.0, %v1613
      %v1615 = vpop.f32.mrb[0].mxu0
      %1616 = vmatprep.mubr.f32.mxu0 0.0
      %1617 = vmatmul.mubr.f32.gmra.mrb[0].mxu0 %v1419
      %v1618 = vpop.f32.mrb[0].mxu0
      %v1619 = vadd.f32 0.0, %v1618
      %v1620 = vpop.f32.mrb[0].mxu0
      %1621 = vmatprep.mubr.f32.mxu0 0.0
      %1622 = vmatmul.mubr.f32.gmra.mrb[0].mxu0 %v1421
      %v1623 = vpop.f32.mrb[0].mxu0
      %v1624 = vadd.f32 0.0, %v1623
      %v1625 = vpop.f32.mrb[0].mxu0
      %1626 = vmatprep.mubr.f32.mxu0 0.0
      %1627 = vmatmul.mubr.f32.gmra.mrb[0].mxu0 %v1423
      %v1628 = vpop.f32.mrb[0].mxu0
      %v1629 = vadd.f32 0.0, %v1628
      %v1630 = vpop.f32.mrb[0].mxu0
      %1631 = vmatprep.mubr.f32.mxu0 0.0
      %1632 = vmatmul.mubr.f32.gmra.mrb[0].mxu0 %v1425
      %v1633 = vpop.f32.mrb[0].mxu0
      %v1634 = vadd.f32 0.0, %v1633
      %v1635 = vpop.f32.mrb[0].mxu0
      %1636 = vmatprep.mubr.f32.mxu0 0.0
      %1637 = vmatmul.mubr.f32.gmra.mrb[0].mxu0 %v1427
      %v1638 = vpop.f32.mrb[0].mxu0
      %v1639 = vadd.f32 0.0, %v1638
      %v1640 = vpop.f32.mrb[0].mxu0
      %1641 = vmatprep.mubr.f32.mxu0 0.0
      %1642 = vmatmul.mubr.f32.gmra.mrb[0].mxu0 %v1429
      %v1643 = vpop.f32.mrb[0].mxu0
      %v1644 = vadd.f32 0.0, %v1643
      %v1645 = vpop.f32.mrb[0].mxu0
      %1646 = vmatprep.mubr.f32.mxu0 0.0
      %1647 = vmatmul.mubr.f32.gmra.mrb[0].mxu0 %v1431
      %v1648 = vpop.f32.mrb[0].mxu0
      %v1649 = vadd.f32 0.0, %v1648
      %v1650 = vpop.f32.mrb[0].mxu0
      %1651 = vmatprep.mubr.f32.mxu0 0.0
      %1652 = vmatmul.mubr.f32.gmra.mrb[0].mxu0 %v1433
      %v1653 = vpop.f32.mrb[0].mxu0
      %v1654 = vadd.f32 0.0, %v1653
      %v1655 = vpop.f32.mrb[0].mxu0
      %1656 = vmatprep.mubr.f32.mxu0 0.0
      %1657 = vmatmul.mubr.f32.gmra.mrb[0].mxu0 %v1435
      %v1658 = vpop.f32.mrb[0].mxu0
      %v1659 = vadd.f32 0.0, %v1658
      %v1660 = vpop.f32.mrb[0].mxu0
      %1661 = vdwg.mxu0
      %1694 = vrot.lane.b32.xlu0 %v1504, 8
      %v1695 = vpop.permute.xlu0 %1694
      %1696 = vrot.lane.b32.xlu0 %v1509, 8
      %v1697 = vpop.permute.xlu0 %1696
      %1698 = vrot.lane.b32.xlu0 %v1514, 8
      %v1699 = vpop.permute.xlu0 %1698
      %1700 = vrot.lane.b32.xlu0 %v1519, 8
      %v1701 = vpop.permute.xlu0 %1700
      %1702 = vrot.lane.b32.xlu0 %v1524, 8
      %v1703 = vpop.permute.xlu0 %1702
      %1704 = vrot.lane.b32.xlu0 %v1529, 8
      %v1705 = vpop.permute.xlu0 %1704
      %1706 = vrot.lane.b32.xlu0 %v1534, 8
      %v1707 = vpop.permute.xlu0 %1706
      %1708 = vrot.lane.b32.xlu0 %v1539, 8
      %v1709 = vpop.permute.xlu0 %1708
      %1710 = vrot.lane.b32.xlu0 %v1544, 8
      %v1711 = vpop.permute.xlu0 %1710
      %1712 = vrot.lane.b32.xlu0 %v1549, 8
      %v1713 = vpop.permute.xlu0 %1712
      %1714 = vrot.lane.b32.xlu0 %v1554, 8
      %v1715 = vpop.permute.xlu0 %1714
      %1716 = vrot.lane.b32.xlu0 %v1559, 8
      %v1717 = vpop.permute.xlu0 %1716
      %1718 = vrot.lane.b32.xlu0 %v1564, 8
      %v1719 = vpop.permute.xlu0 %1718
      %1720 = vrot.lane.b32.xlu0 %v1569, 8
      %v1721 = vpop.permute.xlu0 %1720
      %1722 = vrot.lane.b32.xlu0 %v1574, 8
      %v1723 = vpop.permute.xlu0 %1722
      %1724 = vrot.lane.b32.xlu0 %v1579, 8
      %v1725 = vpop.permute.xlu0 %1724
      %1726 = vrot.lane.b32.xlu0 %v1584, 8
      %v1727 = vpop.permute.xlu0 %1726
      %1728 = vrot.lane.b32.xlu0 %v1589, 8
      %v1729 = vpop.permute.xlu0 %1728
      %1730 = vrot.lane.b32.xlu0 %v1594, 8
      %v1731 = vpop.permute.xlu0 %1730
      %1732 = vrot.lane.b32.xlu0 %v1599, 8
      %v1733 = vpop.permute.xlu0 %1732
      %1734 = vrot.lane.b32.xlu0 %v1604, 8
      %v1735 = vpop.permute.xlu0 %1734
      %1736 = vrot.lane.b32.xlu0 %v1609, 8
      %v1737 = vpop.permute.xlu0 %1736
      %1738 = vrot.lane.b32.xlu0 %v1614, 8
      %v1739 = vpop.permute.xlu0 %1738
      %1740 = vrot.lane.b32.xlu0 %v1619, 8
      %v1741 = vpop.permute.xlu0 %1740
      %1742 = vrot.lane.b32.xlu0 %v1624, 8
      %v1743 = vpop.permute.xlu0 %1742
      %1744 = vrot.lane.b32.xlu0 %v1629, 8
      %v1745 = vpop.permute.xlu0 %1744
      %1746 = vrot.lane.b32.xlu0 %v1634, 8
      %v1747 = vpop.permute.xlu0 %1746
      %1748 = vrot.lane.b32.xlu0 %v1639, 8
      %v1749 = vpop.permute.xlu0 %1748
      %1750 = vrot.lane.b32.xlu0 %v1644, 8
      %v1751 = vpop.permute.xlu0 %1750
      %1752 = vrot.lane.b32.xlu0 %v1649, 8
      %v1753 = vpop.permute.xlu0 %1752
      %1754 = vrot.lane.b32.xlu0 %v1654, 8
      %v1755 = vpop.permute.xlu0 %1754
      %1756 = vrot.lane.b32.xlu0 %v1659, 8
      %v1757 = vpop.permute.xlu0 %1756
      %v1790 = vadd.f32 %v1242, %v1695
      %v1791 = vadd.f32 %v1243, %v1697
      %v1792 = vadd.f32 %v1244, %v1699
      %v1793 = vadd.f32 %v1245, %v1701
      %v1794 = vadd.f32 %v1246, %v1703
      %v1795 = vadd.f32 %v1247, %v1705
      %v1796 = vadd.f32 %v1248, %v1707
      %v1797 = vadd.f32 %v1249, %v1709
      %v1798 = vadd.f32 %v1250, %v1711
      %v1799 = vadd.f32 %v1251, %v1713
      %v1800 = vadd.f32 %v1252, %v1715
      %v1801 = vadd.f32 %v1253, %v1717
      %v1802 = vadd.f32 %v1254, %v1719
      %v1803 = vadd.f32 %v1255, %v1721
      %v1804 = vadd.f32 %v1256, %v1723
      %v1805 = vadd.f32 %v1257, %v1725
      %v1806 = vadd.f32 %v1258, %v1727
      %v1807 = vadd.f32 %v1259, %v1729
      %v1808 = vadd.f32 %v1260, %v1731
      %v1809 = vadd.f32 %v1261, %v1733
      %v1810 = vadd.f32 %v1262, %v1735
      %v1811 = vadd.f32 %v1263, %v1737
      %v1812 = vadd.f32 %v1264, %v1739
      %v1813 = vadd.f32 %v1265, %v1741
      %v1814 = vadd.f32 %v1266, %v1743
      %v1815 = vadd.f32 %v1267, %v1745
      %v1816 = vadd.f32 %v1268, %v1747
      %v1817 = vadd.f32 %v1269, %v1749
      %v1818 = vadd.f32 %v1270, %v1751
      %v1819 = vadd.f32 %v1271, %v1753
      %v1820 = vadd.f32 %v1272, %v1755
      %v1821 = vadd.f32 %v1273, %v1757
      %vm1822 = vcmask 1045504
      %v1823 = vrot.slane %v738, 2
      %v1824 = vrot.slane %v739, 2
      %v1825 = vsel %vm1822, %v1823, %v1824
      %v1826 = vrot.slane %v740, 2
      %v1827 = vsel %vm1822, %v1824, %v1826
      %v1828 = vrot.slane %v741, 2
      %v1829 = vrot.slane %v742, 2
      %v1830 = vsel %vm1822, %v1828, %v1829
      %v1831 = vrot.slane %v743, 2
      %v1832 = vsel %vm1822, %v1829, %v1831
      %v1833 = vrot.slane %v744, 2
      %v1834 = vrot.slane %v745, 2
      %v1835 = vsel %vm1822, %v1833, %v1834
      %v1836 = vrot.slane %v746, 2
      %v1837 = vsel %vm1822, %v1834, %v1836
      %v1838 = vrot.slane %v747, 2
      %v1839 = vrot.slane %v748, 2
      %v1840 = vsel %vm1822, %v1838, %v1839
      %v1841 = vrot.slane %v749, 2
      %v1842 = vsel %vm1822, %v1839, %v1841
      %v1843 = vrot.slane %v750, 2
      %v1844 = vrot.slane %v751, 2
      %v1845 = vsel %vm1822, %v1843, %v1844
      %v1846 = vrot.slane %v752, 2
      %v1847 = vsel %vm1822, %v1844, %v1846
      %v1848 = vrot.slane %v753, 2
      %v1849 = vrot.slane %v754, 2
      %v1850 = vsel %vm1822, %v1848, %v1849
      %v1851 = vrot.slane %v755, 2
      %v1852 = vsel %vm1822, %v1849, %v1851
      %v1853 = vrot.slane %v756, 2
      %v1854 = vrot.slane %v757, 2
      %v1855 = vsel %vm1822, %v1853, %v1854
      %v1856 = vrot.slane %v758, 2
      %v1857 = vsel %vm1822, %v1854, %v1856
      %v1858 = vrot.slane %v759, 2
      %v1859 = vrot.slane %v760, 2
      %v1860 = vsel %vm1822, %v1858, %v1859
      %v1861 = vrot.slane %v761, 2
      %v1862 = vsel %vm1822, %v1859, %v1861
      %v1863 = vrot.slane %v762, 2
      %v1864 = vrot.slane %v763, 2
      %v1865 = vsel %vm1822, %v1863, %v1864
      %v1866 = vrot.slane %v764, 2
      %v1867 = vsel %vm1822, %v1864, %v1866
      %v1868 = vrot.slane %v765, 2
      %v1869 = vrot.slane %v766, 2
      %v1870 = vsel %vm1822, %v1868, %v1869
      %v1871 = vrot.slane %v767, 2
      %v1872 = vsel %vm1822, %v1869, %v1871
      %v1873 = vrot.slane %v768, 2
      %v1874 = vrot.slane %v769, 2
      %v1875 = vsel %vm1822, %v1873, %v1874
      %v1876 = vrot.slane %v770, 2
      %v1877 = vsel %vm1822, %v1874, %v1876
      %v1878 = vrot.slane %v771, 2
      %v1879 = vrot.slane %v772, 2
      %v1880 = vsel %vm1822, %v1878, %v1879
      %v1881 = vrot.slane %v773, 2
      %v1882 = vsel %vm1822, %v1879, %v1881
      %v1883 = vrot.slane %v774, 2
      %v1884 = vrot.slane %v775, 2
      %v1885 = vsel %vm1822, %v1883, %v1884
      %v1886 = vrot.slane %v776, 2
      %v1887 = vsel %vm1822, %v1884, %v1886
      %v1888 = vrot.slane %v777, 2
      %v1889 = vrot.slane %v778, 2
      %v1890 = vsel %vm1822, %v1888, %v1889
      %v1891 = vrot.slane %v779, 2
      %v1892 = vsel %vm1822, %v1889, %v1891
      %v1893 = vrot.slane %v780, 2
      %v1894 = vrot.slane %v781, 2
      %v1895 = vsel %vm1822, %v1893, %v1894
      %v1896 = vrot.slane %v782, 2
      %v1897 = vsel %vm1822, %v1894, %v1896
      %v1898 = vrot.slane %v783, 2
      %v1899 = vrot.slane %v784, 2
      %v1900 = vsel %vm1822, %v1898, %v1899
      %v1901 = vrot.slane %v785, 2
      %v1902 = vsel %vm1822, %v1899, %v1901
      %s1903 = scalar_lea.vmem %s3, 16
      %v1904 = vld [vmem:[%s1903] sm:$0xff]
      %v1905 = vsel %vm659, %v1825, 0
      %v1907 = vsel %vm659, %v1827, 0
      %v1909 = vsel %vm659, %v1830, 0
      %v1911 = vsel %vm659, %v1832, 0
      %v1913 = vsel %vm659, %v1835, 0
      %v1915 = vsel %vm659, %v1837, 0
      %v1917 = vsel %vm659, %v1840, 0
      %v1919 = vsel %vm659, %v1842, 0
      %v1921 = vsel %vm659, %v1845, 0
      %v1923 = vsel %vm659, %v1847, 0
      %v1925 = vsel %vm659, %v1850, 0
      %v1927 = vsel %vm659, %v1852, 0
      %v1929 = vsel %vm659, %v1855, 0
      %v1931 = vsel %vm659, %v1857, 0
      %v1933 = vsel %vm659, %v1860, 0
      %v1935 = vsel %vm659, %v1862, 0
      %v1937 = vsel %vm659, %v1865, 0
      %v1939 = vsel %vm659, %v1867, 0
      %v1941 = vsel %vm659, %v1870, 0
      %v1943 = vsel %vm659, %v1872, 0
      %v1945 = vsel %vm659, %v1875, 0
      %v1947 = vsel %vm659, %v1877, 0
      %v1949 = vsel %vm659, %v1880, 0
      %v1951 = vsel %vm659, %v1882, 0
      %v1953 = vsel %vm659, %v1885, 0
      %v1955 = vsel %vm659, %v1887, 0
      %v1957 = vsel %vm659, %v1890, 0
      %v1959 = vsel %vm659, %v1892, 0
      %v1961 = vsel %vm659, %v1895, 0
      %v1963 = vsel %vm659, %v1897, 0
      %v1965 = vsel %vm659, %v1900, 0
      %v1967 = vsel %vm659, %v1902, 0
      %1969 = vmatprep.subr.mxu0 0.0
      %1970 = vmatpush1.msra.mxu0 %v1904
      %1971 = vmatprep.subr.mxu0 0.0
      %1972 = vmatpush1.msra.mxu0 0.0
      %1973 = vmatprep.subr.mxu0 0.0
      %1974 = vmatpush1.msra.mxu0 0.0
      %1975 = vmatprep.subr.mxu0 0.0
      %1976 = vmatpush1.msra.mxu0 0.0
      %1977 = vmatprep.subr.mxu0 0.0
      %1978 = vmatpush1.msra.mxu0 0.0
      %1979 = vmatprep.subr.mxu0 0.0
      %1980 = vmatpush1.msra.mxu0 0.0
      %1981 = vmatprep.subr.mxu0 0.0
      %1982 = vmatpush1.msra.mxu0 0.0
      %1983 = vmatprep.subr.mxu0 0.0
      %1984 = vmatpush1.msra.mxu0 0.0
      %1985 = vmatprep.subr.mxu0 0.0
      %1986 = vmatpush1.msra.mxu0 0.0
      %1987 = vmatprep.subr.mxu0 0.0
      %1988 = vmatpush1.msra.mxu0 0.0
      %1989 = vmatprep.subr.mxu0 0.0
      %1990 = vmatpush1.msra.mxu0 0.0
      %1991 = vmatprep.subr.mxu0 0.0
      %1992 = vmatpush1.msra.mxu0 0.0
      %1993 = vmatprep.subr.mxu0 0.0
      %1994 = vmatpush1.msra.mxu0 0.0
      %1995 = vmatprep.subr.mxu0 0.0
      %1996 = vmatpush1.msra.mxu0 0.0
      %1997 = vmatprep.subr.mxu0 0.0
      %1998 = vmatpush1.msra.mxu0 0.0
      %1999 = vmatprep.subr.mxu0 0.0
      %2000 = vmatpush1.msra.mxu0 0.0
      %2001 = vmatprep.subr.mxu0 0.0
      %2002 = vmatpush1.msra.mxu0 0.0
      %2003 = vmatprep.subr.mxu0 0.0
      %2004 = vmatpush1.msra.mxu0 0.0
      %2005 = vmatprep.subr.mxu0 0.0
      %2006 = vmatpush1.msra.mxu0 0.0
      %2007 = vmatprep.subr.mxu0 0.0
      %2008 = vmatpush1.msra.mxu0 0.0
      %2009 = vmatprep.subr.mxu0 0.0
      %2010 = vmatpush1.msra.mxu0 0.0
      %2011 = vmatprep.subr.mxu0 0.0
      %2012 = vmatpush1.msra.mxu0 0.0
      %2013 = vmatprep.subr.mxu0 0.0
      %2014 = vmatpush1.msra.mxu0 0.0
      %2015 = vmatprep.subr.mxu0 0.0
      %2016 = vmatpush1.msra.mxu0 0.0
      %2017 = vmatprep.subr.mxu0 0.0
      %2018 = vmatpush1.msra.mxu0 0.0
      %2019 = vmatprep.subr.mxu0 0.0
      %2020 = vmatpush1.msra.mxu0 0.0
      %2021 = vmatprep.subr.mxu0 0.0
      %2022 = vmatpush1.msra.mxu0 0.0
      %2023 = vmatprep.subr.mxu0 0.0
      %2024 = vmatpush1.msra.mxu0 0.0
      %2025 = vmatprep.subr.mxu0 0.0
      %2026 = vmatpush1.msra.mxu0 0.0
      %2027 = vmatprep.subr.mxu0 0.0
      %2028 = vmatpush1.msra.mxu0 0.0
      %2029 = vmatprep.subr.mxu0 0.0
      %2030 = vmatpush1.msra.mxu0 0.0
      %2031 = vmatprep.subr.mxu0 0.0
      %2032 = vmatpush1.msra.mxu0 0.0
      %2033 = vmatprep.mubr.f32.mxu0 0.0
      %2034 = vmatmul.mubr.f32.gmra.mrb[0].mxu0 %v1905
      %v2035 = vpop.f32.mrb[0].mxu0
      %v2036 = vadd.f32 0.0, %v2035
      %v2037 = vpop.f32.mrb[0].mxu0
      %2038 = vmatprep.mubr.f32.mxu0 0.0
      %2039 = vmatmul.mubr.f32.gmra.mrb[0].mxu0 %v1907
      %v2040 = vpop.f32.mrb[0].mxu0
      %v2041 = vadd.f32 0.0, %v2040
      %v2042 = vpop.f32.mrb[0].mxu0
      %2043 = vmatprep.mubr.f32.mxu0 0.0
      %2044 = vmatmul.mubr.f32.gmra.mrb[0].mxu0 %v1909
      %v2045 = vpop.f32.mrb[0].mxu0
      %v2046 = vadd.f32 0.0, %v2045
      %v2047 = vpop.f32.mrb[0].mxu0
      %2048 = vmatprep.mubr.f32.mxu0 0.0
      %2049 = vmatmul.mubr.f32.gmra.mrb[0].mxu0 %v1911
      %v2050 = vpop.f32.mrb[0].mxu0
      %v2051 = vadd.f32 0.0, %v2050
      %v2052 = vpop.f32.mrb[0].mxu0
      %2053 = vmatprep.mubr.f32.mxu0 0.0
      %2054 = vmatmul.mubr.f32.gmra.mrb[0].mxu0 %v1913
      %v2055 = vpop.f32.mrb[0].mxu0
      %v2056 = vadd.f32 0.0, %v2055
      %v2057 = vpop.f32.mrb[0].mxu0
      %2058 = vmatprep.mubr.f32.mxu0 0.0
      %2059 = vmatmul.mubr.f32.gmra.mrb[0].mxu0 %v1915
      %v2060 = vpop.f32.mrb[0].mxu0
      %v2061 = vadd.f32 0.0, %v2060
      %v2062 = vpop.f32.mrb[0].mxu0
      %2063 = vmatprep.mubr.f32.mxu0 0.0
      %2064 = vmatmul.mubr.f32.gmra.mrb[0].mxu0 %v1917
      %v2065 = vpop.f32.mrb[0].mxu0
      %v2066 = vadd.f32 0.0, %v2065
      %v2067 = vpop.f32.mrb[0].mxu0
      %2068 = vmatprep.mubr.f32.mxu0 0.0
      %2069 = vmatmul.mubr.f32.gmra.mrb[0].mxu0 %v1919
      %v2070 = vpop.f32.mrb[0].mxu0
      %v2071 = vadd.f32 0.0, %v2070
      %v2072 = vpop.f32.mrb[0].mxu0
      %2073 = vmatprep.mubr.f32.mxu0 0.0
      %2074 = vmatmul.mubr.f32.gmra.mrb[0].mxu0 %v1921
      %v2075 = vpop.f32.mrb[0].mxu0
      %v2076 = vadd.f32 0.0, %v2075
      %v2077 = vpop.f32.mrb[0].mxu0
      %2078 = vmatprep.mubr.f32.mxu0 0.0
      %2079 = vmatmul.mubr.f32.gmra.mrb[0].mxu0 %v1923
      %v2080 = vpop.f32.mrb[0].mxu0
      %v2081 = vadd.f32 0.0, %v2080
      %v2082 = vpop.f32.mrb[0].mxu0
      %2083 = vmatprep.mubr.f32.mxu0 0.0
      %2084 = vmatmul.mubr.f32.gmra.mrb[0].mxu0 %v1925
      %v2085 = vpop.f32.mrb[0].mxu0
      %v2086 = vadd.f32 0.0, %v2085
      %v2087 = vpop.f32.mrb[0].mxu0
      %2088 = vmatprep.mubr.f32.mxu0 0.0
      %2089 = vmatmul.mubr.f32.gmra.mrb[0].mxu0 %v1927
      %v2090 = vpop.f32.mrb[0].mxu0
      %v2091 = vadd.f32 0.0, %v2090
      %v2092 = vpop.f32.mrb[0].mxu0
      %2093 = vmatprep.mubr.f32.mxu0 0.0
      %2094 = vmatmul.mubr.f32.gmra.mrb[0].mxu0 %v1929
      %v2095 = vpop.f32.mrb[0].mxu0
      %v2096 = vadd.f32 0.0, %v2095
      %v2097 = vpop.f32.mrb[0].mxu0
      %2098 = vmatprep.mubr.f32.mxu0 0.0
      %2099 = vmatmul.mubr.f32.gmra.mrb[0].mxu0 %v1931
      %v2100 = vpop.f32.mrb[0].mxu0
      %v2101 = vadd.f32 0.0, %v2100
      %v2102 = vpop.f32.mrb[0].mxu0
      %2103 = vmatprep.mubr.f32.mxu0 0.0
      %2104 = vmatmul.mubr.f32.gmra.mrb[0].mxu0 %v1933
      %v2105 = vpop.f32.mrb[0].mxu0
      %v2106 = vadd.f32 0.0, %v2105
      %v2107 = vpop.f32.mrb[0].mxu0
      %2108 = vmatprep.mubr.f32.mxu0 0.0
      %2109 = vmatmul.mubr.f32.gmra.mrb[0].mxu0 %v1935
      %v2110 = vpop.f32.mrb[0].mxu0
      %v2111 = vadd.f32 0.0, %v2110
      %v2112 = vpop.f32.mrb[0].mxu0
      %2113 = vmatprep.mubr.f32.mxu0 0.0
      %2114 = vmatmul.mubr.f32.gmra.mrb[0].mxu0 %v1937
      %v2115 = vpop.f32.mrb[0].mxu0
      %v2116 = vadd.f32 0.0, %v2115
      %v2117 = vpop.f32.mrb[0].mxu0
      %2118 = vmatprep.mubr.f32.mxu0 0.0
      %2119 = vmatmul.mubr.f32.gmra.mrb[0].mxu0 %v1939
      %v2120 = vpop.f32.mrb[0].mxu0
      %v2121 = vadd.f32 0.0, %v2120
      %v2122 = vpop.f32.mrb[0].mxu0
      %2123 = vmatprep.mubr.f32.mxu0 0.0
      %2124 = vmatmul.mubr.f32.gmra.mrb[0].mxu0 %v1941
      %v2125 = vpop.f32.mrb[0].mxu0
      %v2126 = vadd.f32 0.0, %v2125
      %v2127 = vpop.f32.mrb[0].mxu0
      %2128 = vmatprep.mubr.f32.mxu0 0.0
      %2129 = vmatmul.mubr.f32.gmra.mrb[0].mxu0 %v1943
      %v2130 = vpop.f32.mrb[0].mxu0
      %v2131 = vadd.f32 0.0, %v2130
      %v2132 = vpop.f32.mrb[0].mxu0
      %2133 = vmatprep.mubr.f32.mxu0 0.0
      %2134 = vmatmul.mubr.f32.gmra.mrb[0].mxu0 %v1945
      %v2135 = vpop.f32.mrb[0].mxu0
      %v2136 = vadd.f32 0.0, %v2135
      %v2137 = vpop.f32.mrb[0].mxu0
      %2138 = vmatprep.mubr.f32.mxu0 0.0
      %2139 = vmatmul.mubr.f32.gmra.mrb[0].mxu0 %v1947
      %v2140 = vpop.f32.mrb[0].mxu0
      %v2141 = vadd.f32 0.0, %v2140
      %v2142 = vpop.f32.mrb[0].mxu0
      %2143 = vmatprep.mubr.f32.mxu0 0.0
      %2144 = vmatmul.mubr.f32.gmra.mrb[0].mxu0 %v1949
      %v2145 = vpop.f32.mrb[0].mxu0
      %v2146 = vadd.f32 0.0, %v2145
      %v2147 = vpop.f32.mrb[0].mxu0
      %2148 = vmatprep.mubr.f32.mxu0 0.0
      %2149 = vmatmul.mubr.f32.gmra.mrb[0].mxu0 %v1951
      %v2150 = vpop.f32.mrb[0].mxu0
      %v2151 = vadd.f32 0.0, %v2150
      %v2152 = vpop.f32.mrb[0].mxu0
      %2153 = vmatprep.mubr.f32.mxu0 0.0
      %2154 = vmatmul.mubr.f32.gmra.mrb[0].mxu0 %v1953
      %v2155 = vpop.f32.mrb[0].mxu0
      %v2156 = vadd.f32 0.0, %v2155
      %v2157 = vpop.f32.mrb[0].mxu0
      %2158 = vmatprep.mubr.f32.mxu0 0.0
      %2159 = vmatmul.mubr.f32.gmra.mrb[0].mxu0 %v1955
      %v2160 = vpop.f32.mrb[0].mxu0
      %v2161 = vadd.f32 0.0, %v2160
      %v2162 = vpop.f32.mrb[0].mxu0
      %2163 = vmatprep.mubr.f32.mxu0 0.0
      %2164 = vmatmul.mubr.f32.gmra.mrb[0].mxu0 %v1957
      %v2165 = vpop.f32.mrb[0].mxu0
      %v2166 = vadd.f32 0.0, %v2165
      %v2167 = vpop.f32.mrb[0].mxu0
      %2168 = vmatprep.mubr.f32.mxu0 0.0
      %2169 = vmatmul.mubr.f32.gmra.mrb[0].mxu0 %v1959
      %v2170 = vpop.f32.mrb[0].mxu0
      %v2171 = vadd.f32 0.0, %v2170
      %v2172 = vpop.f32.mrb[0].mxu0
      %2173 = vmatprep.mubr.f32.mxu0 0.0
      %2174 = vmatmul.mubr.f32.gmra.mrb[0].mxu0 %v1961
      %v2175 = vpop.f32.mrb[0].mxu0
      %v2176 = vadd.f32 0.0, %v2175
      %v2177 = vpop.f32.mrb[0].mxu0
      %2178 = vmatprep.mubr.f32.mxu0 0.0
      %2179 = vmatmul.mubr.f32.gmra.mrb[0].mxu0 %v1963
      %v2180 = vpop.f32.mrb[0].mxu0
      %v2181 = vadd.f32 0.0, %v2180
      %v2182 = vpop.f32.mrb[0].mxu0
      %2183 = vmatprep.mubr.f32.mxu0 0.0
      %2184 = vmatmul.mubr.f32.gmra.mrb[0].mxu0 %v1965
      %v2185 = vpop.f32.mrb[0].mxu0
      %v2186 = vadd.f32 0.0, %v2185
      %v2187 = vpop.f32.mrb[0].mxu0
      %2188 = vmatprep.mubr.f32.mxu0 0.0
      %2189 = vmatmul.mubr.f32.gmra.mrb[0].mxu0 %v1967
      %v2190 = vpop.f32.mrb[0].mxu0
      %v2191 = vadd.f32 0.0, %v2190
      %v2192 = vpop.f32.mrb[0].mxu0
      %2193 = vdwg.mxu0
      %2226 = vrot.lane.b32.xlu0 %v2036, 8
      %v2227 = vpop.permute.xlu0 %2226
      %2228 = vrot.lane.b32.xlu0 %v2041, 8
      %v2229 = vpop.permute.xlu0 %2228
      %2230 = vrot.lane.b32.xlu0 %v2046, 8
      %v2231 = vpop.permute.xlu0 %2230
      %2232 = vrot.lane.b32.xlu0 %v2051, 8
      %v2233 = vpop.permute.xlu0 %2232
      %2234 = vrot.lane.b32.xlu0 %v2056, 8
      %v2235 = vpop.permute.xlu0 %2234
      %2236 = vrot.lane.b32.xlu0 %v2061, 8
      %v2237 = vpop.permute.xlu0 %2236
      %2238 = vrot.lane.b32.xlu0 %v2066, 8
      %v2239 = vpop.permute.xlu0 %2238
      %2240 = vrot.lane.b32.xlu0 %v2071, 8
      %v2241 = vpop.permute.xlu0 %2240
      %2242 = vrot.lane.b32.xlu0 %v2076, 8
      %v2243 = vpop.permute.xlu0 %2242
      %2244 = vrot.lane.b32.xlu0 %v2081, 8
      %v2245 = vpop.permute.xlu0 %2244
      %2246 = vrot.lane.b32.xlu0 %v2086, 8
      %v2247 = vpop.permute.xlu0 %2246
      %2248 = vrot.lane.b32.xlu0 %v2091, 8
      %v2249 = vpop.permute.xlu0 %2248
      %2250 = vrot.lane.b32.xlu0 %v2096, 8
      %v2251 = vpop.permute.xlu0 %2250
      %2252 = vrot.lane.b32.xlu0 %v2101, 8
      %v2253 = vpop.permute.xlu0 %2252
      %2254 = vrot.lane.b32.xlu0 %v2106, 8
      %v2255 = vpop.permute.xlu0 %2254
      %2256 = vrot.lane.b32.xlu0 %v2111, 8
      %v2257 = vpop.permute.xlu0 %2256
      %2258 = vrot.lane.b32.xlu0 %v2116, 8
      %v2259 = vpop.permute.xlu0 %2258
      %2260 = vrot.lane.b32.xlu0 %v2121, 8
      %v2261 = vpop.permute.xlu0 %2260
      %2262 = vrot.lane.b32.xlu0 %v2126, 8
      %v2263 = vpop.permute.xlu0 %2262
      %2264 = vrot.lane.b32.xlu0 %v2131, 8
      %v2265 = vpop.permute.xlu0 %2264
      %2266 = vrot.lane.b32.xlu0 %v2136, 8
      %v2267 = vpop.permute.xlu0 %2266
      %2268 = vrot.lane.b32.xlu0 %v2141, 8
      %v2269 = vpop.permute.xlu0 %2268
      %2270 = vrot.lane.b32.xlu0 %v2146, 8
      %v2271 = vpop.permute.xlu0 %2270
      %2272 = vrot.lane.b32.xlu0 %v2151, 8
      %v2273 = vpop.permute.xlu0 %2272
      %2274 = vrot.lane.b32.xlu0 %v2156, 8
      %v2275 = vpop.permute.xlu0 %2274
      %2276 = vrot.lane.b32.xlu0 %v2161, 8
      %v2277 = vpop.permute.xlu0 %2276
      %2278 = vrot.lane.b32.xlu0 %v2166, 8
      %v2279 = vpop.permute.xlu0 %2278
      %2280 = vrot.lane.b32.xlu0 %v2171, 8
      %v2281 = vpop.permute.xlu0 %2280
      %2282 = vrot.lane.b32.xlu0 %v2176, 8
      %v2283 = vpop.permute.xlu0 %2282
      %2284 = vrot.lane.b32.xlu0 %v2181, 8
      %v2285 = vpop.permute.xlu0 %2284
      %2286 = vrot.lane.b32.xlu0 %v2186, 8
      %v2287 = vpop.permute.xlu0 %2286
      %2288 = vrot.lane.b32.xlu0 %v2191, 8
      %v2289 = vpop.permute.xlu0 %2288
      %v2322 = vadd.f32 %v1790, %v2227
      %v2323 = vadd.f32 %v1791, %v2229
      %v2324 = vadd.f32 %v1792, %v2231
      %v2325 = vadd.f32 %v1793, %v2233
      %v2326 = vadd.f32 %v1794, %v2235
      %v2327 = vadd.f32 %v1795, %v2237
      %v2328 = vadd.f32 %v1796, %v2239
      %v2329 = vadd.f32 %v1797, %v2241
      %v2330 = vadd.f32 %v1798, %v2243
      %v2331 = vadd.f32 %v1799, %v2245
      %v2332 = vadd.f32 %v1800, %v2247
      %v2333 = vadd.f32 %v1801, %v2249
      %v2334 = vadd.f32 %v1802, %v2251
      %v2335 = vadd.f32 %v1803, %v2253
      %v2336 = vadd.f32 %v1804, %v2255
      %v2337 = vadd.f32 %v1805, %v2257
      %v2338 = vadd.f32 %v1806, %v2259
      %v2339 = vadd.f32 %v1807, %v2261
      %v2340 = vadd.f32 %v1808, %v2263
      %v2341 = vadd.f32 %v1809, %v2265
      %v2342 = vadd.f32 %v1810, %v2267
      %v2343 = vadd.f32 %v1811, %v2269
      %v2344 = vadd.f32 %v1812, %v2271
      %v2345 = vadd.f32 %v1813, %v2273
      %v2346 = vadd.f32 %v1814, %v2275
      %v2347 = vadd.f32 %v1815, %v2277
      %v2348 = vadd.f32 %v1816, %v2279
      %v2349 = vadd.f32 %v1817, %v2281
      %v2350 = vadd.f32 %v1818, %v2283
      %v2351 = vadd.f32 %v1819, %v2285
      %v2352 = vadd.f32 %v1820, %v2287
      %v2353 = vadd.f32 %v1821, %v2289
      %s2354 = scalar_lea.vmem %s3, 24
      %v2355 = vld [vmem:[%s2354] sm:$0xff]
      %v2357 = vsel %vm659, %v786, 0
      %v2360 = vsel %vm659, %v787, 0
      %2362 = vmatprep.subr.mxu0 0.0
      %2363 = vmatpush1.msra.mxu0 %v2355
      %2364 = vmatprep.subr.mxu0 0.0
      %2365 = vmatpush1.msra.mxu0 0.0
      %2366 = vmatprep.subr.mxu0 0.0
      %2367 = vmatpush1.msra.mxu0 0.0
      %2368 = vmatprep.subr.mxu0 0.0
      %2369 = vmatpush1.msra.mxu0 0.0
      %2370 = vmatprep.subr.mxu0 0.0
      %2371 = vmatpush1.msra.mxu0 0.0
      %2372 = vmatprep.subr.mxu0 0.0
      %2373 = vmatpush1.msra.mxu0 0.0
      %2374 = vmatprep.subr.mxu0 0.0
      %2375 = vmatpush1.msra.mxu0 0.0
      %2376 = vmatprep.subr.mxu0 0.0
      %2377 = vmatpush1.msra.mxu0 0.0
      %2378 = vmatprep.subr.mxu0 0.0
      %2379 = vmatpush1.msra.mxu0 0.0
      %2380 = vmatprep.subr.mxu0 0.0
      %2381 = vmatpush1.msra.mxu0 0.0
      %2382 = vmatprep.subr.mxu0 0.0
      %2383 = vmatpush1.msra.mxu0 0.0
      %2384 = vmatprep.subr.mxu0 0.0
      %2385 = vmatpush1.msra.mxu0 0.0
      %2386 = vmatprep.subr.mxu0 0.0
      %2387 = vmatpush1.msra.mxu0 0.0
      %2388 = vmatprep.subr.mxu0 0.0
      %2389 = vmatpush1.msra.mxu0 0.0
      %2390 = vmatprep.subr.mxu0 0.0
      %2391 = vmatpush1.msra.mxu0 0.0
      %2392 = vmatprep.subr.mxu0 0.0
      %2393 = vmatpush1.msra.mxu0 0.0
      %2394 = vmatprep.subr.mxu0 0.0
      %2395 = vmatpush1.msra.mxu0 0.0
      %2396 = vmatprep.subr.mxu0 0.0
      %2397 = vmatpush1.msra.mxu0 0.0
      %2398 = vmatprep.subr.mxu0 0.0
      %2399 = vmatpush1.msra.mxu0 0.0
      %2400 = vmatprep.subr.mxu0 0.0
      %2401 = vmatpush1.msra.mxu0 0.0
      %2402 = vmatprep.subr.mxu0 0.0
      %2403 = vmatpush1.msra.mxu0 0.0
      %2404 = vmatprep.subr.mxu0 0.0
      %2405 = vmatpush1.msra.mxu0 0.0
      %2406 = vmatprep.subr.mxu0 0.0
      %2407 = vmatpush1.msra.mxu0 0.0
      %2408 = vmatprep.subr.mxu0 0.0
      %2409 = vmatpush1.msra.mxu0 0.0
      %2410 = vmatprep.subr.mxu0 0.0
      %2411 = vmatpush1.msra.mxu0 0.0
      %2412 = vmatprep.subr.mxu0 0.0
      %2413 = vmatpush1.msra.mxu0 0.0
      %2414 = vmatprep.subr.mxu0 0.0
      %2415 = vmatpush1.msra.mxu0 0.0
      %2416 = vmatprep.subr.mxu0 0.0
      %2417 = vmatpush1.msra.mxu0 0.0
      %2418 = vmatprep.subr.mxu0 0.0
      %2419 = vmatpush1.msra.mxu0 0.0
      %2420 = vmatprep.subr.mxu0 0.0
      %2421 = vmatpush1.msra.mxu0 0.0
      %2422 = vmatprep.subr.mxu0 0.0
      %2423 = vmatpush1.msra.mxu0 0.0
      %2424 = vmatprep.subr.mxu0 0.0
      %2425 = vmatpush1.msra.mxu0 0.0
      %2426 = vmatprep.mubr.f32.mxu0 0.0
      %2427 = vmatmul.mubr.f32.gmra.mrb[0].mxu0 %v800
      %v2428 = vpop.f32.mrb[0].mxu0
      %v2429 = vadd.f32 0.0, %v2428
      %v2430 = vpop.f32.mrb[0].mxu0
      %2431 = vmatprep.mubr.f32.mxu0 0.0
      %2432 = vmatmul.mubr.f32.gmra.mrb[0].mxu0 %v803
      %v2433 = vpop.f32.mrb[0].mxu0
      %v2434 = vadd.f32 0.0, %v2433
      %v2435 = vpop.f32.mrb[0].mxu0
      %2436 = vmatprep.mubr.f32.mxu0 0.0
      %2437 = vmatmul.mubr.f32.gmra.mrb[0].mxu0 %v806
      %v2438 = vpop.f32.mrb[0].mxu0
      %v2439 = vadd.f32 0.0, %v2438
      %v2440 = vpop.f32.mrb[0].mxu0
      %2441 = vmatprep.mubr.f32.mxu0 0.0
      %2442 = vmatmul.mubr.f32.gmra.mrb[0].mxu0 %v809
      %v2443 = vpop.f32.mrb[0].mxu0
      %v2444 = vadd.f32 0.0, %v2443
      %v2445 = vpop.f32.mrb[0].mxu0
      %2446 = vmatprep.mubr.f32.mxu0 0.0
      %2447 = vmatmul.mubr.f32.gmra.mrb[0].mxu0 %v812
      %v2448 = vpop.f32.mrb[0].mxu0
      %v2449 = vadd.f32 0.0, %v2448
      %v2450 = vpop.f32.mrb[0].mxu0
      %2451 = vmatprep.mubr.f32.mxu0 0.0
      %2452 = vmatmul.mubr.f32.gmra.mrb[0].mxu0 %v815
      %v2453 = vpop.f32.mrb[0].mxu0
      %v2454 = vadd.f32 0.0, %v2453
      %v2455 = vpop.f32.mrb[0].mxu0
      %2456 = vmatprep.mubr.f32.mxu0 0.0
      %2457 = vmatmul.mubr.f32.gmra.mrb[0].mxu0 %v818
      %v2458 = vpop.f32.mrb[0].mxu0
      %v2459 = vadd.f32 0.0, %v2458
      %v2460 = vpop.f32.mrb[0].mxu0
      %2461 = vmatprep.mubr.f32.mxu0 0.0
      %2462 = vmatmul.mubr.f32.gmra.mrb[0].mxu0 %v821
      %v2463 = vpop.f32.mrb[0].mxu0
      %v2464 = vadd.f32 0.0, %v2463
      %v2465 = vpop.f32.mrb[0].mxu0
      %2466 = vmatprep.mubr.f32.mxu0 0.0
      %2467 = vmatmul.mubr.f32.gmra.mrb[0].mxu0 %v824
      %v2468 = vpop.f32.mrb[0].mxu0
      %v2469 = vadd.f32 0.0, %v2468
      %v2470 = vpop.f32.mrb[0].mxu0
      %2471 = vmatprep.mubr.f32.mxu0 0.0
      %2472 = vmatmul.mubr.f32.gmra.mrb[0].mxu0 %v827
      %v2473 = vpop.f32.mrb[0].mxu0
      %v2474 = vadd.f32 0.0, %v2473
      %v2475 = vpop.f32.mrb[0].mxu0
      %2476 = vmatprep.mubr.f32.mxu0 0.0
      %2477 = vmatmul.mubr.f32.gmra.mrb[0].mxu0 %v830
      %v2478 = vpop.f32.mrb[0].mxu0
      %v2479 = vadd.f32 0.0, %v2478
      %v2480 = vpop.f32.mrb[0].mxu0
      %2481 = vmatprep.mubr.f32.mxu0 0.0
      %2482 = vmatmul.mubr.f32.gmra.mrb[0].mxu0 %v833
      %v2483 = vpop.f32.mrb[0].mxu0
      %v2484 = vadd.f32 0.0, %v2483
      %v2485 = vpop.f32.mrb[0].mxu0
      %2486 = vmatprep.mubr.f32.mxu0 0.0
      %2487 = vmatmul.mubr.f32.gmra.mrb[0].mxu0 %v836
      %v2488 = vpop.f32.mrb[0].mxu0
      %v2489 = vadd.f32 0.0, %v2488
      %v2490 = vpop.f32.mrb[0].mxu0
      %2491 = vmatprep.mubr.f32.mxu0 0.0
      %2492 = vmatmul.mubr.f32.gmra.mrb[0].mxu0 %v839
      %v2493 = vpop.f32.mrb[0].mxu0
      %v2494 = vadd.f32 0.0, %v2493
      %v2495 = vpop.f32.mrb[0].mxu0
      %2496 = vmatprep.mubr.f32.mxu0 0.0
      %2497 = vmatmul.mubr.f32.gmra.mrb[0].mxu0 %v842
      %v2498 = vpop.f32.mrb[0].mxu0
      %v2499 = vadd.f32 0.0, %v2498
      %v2500 = vpop.f32.mrb[0].mxu0
      %2501 = vmatprep.mubr.f32.mxu0 0.0
      %2502 = vmatmul.mubr.f32.gmra.mrb[0].mxu0 %v845
      %v2503 = vpop.f32.mrb[0].mxu0
      %v2504 = vadd.f32 0.0, %v2503
      %v2505 = vpop.f32.mrb[0].mxu0
      %2506 = vmatprep.mubr.f32.mxu0 0.0
      %2507 = vmatmul.mubr.f32.gmra.mrb[0].mxu0 %v848
      %v2508 = vpop.f32.mrb[0].mxu0
      %v2509 = vadd.f32 0.0, %v2508
      %v2510 = vpop.f32.mrb[0].mxu0
      %2511 = vmatprep.mubr.f32.mxu0 0.0
      %2512 = vmatmul.mubr.f32.gmra.mrb[0].mxu0 %v851
      %v2513 = vpop.f32.mrb[0].mxu0
      %v2514 = vadd.f32 0.0, %v2513
      %v2515 = vpop.f32.mrb[0].mxu0
      %2516 = vmatprep.mubr.f32.mxu0 0.0
      %2517 = vmatmul.mubr.f32.gmra.mrb[0].mxu0 %v854
      %v2518 = vpop.f32.mrb[0].mxu0
      %v2519 = vadd.f32 0.0, %v2518
      %v2520 = vpop.f32.mrb[0].mxu0
      %2521 = vmatprep.mubr.f32.mxu0 0.0
      %2522 = vmatmul.mubr.f32.gmra.mrb[0].mxu0 %v857
      %v2523 = vpop.f32.mrb[0].mxu0
      %v2524 = vadd.f32 0.0, %v2523
      %v2525 = vpop.f32.mrb[0].mxu0
      %2526 = vmatprep.mubr.f32.mxu0 0.0
      %2527 = vmatmul.mubr.f32.gmra.mrb[0].mxu0 %v860
      %v2528 = vpop.f32.mrb[0].mxu0
      %v2529 = vadd.f32 0.0, %v2528
      %v2530 = vpop.f32.mrb[0].mxu0
      %2531 = vmatprep.mubr.f32.mxu0 0.0
      %2532 = vmatmul.mubr.f32.gmra.mrb[0].mxu0 %v863
      %v2533 = vpop.f32.mrb[0].mxu0
      %v2534 = vadd.f32 0.0, %v2533
      %v2535 = vpop.f32.mrb[0].mxu0
      %2536 = vmatprep.mubr.f32.mxu0 0.0
      %2537 = vmatmul.mubr.f32.gmra.mrb[0].mxu0 %v866
      %v2538 = vpop.f32.mrb[0].mxu0
      %v2539 = vadd.f32 0.0, %v2538
      %v2540 = vpop.f32.mrb[0].mxu0
      %2541 = vmatprep.mubr.f32.mxu0 0.0
      %2542 = vmatmul.mubr.f32.gmra.mrb[0].mxu0 %v869
      %v2543 = vpop.f32.mrb[0].mxu0
      %v2544 = vadd.f32 0.0, %v2543
      %v2545 = vpop.f32.mrb[0].mxu0
      %2546 = vmatprep.mubr.f32.mxu0 0.0
      %2547 = vmatmul.mubr.f32.gmra.mrb[0].mxu0 %v872
      %v2548 = vpop.f32.mrb[0].mxu0
      %v2549 = vadd.f32 0.0, %v2548
      %v2550 = vpop.f32.mrb[0].mxu0
      %2551 = vmatprep.mubr.f32.mxu0 0.0
      %2552 = vmatmul.mubr.f32.gmra.mrb[0].mxu0 %v875
      %v2553 = vpop.f32.mrb[0].mxu0
      %v2554 = vadd.f32 0.0, %v2553
      %v2555 = vpop.f32.mrb[0].mxu0
      %2556 = vmatprep.mubr.f32.mxu0 0.0
      %2557 = vmatmul.mubr.f32.gmra.mrb[0].mxu0 %v878
      %v2558 = vpop.f32.mrb[0].mxu0
      %v2559 = vadd.f32 0.0, %v2558
      %v2560 = vpop.f32.mrb[0].mxu0
      %2561 = vmatprep.mubr.f32.mxu0 0.0
      %2562 = vmatmul.mubr.f32.gmra.mrb[0].mxu0 %v881
      %v2563 = vpop.f32.mrb[0].mxu0
      %v2564 = vadd.f32 0.0, %v2563
      %v2565 = vpop.f32.mrb[0].mxu0
      %2566 = vmatprep.mubr.f32.mxu0 0.0
      %2567 = vmatmul.mubr.f32.gmra.mrb[0].mxu0 %v884
      %v2568 = vpop.f32.mrb[0].mxu0
      %v2569 = vadd.f32 0.0, %v2568
      %v2570 = vpop.f32.mrb[0].mxu0
      %2571 = vmatprep.mubr.f32.mxu0 0.0
      %2572 = vmatmul.mubr.f32.gmra.mrb[0].mxu0 %v887
      %v2573 = vpop.f32.mrb[0].mxu0
      %v2574 = vadd.f32 0.0, %v2573
      %v2575 = vpop.f32.mrb[0].mxu0
      %2576 = vmatprep.mubr.f32.mxu0 0.0
      %2577 = vmatmul.mubr.f32.gmra.mrb[0].mxu0 %v2357
      %v2578 = vpop.f32.mrb[0].mxu0
      %v2579 = vadd.f32 0.0, %v2578
      %v2580 = vpop.f32.mrb[0].mxu0
      %2581 = vmatprep.mubr.f32.mxu0 0.0
      %2582 = vmatmul.mubr.f32.gmra.mrb[0].mxu0 %v2360
      %v2583 = vpop.f32.mrb[0].mxu0
      %v2584 = vadd.f32 0.0, %v2583
      %v2585 = vpop.f32.mrb[0].mxu0
      %2586 = vdwg.mxu0
      %2619 = vrot.lane.b32.xlu0 %v2429, 8
      %v2620 = vpop.permute.xlu0 %2619
      %2621 = vrot.lane.b32.xlu0 %v2434, 8
      %v2622 = vpop.permute.xlu0 %2621
      %2623 = vrot.lane.b32.xlu0 %v2439, 8
      %v2624 = vpop.permute.xlu0 %2623
      %2625 = vrot.lane.b32.xlu0 %v2444, 8
      %v2626 = vpop.permute.xlu0 %2625
      %2627 = vrot.lane.b32.xlu0 %v2449, 8
      %v2628 = vpop.permute.xlu0 %2627
      %2629 = vrot.lane.b32.xlu0 %v2454, 8
      %v2630 = vpop.permute.xlu0 %2629
      %2631 = vrot.lane.b32.xlu0 %v2459, 8
      %v2632 = vpop.permute.xlu0 %2631
      %2633 = vrot.lane.b32.xlu0 %v2464, 8
      %v2634 = vpop.permute.xlu0 %2633
      %2635 = vrot.lane.b32.xlu0 %v2469, 8
      %v2636 = vpop.permute.xlu0 %2635
      %2637 = vrot.lane.b32.xlu0 %v2474, 8
      %v2638 = vpop.permute.xlu0 %2637
      %2639 = vrot.lane.b32.xlu0 %v2479, 8
      %v2640 = vpop.permute.xlu0 %2639
      %2641 = vrot.lane.b32.xlu0 %v2484, 8
      %v2642 = vpop.permute.xlu0 %2641
      %2643 = vrot.lane.b32.xlu0 %v2489, 8
      %v2644 = vpop.permute.xlu0 %2643
      %2645 = vrot.lane.b32.xlu0 %v2494, 8
      %v2646 = vpop.permute.xlu0 %2645
      %2647 = vrot.lane.b32.xlu0 %v2499, 8
      %v2648 = vpop.permute.xlu0 %2647
      %2649 = vrot.lane.b32.xlu0 %v2504, 8
      %v2650 = vpop.permute.xlu0 %2649
      %2651 = vrot.lane.b32.xlu0 %v2509, 8
      %v2652 = vpop.permute.xlu0 %2651
      %2653 = vrot.lane.b32.xlu0 %v2514, 8
      %v2654 = vpop.permute.xlu0 %2653
      %2655 = vrot.lane.b32.xlu0 %v2519, 8
      %v2656 = vpop.permute.xlu0 %2655
      %2657 = vrot.lane.b32.xlu0 %v2524, 8
      %v2658 = vpop.permute.xlu0 %2657
      %2659 = vrot.lane.b32.xlu0 %v2529, 8
      %v2660 = vpop.permute.xlu0 %2659
      %2661 = vrot.lane.b32.xlu0 %v2534, 8
      %v2662 = vpop.permute.xlu0 %2661
      %2663 = vrot.lane.b32.xlu0 %v2539, 8
      %v2664 = vpop.permute.xlu0 %2663
      %2665 = vrot.lane.b32.xlu0 %v2544, 8
      %v2666 = vpop.permute.xlu0 %2665
      %2667 = vrot.lane.b32.xlu0 %v2549, 8
      %v2668 = vpop.permute.xlu0 %2667
      %2669 = vrot.lane.b32.xlu0 %v2554, 8
      %v2670 = vpop.permute.xlu0 %2669
      %2671 = vrot.lane.b32.xlu0 %v2559, 8
      %v2672 = vpop.permute.xlu0 %2671
      %2673 = vrot.lane.b32.xlu0 %v2564, 8
      %v2674 = vpop.permute.xlu0 %2673
      %2675 = vrot.lane.b32.xlu0 %v2569, 8
      %v2676 = vpop.permute.xlu0 %2675
      %2677 = vrot.lane.b32.xlu0 %v2574, 8
      %v2678 = vpop.permute.xlu0 %2677
      %2679 = vrot.lane.b32.xlu0 %v2579, 8
      %v2680 = vpop.permute.xlu0 %2679
      %2681 = vrot.lane.b32.xlu0 %v2584, 8
      %v2682 = vpop.permute.xlu0 %2681
      %v2715 = vadd.f32 %v2322, %v2620
      %v2716 = vadd.f32 %v2323, %v2622
      %v2717 = vadd.f32 %v2324, %v2624
      %v2718 = vadd.f32 %v2325, %v2626
      %v2719 = vadd.f32 %v2326, %v2628
      %v2720 = vadd.f32 %v2327, %v2630
      %v2721 = vadd.f32 %v2328, %v2632
      %v2722 = vadd.f32 %v2329, %v2634
      %v2723 = vadd.f32 %v2330, %v2636
      %v2724 = vadd.f32 %v2331, %v2638
      %v2725 = vadd.f32 %v2332, %v2640
      %v2726 = vadd.f32 %v2333, %v2642
      %v2727 = vadd.f32 %v2334, %v2644
      %v2728 = vadd.f32 %v2335, %v2646
      %v2729 = vadd.f32 %v2336, %v2648
      %v2730 = vadd.f32 %v2337, %v2650
      %v2731 = vadd.f32 %v2338, %v2652
      %v2732 = vadd.f32 %v2339, %v2654
      %v2733 = vadd.f32 %v2340, %v2656
      %v2734 = vadd.f32 %v2341, %v2658
      %v2735 = vadd.f32 %v2342, %v2660
      %v2736 = vadd.f32 %v2343, %v2662
      %v2737 = vadd.f32 %v2344, %v2664
      %v2738 = vadd.f32 %v2345, %v2666
      %v2739 = vadd.f32 %v2346, %v2668
      %v2740 = vadd.f32 %v2347, %v2670
      %v2741 = vadd.f32 %v2348, %v2672
      %v2742 = vadd.f32 %v2349, %v2674
      %v2743 = vadd.f32 %v2350, %v2676
      %v2744 = vadd.f32 %v2351, %v2678
      %v2745 = vadd.f32 %v2352, %v2680
      %v2746 = vadd.f32 %v2353, %v2682
      %v2748 = vrot.slane %v786, 1
      %v2749 = vrot.slane %v787, 1
      %v2750 = vsel %vm1290, %v2748, %v2749
      %v2751 = vrot.slane %v788, 1
      %v2752 = vsel %vm1290, %v2749, %v2751
      %s2753 = scalar_lea.vmem %s3, 32
      %v2754 = vld [vmem:[%s2753] sm:$0xff]
      %v2755 = vsel %vm659, %v2750, 0
      %v2757 = vsel %vm659, %v2752, 0
      %2759 = vmatprep.subr.mxu0 0.0
      %2760 = vmatpush1.msra.mxu0 %v2754
      %2761 = vmatprep.subr.mxu0 0.0
      %2762 = vmatpush1.msra.mxu0 0.0
      %2763 = vmatprep.subr.mxu0 0.0
      %2764 = vmatpush1.msra.mxu0 0.0
      %2765 = vmatprep.subr.mxu0 0.0
      %2766 = vmatpush1.msra.mxu0 0.0
      %2767 = vmatprep.subr.mxu0 0.0
      %2768 = vmatpush1.msra.mxu0 0.0
      %2769 = vmatprep.subr.mxu0 0.0
      %2770 = vmatpush1.msra.mxu0 0.0
      %2771 = vmatprep.subr.mxu0 0.0
      %2772 = vmatpush1.msra.mxu0 0.0
      %2773 = vmatprep.subr.mxu0 0.0
      %2774 = vmatpush1.msra.mxu0 0.0
      %2775 = vmatprep.subr.mxu0 0.0
      %2776 = vmatpush1.msra.mxu0 0.0
      %2777 = vmatprep.subr.mxu0 0.0
      %2778 = vmatpush1.msra.mxu0 0.0
      %2779 = vmatprep.subr.mxu0 0.0
      %2780 = vmatpush1.msra.mxu0 0.0
      %2781 = vmatprep.subr.mxu0 0.0
      %2782 = vmatpush1.msra.mxu0 0.0
      %2783 = vmatprep.subr.mxu0 0.0
      %2784 = vmatpush1.msra.mxu0 0.0
      %2785 = vmatprep.subr.mxu0 0.0
      %2786 = vmatpush1.msra.mxu0 0.0
      %2787 = vmatprep.subr.mxu0 0.0
      %2788 = vmatpush1.msra.mxu0 0.0
      %2789 = vmatprep.subr.mxu0 0.0
      %2790 = vmatpush1.msra.mxu0 0.0
      %2791 = vmatprep.subr.mxu0 0.0
      %2792 = vmatpush1.msra.mxu0 0.0
      %2793 = vmatprep.subr.mxu0 0.0
      %2794 = vmatpush1.msra.mxu0 0.0
      %2795 = vmatprep.subr.mxu0 0.0
      %2796 = vmatpush1.msra.mxu0 0.0
      %2797 = vmatprep.subr.mxu0 0.0
      %2798 = vmatpush1.msra.mxu0 0.0
      %2799 = vmatprep.subr.mxu0 0.0
      %2800 = vmatpush1.msra.mxu0 0.0
      %2801 = vmatprep.subr.mxu0 0.0
      %2802 = vmatpush1.msra.mxu0 0.0
      %2803 = vmatprep.subr.mxu0 0.0
      %2804 = vmatpush1.msra.mxu0 0.0
      %2805 = vmatprep.subr.mxu0 0.0
      %2806 = vmatpush1.msra.mxu0 0.0
      %2807 = vmatprep.subr.mxu0 0.0
      %2808 = vmatpush1.msra.mxu0 0.0
      %2809 = vmatprep.subr.mxu0 0.0
      %2810 = vmatpush1.msra.mxu0 0.0
      %2811 = vmatprep.subr.mxu0 0.0
      %2812 = vmatpush1.msra.mxu0 0.0
      %2813 = vmatprep.subr.mxu0 0.0
      %2814 = vmatpush1.msra.mxu0 0.0
      %2815 = vmatprep.subr.mxu0 0.0
      %2816 = vmatpush1.msra.mxu0 0.0
      %2817 = vmatprep.subr.mxu0 0.0
      %2818 = vmatpush1.msra.mxu0 0.0
      %2819 = vmatprep.subr.mxu0 0.0
      %2820 = vmatpush1.msra.mxu0 0.0
      %2821 = vmatprep.subr.mxu0 0.0
      %2822 = vmatpush1.msra.mxu0 0.0
      %2823 = vmatprep.mubr.f32.mxu0 0.0
      %2824 = vmatmul.mubr.f32.gmra.mrb[0].mxu0 %v1377
      %v2825 = vpop.f32.mrb[0].mxu0
      %v2826 = vadd.f32 0.0, %v2825
      %v2827 = vpop.f32.mrb[0].mxu0
      %2828 = vmatprep.mubr.f32.mxu0 0.0
      %2829 = vmatmul.mubr.f32.gmra.mrb[0].mxu0 %v1379
      %v2830 = vpop.f32.mrb[0].mxu0
      %v2831 = vadd.f32 0.0, %v2830
      %v2832 = vpop.f32.mrb[0].mxu0
      %2833 = vmatprep.mubr.f32.mxu0 0.0
      %2834 = vmatmul.mubr.f32.gmra.mrb[0].mxu0 %v1381
      %v2835 = vpop.f32.mrb[0].mxu0
      %v2836 = vadd.f32 0.0, %v2835
      %v2837 = vpop.f32.mrb[0].mxu0
      %2838 = vmatprep.mubr.f32.mxu0 0.0
      %2839 = vmatmul.mubr.f32.gmra.mrb[0].mxu0 %v1383
      %v2840 = vpop.f32.mrb[0].mxu0
      %v2841 = vadd.f32 0.0, %v2840
      %v2842 = vpop.f32.mrb[0].mxu0
      %2843 = vmatprep.mubr.f32.mxu0 0.0
      %2844 = vmatmul.mubr.f32.gmra.mrb[0].mxu0 %v1385
      %v2845 = vpop.f32.mrb[0].mxu0
      %v2846 = vadd.f32 0.0, %v2845
      %v2847 = vpop.f32.mrb[0].mxu0
      %2848 = vmatprep.mubr.f32.mxu0 0.0
      %2849 = vmatmul.mubr.f32.gmra.mrb[0].mxu0 %v1387
      %v2850 = vpop.f32.mrb[0].mxu0
      %v2851 = vadd.f32 0.0, %v2850
      %v2852 = vpop.f32.mrb[0].mxu0
      %2853 = vmatprep.mubr.f32.mxu0 0.0
      %2854 = vmatmul.mubr.f32.gmra.mrb[0].mxu0 %v1389
      %v2855 = vpop.f32.mrb[0].mxu0
      %v2856 = vadd.f32 0.0, %v2855
      %v2857 = vpop.f32.mrb[0].mxu0
      %2858 = vmatprep.mubr.f32.mxu0 0.0
      %2859 = vmatmul.mubr.f32.gmra.mrb[0].mxu0 %v1391
      %v2860 = vpop.f32.mrb[0].mxu0
      %v2861 = vadd.f32 0.0, %v2860
      %v2862 = vpop.f32.mrb[0].mxu0
      %2863 = vmatprep.mubr.f32.mxu0 0.0
      %2864 = vmatmul.mubr.f32.gmra.mrb[0].mxu0 %v1393
      %v2865 = vpop.f32.mrb[0].mxu0
      %v2866 = vadd.f32 0.0, %v2865
      %v2867 = vpop.f32.mrb[0].mxu0
      %2868 = vmatprep.mubr.f32.mxu0 0.0
      %2869 = vmatmul.mubr.f32.gmra.mrb[0].mxu0 %v1395
      %v2870 = vpop.f32.mrb[0].mxu0
      %v2871 = vadd.f32 0.0, %v2870
      %v2872 = vpop.f32.mrb[0].mxu0
      %2873 = vmatprep.mubr.f32.mxu0 0.0
      %2874 = vmatmul.mubr.f32.gmra.mrb[0].mxu0 %v1397
      %v2875 = vpop.f32.mrb[0].mxu0
      %v2876 = vadd.f32 0.0, %v2875
      %v2877 = vpop.f32.mrb[0].mxu0
      %2878 = vmatprep.mubr.f32.mxu0 0.0
      %2879 = vmatmul.mubr.f32.gmra.mrb[0].mxu0 %v1399
      %v2880 = vpop.f32.mrb[0].mxu0
      %v2881 = vadd.f32 0.0, %v2880
      %v2882 = vpop.f32.mrb[0].mxu0
      %2883 = vmatprep.mubr.f32.mxu0 0.0
      %2884 = vmatmul.mubr.f32.gmra.mrb[0].mxu0 %v1401
      %v2885 = vpop.f32.mrb[0].mxu0
      %v2886 = vadd.f32 0.0, %v2885
      %v2887 = vpop.f32.mrb[0].mxu0
      %2888 = vmatprep.mubr.f32.mxu0 0.0
      %2889 = vmatmul.mubr.f32.gmra.mrb[0].mxu0 %v1403
      %v2890 = vpop.f32.mrb[0].mxu0
      %v2891 = vadd.f32 0.0, %v2890
      %v2892 = vpop.f32.mrb[0].mxu0
      %2893 = vmatprep.mubr.f32.mxu0 0.0
      %2894 = vmatmul.mubr.f32.gmra.mrb[0].mxu0 %v1405
      %v2895 = vpop.f32.mrb[0].mxu0
      %v2896 = vadd.f32 0.0, %v2895
      %v2897 = vpop.f32.mrb[0].mxu0
      %2898 = vmatprep.mubr.f32.mxu0 0.0
      %2899 = vmatmul.mubr.f32.gmra.mrb[0].mxu0 %v1407
      %v2900 = vpop.f32.mrb[0].mxu0
      %v2901 = vadd.f32 0.0, %v2900
      %v2902 = vpop.f32.mrb[0].mxu0
      %2903 = vmatprep.mubr.f32.mxu0 0.0
      %2904 = vmatmul.mubr.f32.gmra.mrb[0].mxu0 %v1409
      %v2905 = vpop.f32.mrb[0].mxu0
      %v2906 = vadd.f32 0.0, %v2905
      %v2907 = vpop.f32.mrb[0].mxu0
      %2908 = vmatprep.mubr.f32.mxu0 0.0
      %2909 = vmatmul.mubr.f32.gmra.mrb[0].mxu0 %v1411
      %v2910 = vpop.f32.mrb[0].mxu0
      %v2911 = vadd.f32 0.0, %v2910
      %v2912 = vpop.f32.mrb[0].mxu0
      %2913 = vmatprep.mubr.f32.mxu0 0.0
      %2914 = vmatmul.mubr.f32.gmra.mrb[0].mxu0 %v1413
      %v2915 = vpop.f32.mrb[0].mxu0
      %v2916 = vadd.f32 0.0, %v2915
      %v2917 = vpop.f32.mrb[0].mxu0
      %2918 = vmatprep.mubr.f32.mxu0 0.0
      %2919 = vmatmul.mubr.f32.gmra.mrb[0].mxu0 %v1415
      %v2920 = vpop.f32.mrb[0].mxu0
      %v2921 = vadd.f32 0.0, %v2920
      %v2922 = vpop.f32.mrb[0].mxu0
      %2923 = vmatprep.mubr.f32.mxu0 0.0
      %2924 = vmatmul.mubr.f32.gmra.mrb[0].mxu0 %v1417
      %v2925 = vpop.f32.mrb[0].mxu0
      %v2926 = vadd.f32 0.0, %v2925
      %v2927 = vpop.f32.mrb[0].mxu0
      %2928 = vmatprep.mubr.f32.mxu0 0.0
      %2929 = vmatmul.mubr.f32.gmra.mrb[0].mxu0 %v1419
      %v2930 = vpop.f32.mrb[0].mxu0
      %v2931 = vadd.f32 0.0, %v2930
      %v2932 = vpop.f32.mrb[0].mxu0
      %2933 = vmatprep.mubr.f32.mxu0 0.0
      %2934 = vmatmul.mubr.f32.gmra.mrb[0].mxu0 %v1421
      %v2935 = vpop.f32.mrb[0].mxu0
      %v2936 = vadd.f32 0.0, %v2935
      %v2937 = vpop.f32.mrb[0].mxu0
      %2938 = vmatprep.mubr.f32.mxu0 0.0
      %2939 = vmatmul.mubr.f32.gmra.mrb[0].mxu0 %v1423
      %v2940 = vpop.f32.mrb[0].mxu0
      %v2941 = vadd.f32 0.0, %v2940
      %v2942 = vpop.f32.mrb[0].mxu0
      %2943 = vmatprep.mubr.f32.mxu0 0.0
      %2944 = vmatmul.mubr.f32.gmra.mrb[0].mxu0 %v1425
      %v2945 = vpop.f32.mrb[0].mxu0
      %v2946 = vadd.f32 0.0, %v2945
      %v2947 = vpop.f32.mrb[0].mxu0
      %2948 = vmatprep.mubr.f32.mxu0 0.0
      %2949 = vmatmul.mubr.f32.gmra.mrb[0].mxu0 %v1427
      %v2950 = vpop.f32.mrb[0].mxu0
      %v2951 = vadd.f32 0.0, %v2950
      %v2952 = vpop.f32.mrb[0].mxu0
      %2953 = vmatprep.mubr.f32.mxu0 0.0
      %2954 = vmatmul.mubr.f32.gmra.mrb[0].mxu0 %v1429
      %v2955 = vpop.f32.mrb[0].mxu0
      %v2956 = vadd.f32 0.0, %v2955
      %v2957 = vpop.f32.mrb[0].mxu0
      %2958 = vmatprep.mubr.f32.mxu0 0.0
      %2959 = vmatmul.mubr.f32.gmra.mrb[0].mxu0 %v1431
      %v2960 = vpop.f32.mrb[0].mxu0
      %v2961 = vadd.f32 0.0, %v2960
      %v2962 = vpop.f32.mrb[0].mxu0
      %2963 = vmatprep.mubr.f32.mxu0 0.0
      %2964 = vmatmul.mubr.f32.gmra.mrb[0].mxu0 %v1433
      %v2965 = vpop.f32.mrb[0].mxu0
      %v2966 = vadd.f32 0.0, %v2965
      %v2967 = vpop.f32.mrb[0].mxu0
      %2968 = vmatprep.mubr.f32.mxu0 0.0
      %2969 = vmatmul.mubr.f32.gmra.mrb[0].mxu0 %v1435
      %v2970 = vpop.f32.mrb[0].mxu0
      %v2971 = vadd.f32 0.0, %v2970
      %v2972 = vpop.f32.mrb[0].mxu0
      %2973 = vmatprep.mubr.f32.mxu0 0.0
      %2974 = vmatmul.mubr.f32.gmra.mrb[0].mxu0 %v2755
      %v2975 = vpop.f32.mrb[0].mxu0
      %v2976 = vadd.f32 0.0, %v2975
      %v2977 = vpop.f32.mrb[0].mxu0
      %2978 = vmatprep.mubr.f32.mxu0 0.0
      %2979 = vmatmul.mubr.f32.gmra.mrb[0].mxu0 %v2757
      %v2980 = vpop.f32.mrb[0].mxu0
      %v2981 = vadd.f32 0.0, %v2980
      %v2982 = vpop.f32.mrb[0].mxu0
      %2983 = vdwg.mxu0
      %3016 = vrot.lane.b32.xlu0 %v2826, 8
      %v3017 = vpop.permute.xlu0 %3016
      %3018 = vrot.lane.b32.xlu0 %v2831, 8
      %v3019 = vpop.permute.xlu0 %3018
      %3020 = vrot.lane.b32.xlu0 %v2836, 8
      %v3021 = vpop.permute.xlu0 %3020
      %3022 = vrot.lane.b32.xlu0 %v2841, 8
      %v3023 = vpop.permute.xlu0 %3022
      %3024 = vrot.lane.b32.xlu0 %v2846, 8
      %v3025 = vpop.permute.xlu0 %3024
      %3026 = vrot.lane.b32.xlu0 %v2851, 8
      %v3027 = vpop.permute.xlu0 %3026
      %3028 = vrot.lane.b32.xlu0 %v2856, 8
      %v3029 = vpop.permute.xlu0 %3028
      %3030 = vrot.lane.b32.xlu0 %v2861, 8
      %v3031 = vpop.permute.xlu0 %3030
      %3032 = vrot.lane.b32.xlu0 %v2866, 8
      %v3033 = vpop.permute.xlu0 %3032
      %3034 = vrot.lane.b32.xlu0 %v2871, 8
      %v3035 = vpop.permute.xlu0 %3034
      %3036 = vrot.lane.b32.xlu0 %v2876, 8
      %v3037 = vpop.permute.xlu0 %3036
      %3038 = vrot.lane.b32.xlu0 %v2881, 8
      %v3039 = vpop.permute.xlu0 %3038
      %3040 = vrot.lane.b32.xlu0 %v2886, 8
      %v3041 = vpop.permute.xlu0 %3040
      %3042 = vrot.lane.b32.xlu0 %v2891, 8
      %v3043 = vpop.permute.xlu0 %3042
      %3044 = vrot.lane.b32.xlu0 %v2896, 8
      %v3045 = vpop.permute.xlu0 %3044
      %3046 = vrot.lane.b32.xlu0 %v2901, 8
      %v3047 = vpop.permute.xlu0 %3046
      %3048 = vrot.lane.b32.xlu0 %v2906, 8
      %v3049 = vpop.permute.xlu0 %3048
      %3050 = vrot.lane.b32.xlu0 %v2911, 8
      %v3051 = vpop.permute.xlu0 %3050
      %3052 = vrot.lane.b32.xlu0 %v2916, 8
      %v3053 = vpop.permute.xlu0 %3052
      %3054 = vrot.lane.b32.xlu0 %v2921, 8
      %v3055 = vpop.permute.xlu0 %3054
      %3056 = vrot.lane.b32.xlu0 %v2926, 8
      %v3057 = vpop.permute.xlu0 %3056
      %3058 = vrot.lane.b32.xlu0 %v2931, 8
      %v3059 = vpop.permute.xlu0 %3058
      %3060 = vrot.lane.b32.xlu0 %v2936, 8
      %v3061 = vpop.permute.xlu0 %3060
      %3062 = vrot.lane.b32.xlu0 %v2941, 8
      %v3063 = vpop.permute.xlu0 %3062
      %3064 = vrot.lane.b32.xlu0 %v2946, 8
      %v3065 = vpop.permute.xlu0 %3064
      %3066 = vrot.lane.b32.xlu0 %v2951, 8
      %v3067 = vpop.permute.xlu0 %3066
      %3068 = vrot.lane.b32.xlu0 %v2956, 8
      %v3069 = vpop.permute.xlu0 %3068
      %3070 = vrot.lane.b32.xlu0 %v2961, 8
      %v3071 = vpop.permute.xlu0 %3070
      %3072 = vrot.lane.b32.xlu0 %v2966, 8
      %v3073 = vpop.permute.xlu0 %3072
      %3074 = vrot.lane.b32.xlu0 %v2971, 8
      %v3075 = vpop.permute.xlu0 %3074
      %3076 = vrot.lane.b32.xlu0 %v2976, 8
      %v3077 = vpop.permute.xlu0 %3076
      %3078 = vrot.lane.b32.xlu0 %v2981, 8
      %v3079 = vpop.permute.xlu0 %3078
      %v3112 = vadd.f32 %v2715, %v3017
      %v3113 = vadd.f32 %v2716, %v3019
      %v3114 = vadd.f32 %v2717, %v3021
      %v3115 = vadd.f32 %v2718, %v3023
      %v3116 = vadd.f32 %v2719, %v3025
      %v3117 = vadd.f32 %v2720, %v3027
      %v3118 = vadd.f32 %v2721, %v3029
      %v3119 = vadd.f32 %v2722, %v3031
      %v3120 = vadd.f32 %v2723, %v3033
      %v3121 = vadd.f32 %v2724, %v3035
      %v3122 = vadd.f32 %v2725, %v3037
      %v3123 = vadd.f32 %v2726, %v3039
      %v3124 = vadd.f32 %v2727, %v3041
      %v3125 = vadd.f32 %v2728, %v3043
      %v3126 = vadd.f32 %v2729, %v3045
      %v3127 = vadd.f32 %v2730, %v3047
      %v3128 = vadd.f32 %v2731, %v3049
      %v3129 = vadd.f32 %v2732, %v3051
      %v3130 = vadd.f32 %v2733, %v3053
      %v3131 = vadd.f32 %v2734, %v3055
      %v3132 = vadd.f32 %v2735, %v3057
      %v3133 = vadd.f32 %v2736, %v3059
      %v3134 = vadd.f32 %v2737, %v3061
      %v3135 = vadd.f32 %v2738, %v3063
      %v3136 = vadd.f32 %v2739, %v3065
      %v3137 = vadd.f32 %v2740, %v3067
      %v3138 = vadd.f32 %v2741, %v3069
      %v3139 = vadd.f32 %v2742, %v3071
      %v3140 = vadd.f32 %v2743, %v3073
      %v3141 = vadd.f32 %v2744, %v3075
      %v3142 = vadd.f32 %v2745, %v3077
      %v3143 = vadd.f32 %v2746, %v3079
      %v3144 = vrot.slane %v786, 2
      %v3145 = vrot.slane %v787, 2
      %v3146 = vsel %vm1822, %v3144, %v3145
      %v3147 = vrot.slane %v788, 2
      %v3148 = vsel %vm1822, %v3145, %v3147
      %s3149 = scalar_lea.vmem %s3, 40
      %v3150 = vld [vmem:[%s3149] sm:$0xff]
      %v3151 = vsel %vm659, %v3146, 0
      %v3153 = vsel %vm659, %v3148, 0
      %3155 = vmatprep.subr.mxu0 0.0
      %3156 = vmatpush1.msra.mxu0 %v3150
      %3157 = vmatprep.subr.mxu0 0.0
      %3158 = vmatpush1.msra.mxu0 0.0
      %3159 = vmatprep.subr.mxu0 0.0
      %3160 = vmatpush1.msra.mxu0 0.0
      %3161 = vmatprep.subr.mxu0 0.0
      %3162 = vmatpush1.msra.mxu0 0.0
      %3163 = vmatprep.subr.mxu0 0.0
      %3164 = vmatpush1.msra.mxu0 0.0
      %3165 = vmatprep.subr.mxu0 0.0
      %3166 = vmatpush1.msra.mxu0 0.0
      %3167 = vmatprep.subr.mxu0 0.0
      %3168 = vmatpush1.msra.mxu0 0.0
      %3169 = vmatprep.subr.mxu0 0.0
      %3170 = vmatpush1.msra.mxu0 0.0
      %3171 = vmatprep.subr.mxu0 0.0
      %3172 = vmatpush1.msra.mxu0 0.0
      %3173 = vmatprep.subr.mxu0 0.0
      %3174 = vmatpush1.msra.mxu0 0.0
      %3175 = vmatprep.subr.mxu0 0.0
      %3176 = vmatpush1.msra.mxu0 0.0
      %3177 = vmatprep.subr.mxu0 0.0
      %3178 = vmatpush1.msra.mxu0 0.0
      %3179 = vmatprep.subr.mxu0 0.0
      %3180 = vmatpush1.msra.mxu0 0.0
      %3181 = vmatprep.subr.mxu0 0.0
      %3182 = vmatpush1.msra.mxu0 0.0
      %3183 = vmatprep.subr.mxu0 0.0
      %3184 = vmatpush1.msra.mxu0 0.0
      %3185 = vmatprep.subr.mxu0 0.0
      %3186 = vmatpush1.msra.mxu0 0.0
      %3187 = vmatprep.subr.mxu0 0.0
      %3188 = vmatpush1.msra.mxu0 0.0
      %3189 = vmatprep.subr.mxu0 0.0
      %3190 = vmatpush1.msra.mxu0 0.0
      %3191 = vmatprep.subr.mxu0 0.0
      %3192 = vmatpush1.msra.mxu0 0.0
      %3193 = vmatprep.subr.mxu0 0.0
      %3194 = vmatpush1.msra.mxu0 0.0
      %3195 = vmatprep.subr.mxu0 0.0
      %3196 = vmatpush1.msra.mxu0 0.0
      %3197 = vmatprep.subr.mxu0 0.0
      %3198 = vmatpush1.msra.mxu0 0.0
      %3199 = vmatprep.subr.mxu0 0.0
      %3200 = vmatpush1.msra.mxu0 0.0
      %3201 = vmatprep.subr.mxu0 0.0
      %3202 = vmatpush1.msra.mxu0 0.0
      %3203 = vmatprep.subr.mxu0 0.0
      %3204 = vmatpush1.msra.mxu0 0.0
      %3205 = vmatprep.subr.mxu0 0.0
      %3206 = vmatpush1.msra.mxu0 0.0
      %3207 = vmatprep.subr.mxu0 0.0
      %3208 = vmatpush1.msra.mxu0 0.0
      %3209 = vmatprep.subr.mxu0 0.0
      %3210 = vmatpush1.msra.mxu0 0.0
      %3211 = vmatprep.subr.mxu0 0.0
      %3212 = vmatpush1.msra.mxu0 0.0
      %3213 = vmatprep.subr.mxu0 0.0
      %3214 = vmatpush1.msra.mxu0 0.0
      %3215 = vmatprep.subr.mxu0 0.0
      %3216 = vmatpush1.msra.mxu0 0.0
      %3217 = vmatprep.subr.mxu0 0.0
      %3218 = vmatpush1.msra.mxu0 0.0
      %3219 = vmatprep.mubr.f32.mxu0 0.0
      %3220 = vmatmul.mubr.f32.gmra.mrb[0].mxu0 %v1909
      %v3221 = vpop.f32.mrb[0].mxu0
      %v3222 = vadd.f32 0.0, %v3221
      %v3223 = vpop.f32.mrb[0].mxu0
      %3224 = vmatprep.mubr.f32.mxu0 0.0
      %3225 = vmatmul.mubr.f32.gmra.mrb[0].mxu0 %v1911
      %v3226 = vpop.f32.mrb[0].mxu0
      %v3227 = vadd.f32 0.0, %v3226
      %v3228 = vpop.f32.mrb[0].mxu0
      %3229 = vmatprep.mubr.f32.mxu0 0.0
      %3230 = vmatmul.mubr.f32.gmra.mrb[0].mxu0 %v1913
      %v3231 = vpop.f32.mrb[0].mxu0
      %v3232 = vadd.f32 0.0, %v3231
      %v3233 = vpop.f32.mrb[0].mxu0
      %3234 = vmatprep.mubr.f32.mxu0 0.0
      %3235 = vmatmul.mubr.f32.gmra.mrb[0].mxu0 %v1915
      %v3236 = vpop.f32.mrb[0].mxu0
      %v3237 = vadd.f32 0.0, %v3236
      %v3238 = vpop.f32.mrb[0].mxu0
      %3239 = vmatprep.mubr.f32.mxu0 0.0
      %3240 = vmatmul.mubr.f32.gmra.mrb[0].mxu0 %v1917
      %v3241 = vpop.f32.mrb[0].mxu0
      %v3242 = vadd.f32 0.0, %v3241
      %v3243 = vpop.f32.mrb[0].mxu0
      %3244 = vmatprep.mubr.f32.mxu0 0.0
      %3245 = vmatmul.mubr.f32.gmra.mrb[0].mxu0 %v1919
      %v3246 = vpop.f32.mrb[0].mxu0
      %v3247 = vadd.f32 0.0, %v3246
      %v3248 = vpop.f32.mrb[0].mxu0
      %3249 = vmatprep.mubr.f32.mxu0 0.0
      %3250 = vmatmul.mubr.f32.gmra.mrb[0].mxu0 %v1921
      %v3251 = vpop.f32.mrb[0].mxu0
      %v3252 = vadd.f32 0.0, %v3251
      %v3253 = vpop.f32.mrb[0].mxu0
      %3254 = vmatprep.mubr.f32.mxu0 0.0
      %3255 = vmatmul.mubr.f32.gmra.mrb[0].mxu0 %v1923
      %v3256 = vpop.f32.mrb[0].mxu0
      %v3257 = vadd.f32 0.0, %v3256
      %v3258 = vpop.f32.mrb[0].mxu0
      %3259 = vmatprep.mubr.f32.mxu0 0.0
      %3260 = vmatmul.mubr.f32.gmra.mrb[0].mxu0 %v1925
      %v3261 = vpop.f32.mrb[0].mxu0
      %v3262 = vadd.f32 0.0, %v3261
      %v3263 = vpop.f32.mrb[0].mxu0
      %3264 = vmatprep.mubr.f32.mxu0 0.0
      %3265 = vmatmul.mubr.f32.gmra.mrb[0].mxu0 %v1927
      %v3266 = vpop.f32.mrb[0].mxu0
      %v3267 = vadd.f32 0.0, %v3266
      %v3268 = vpop.f32.mrb[0].mxu0
      %3269 = vmatprep.mubr.f32.mxu0 0.0
      %3270 = vmatmul.mubr.f32.gmra.mrb[0].mxu0 %v1929
      %v3271 = vpop.f32.mrb[0].mxu0
      %v3272 = vadd.f32 0.0, %v3271
      %v3273 = vpop.f32.mrb[0].mxu0
      %3274 = vmatprep.mubr.f32.mxu0 0.0
      %3275 = vmatmul.mubr.f32.gmra.mrb[0].mxu0 %v1931
      %v3276 = vpop.f32.mrb[0].mxu0
      %v3277 = vadd.f32 0.0, %v3276
      %v3278 = vpop.f32.mrb[0].mxu0
      %3279 = vmatprep.mubr.f32.mxu0 0.0
      %3280 = vmatmul.mubr.f32.gmra.mrb[0].mxu0 %v1933
      %v3281 = vpop.f32.mrb[0].mxu0
      %v3282 = vadd.f32 0.0, %v3281
      %v3283 = vpop.f32.mrb[0].mxu0
      %3284 = vmatprep.mubr.f32.mxu0 0.0
      %3285 = vmatmul.mubr.f32.gmra.mrb[0].mxu0 %v1935
      %v3286 = vpop.f32.mrb[0].mxu0
      %v3287 = vadd.f32 0.0, %v3286
      %v3288 = vpop.f32.mrb[0].mxu0
      %3289 = vmatprep.mubr.f32.mxu0 0.0
      %3290 = vmatmul.mubr.f32.gmra.mrb[0].mxu0 %v1937
      %v3291 = vpop.f32.mrb[0].mxu0
      %v3292 = vadd.f32 0.0, %v3291
      %v3293 = vpop.f32.mrb[0].mxu0
      %3294 = vmatprep.mubr.f32.mxu0 0.0
      %3295 = vmatmul.mubr.f32.gmra.mrb[0].mxu0 %v1939
      %v3296 = vpop.f32.mrb[0].mxu0
      %v3297 = vadd.f32 0.0, %v3296
      %v3298 = vpop.f32.mrb[0].mxu0
      %3299 = vmatprep.mubr.f32.mxu0 0.0
      %3300 = vmatmul.mubr.f32.gmra.mrb[0].mxu0 %v1941
      %v3301 = vpop.f32.mrb[0].mxu0
      %v3302 = vadd.f32 0.0, %v3301
      %v3303 = vpop.f32.mrb[0].mxu0
      %3304 = vmatprep.mubr.f32.mxu0 0.0
      %3305 = vmatmul.mubr.f32.gmra.mrb[0].mxu0 %v1943
      %v3306 = vpop.f32.mrb[0].mxu0
      %v3307 = vadd.f32 0.0, %v3306
      %v3308 = vpop.f32.mrb[0].mxu0
      %3309 = vmatprep.mubr.f32.mxu0 0.0
      %3310 = vmatmul.mubr.f32.gmra.mrb[0].mxu0 %v1945
      %v3311 = vpop.f32.mrb[0].mxu0
      %v3312 = vadd.f32 0.0, %v3311
      %v3313 = vpop.f32.mrb[0].mxu0
      %3314 = vmatprep.mubr.f32.mxu0 0.0
      %3315 = vmatmul.mubr.f32.gmra.mrb[0].mxu0 %v1947
      %v3316 = vpop.f32.mrb[0].mxu0
      %v3317 = vadd.f32 0.0, %v3316
      %v3318 = vpop.f32.mrb[0].mxu0
      %3319 = vmatprep.mubr.f32.mxu0 0.0
      %3320 = vmatmul.mubr.f32.gmra.mrb[0].mxu0 %v1949
      %v3321 = vpop.f32.mrb[0].mxu0
      %v3322 = vadd.f32 0.0, %v3321
      %v3323 = vpop.f32.mrb[0].mxu0
      %3324 = vmatprep.mubr.f32.mxu0 0.0
      %3325 = vmatmul.mubr.f32.gmra.mrb[0].mxu0 %v1951
      %v3326 = vpop.f32.mrb[0].mxu0
      %v3327 = vadd.f32 0.0, %v3326
      %v3328 = vpop.f32.mrb[0].mxu0
      %3329 = vmatprep.mubr.f32.mxu0 0.0
      %3330 = vmatmul.mubr.f32.gmra.mrb[0].mxu0 %v1953
      %v3331 = vpop.f32.mrb[0].mxu0
      %v3332 = vadd.f32 0.0, %v3331
      %v3333 = vpop.f32.mrb[0].mxu0
      %3334 = vmatprep.mubr.f32.mxu0 0.0
      %3335 = vmatmul.mubr.f32.gmra.mrb[0].mxu0 %v1955
      %v3336 = vpop.f32.mrb[0].mxu0
      %v3337 = vadd.f32 0.0, %v3336
      %v3338 = vpop.f32.mrb[0].mxu0
      %3339 = vmatprep.mubr.f32.mxu0 0.0
      %3340 = vmatmul.mubr.f32.gmra.mrb[0].mxu0 %v1957
      %v3341 = vpop.f32.mrb[0].mxu0
      %v3342 = vadd.f32 0.0, %v3341
      %v3343 = vpop.f32.mrb[0].mxu0
      %3344 = vmatprep.mubr.f32.mxu0 0.0
      %3345 = vmatmul.mubr.f32.gmra.mrb[0].mxu0 %v1959
      %v3346 = vpop.f32.mrb[0].mxu0
      %v3347 = vadd.f32 0.0, %v3346
      %v3348 = vpop.f32.mrb[0].mxu0
      %3349 = vmatprep.mubr.f32.mxu0 0.0
      %3350 = vmatmul.mubr.f32.gmra.mrb[0].mxu0 %v1961
      %v3351 = vpop.f32.mrb[0].mxu0
      %v3352 = vadd.f32 0.0, %v3351
      %v3353 = vpop.f32.mrb[0].mxu0
      %3354 = vmatprep.mubr.f32.mxu0 0.0
      %3355 = vmatmul.mubr.f32.gmra.mrb[0].mxu0 %v1963
      %v3356 = vpop.f32.mrb[0].mxu0
      %v3357 = vadd.f32 0.0, %v3356
      %v3358 = vpop.f32.mrb[0].mxu0
      %3359 = vmatprep.mubr.f32.mxu0 0.0
      %3360 = vmatmul.mubr.f32.gmra.mrb[0].mxu0 %v1965
      %v3361 = vpop.f32.mrb[0].mxu0
      %v3362 = vadd.f32 0.0, %v3361
      %v3363 = vpop.f32.mrb[0].mxu0
      %3364 = vmatprep.mubr.f32.mxu0 0.0
      %3365 = vmatmul.mubr.f32.gmra.mrb[0].mxu0 %v1967
      %v3366 = vpop.f32.mrb[0].mxu0
      %v3367 = vadd.f32 0.0, %v3366
      %v3368 = vpop.f32.mrb[0].mxu0
      %3369 = vmatprep.mubr.f32.mxu0 0.0
      %3370 = vmatmul.mubr.f32.gmra.mrb[0].mxu0 %v3151
      %v3371 = vpop.f32.mrb[0].mxu0
      %v3372 = vadd.f32 0.0, %v3371
      %v3373 = vpop.f32.mrb[0].mxu0
      %3374 = vmatprep.mubr.f32.mxu0 0.0
      %3375 = vmatmul.mubr.f32.gmra.mrb[0].mxu0 %v3153
      %v3376 = vpop.f32.mrb[0].mxu0
      %v3377 = vadd.f32 0.0, %v3376
      %v3378 = vpop.f32.mrb[0].mxu0
      %3379 = vdwg.mxu0
      %3412 = vrot.lane.b32.xlu0 %v3222, 8
      %v3413 = vpop.permute.xlu0 %3412
      %3414 = vrot.lane.b32.xlu0 %v3227, 8
      %v3415 = vpop.permute.xlu0 %3414
      %3416 = vrot.lane.b32.xlu0 %v3232, 8
      %v3417 = vpop.permute.xlu0 %3416
      %3418 = vrot.lane.b32.xlu0 %v3237, 8
      %v3419 = vpop.permute.xlu0 %3418
      %3420 = vrot.lane.b32.xlu0 %v3242, 8
      %v3421 = vpop.permute.xlu0 %3420
      %3422 = vrot.lane.b32.xlu0 %v3247, 8
      %v3423 = vpop.permute.xlu0 %3422
      %3424 = vrot.lane.b32.xlu0 %v3252, 8
      %v3425 = vpop.permute.xlu0 %3424
      %3426 = vrot.lane.b32.xlu0 %v3257, 8
      %v3427 = vpop.permute.xlu0 %3426
      %3428 = vrot.lane.b32.xlu0 %v3262, 8
      %v3429 = vpop.permute.xlu0 %3428
      %3430 = vrot.lane.b32.xlu0 %v3267, 8
      %v3431 = vpop.permute.xlu0 %3430
      %3432 = vrot.lane.b32.xlu0 %v3272, 8
      %v3433 = vpop.permute.xlu0 %3432
      %3434 = vrot.lane.b32.xlu0 %v3277, 8
      %v3435 = vpop.permute.xlu0 %3434
      %3436 = vrot.lane.b32.xlu0 %v3282, 8
      %v3437 = vpop.permute.xlu0 %3436
      %3438 = vrot.lane.b32.xlu0 %v3287, 8
      %v3439 = vpop.permute.xlu0 %3438
      %3440 = vrot.lane.b32.xlu0 %v3292, 8
      %v3441 = vpop.permute.xlu0 %3440
      %3442 = vrot.lane.b32.xlu0 %v3297, 8
      %v3443 = vpop.permute.xlu0 %3442
      %3444 = vrot.lane.b32.xlu0 %v3302, 8
      %v3445 = vpop.permute.xlu0 %3444
      %3446 = vrot.lane.b32.xlu0 %v3307, 8
      %v3447 = vpop.permute.xlu0 %3446
      %3448 = vrot.lane.b32.xlu0 %v3312, 8
      %v3449 = vpop.permute.xlu0 %3448
      %3450 = vrot.lane.b32.xlu0 %v3317, 8
      %v3451 = vpop.permute.xlu0 %3450
      %3452 = vrot.lane.b32.xlu0 %v3322, 8
      %v3453 = vpop.permute.xlu0 %3452
      %3454 = vrot.lane.b32.xlu0 %v3327, 8
      %v3455 = vpop.permute.xlu0 %3454
      %3456 = vrot.lane.b32.xlu0 %v3332, 8
      %v3457 = vpop.permute.xlu0 %3456
      %3458 = vrot.lane.b32.xlu0 %v3337, 8
      %v3459 = vpop.permute.xlu0 %3458
      %3460 = vrot.lane.b32.xlu0 %v3342, 8
      %v3461 = vpop.permute.xlu0 %3460
      %3462 = vrot.lane.b32.xlu0 %v3347, 8
      %v3463 = vpop.permute.xlu0 %3462
      %3464 = vrot.lane.b32.xlu0 %v3352, 8
      %v3465 = vpop.permute.xlu0 %3464
      %3466 = vrot.lane.b32.xlu0 %v3357, 8
      %v3467 = vpop.permute.xlu0 %3466
      %3468 = vrot.lane.b32.xlu0 %v3362, 8
      %v3469 = vpop.permute.xlu0 %3468
      %3470 = vrot.lane.b32.xlu0 %v3367, 8
      %v3471 = vpop.permute.xlu0 %3470
      %3472 = vrot.lane.b32.xlu0 %v3372, 8
      %v3473 = vpop.permute.xlu0 %3472
      %3474 = vrot.lane.b32.xlu0 %v3377, 8
      %v3475 = vpop.permute.xlu0 %3474
      %v3508 = vadd.f32 %v3112, %v3413
      %v3509 = vadd.f32 %v3113, %v3415
      %v3510 = vadd.f32 %v3114, %v3417
      %v3511 = vadd.f32 %v3115, %v3419
      %v3512 = vadd.f32 %v3116, %v3421
      %v3513 = vadd.f32 %v3117, %v3423
      %v3514 = vadd.f32 %v3118, %v3425
      %v3515 = vadd.f32 %v3119, %v3427
      %v3516 = vadd.f32 %v3120, %v3429
      %v3517 = vadd.f32 %v3121, %v3431
      %v3518 = vadd.f32 %v3122, %v3433
      %v3519 = vadd.f32 %v3123, %v3435
      %v3520 = vadd.f32 %v3124, %v3437
      %v3521 = vadd.f32 %v3125, %v3439
      %v3522 = vadd.f32 %v3126, %v3441
      %v3523 = vadd.f32 %v3127, %v3443
      %v3524 = vadd.f32 %v3128, %v3445
      %v3525 = vadd.f32 %v3129, %v3447
      %v3526 = vadd.f32 %v3130, %v3449
      %v3527 = vadd.f32 %v3131, %v3451
      %v3528 = vadd.f32 %v3132, %v3453
      %v3529 = vadd.f32 %v3133, %v3455
      %v3530 = vadd.f32 %v3134, %v3457
      %v3531 = vadd.f32 %v3135, %v3459
      %v3532 = vadd.f32 %v3136, %v3461
      %v3533 = vadd.f32 %v3137, %v3463
      %v3534 = vadd.f32 %v3138, %v3465
      %v3535 = vadd.f32 %v3139, %v3467
      %v3536 = vadd.f32 %v3140, %v3469
      %v3537 = vadd.f32 %v3141, %v3471
      %v3538 = vadd.f32 %v3142, %v3473
      %v3539 = vadd.f32 %v3143, %v3475
      %s3540 = scalar_lea.vmem %s3, 48
      %v3541 = vld [vmem:[%s3540] sm:$0xff]
      %v3543 = vsel %vm659, %v789, 0
      %v3546 = vsel %vm659, %v790, 0
      %3548 = vmatprep.subr.mxu0 0.0
      %3549 = vmatpush1.msra.mxu0 %v3541
      %3550 = vmatprep.subr.mxu0 0.0
      %3551 = vmatpush1.msra.mxu0 0.0
      %3552 = vmatprep.subr.mxu0 0.0
      %3553 = vmatpush1.msra.mxu0 0.0
      %3554 = vmatprep.subr.mxu0 0.0
      %3555 = vmatpush1.msra.mxu0 0.0
      %3556 = vmatprep.subr.mxu0 0.0
      %3557 = vmatpush1.msra.mxu0 0.0
      %3558 = vmatprep.subr.mxu0 0.0
      %3559 = vmatpush1.msra.mxu0 0.0
      %3560 = vmatprep.subr.mxu0 0.0
      %3561 = vmatpush1.msra.mxu0 0.0
      %3562 = vmatprep.subr.mxu0 0.0
      %3563 = vmatpush1.msra.mxu0 0.0
      %3564 = vmatprep.subr.mxu0 0.0
      %3565 = vmatpush1.msra.mxu0 0.0
      %3566 = vmatprep.subr.mxu0 0.0
      %3567 = vmatpush1.msra.mxu0 0.0
      %3568 = vmatprep.subr.mxu0 0.0
      %3569 = vmatpush1.msra.mxu0 0.0
      %3570 = vmatprep.subr.mxu0 0.0
      %3571 = vmatpush1.msra.mxu0 0.0
      %3572 = vmatprep.subr.mxu0 0.0
      %3573 = vmatpush1.msra.mxu0 0.0
      %3574 = vmatprep.subr.mxu0 0.0
      %3575 = vmatpush1.msra.mxu0 0.0
      %3576 = vmatprep.subr.mxu0 0.0
      %3577 = vmatpush1.msra.mxu0 0.0
      %3578 = vmatprep.subr.mxu0 0.0
      %3579 = vmatpush1.msra.mxu0 0.0
      %3580 = vmatprep.subr.mxu0 0.0
      %3581 = vmatpush1.msra.mxu0 0.0
      %3582 = vmatprep.subr.mxu0 0.0
      %3583 = vmatpush1.msra.mxu0 0.0
      %3584 = vmatprep.subr.mxu0 0.0
      %3585 = vmatpush1.msra.mxu0 0.0
      %3586 = vmatprep.subr.mxu0 0.0
      %3587 = vmatpush1.msra.mxu0 0.0
      %3588 = vmatprep.subr.mxu0 0.0
      %3589 = vmatpush1.msra.mxu0 0.0
      %3590 = vmatprep.subr.mxu0 0.0
      %3591 = vmatpush1.msra.mxu0 0.0
      %3592 = vmatprep.subr.mxu0 0.0
      %3593 = vmatpush1.msra.mxu0 0.0
      %3594 = vmatprep.subr.mxu0 0.0
      %3595 = vmatpush1.msra.mxu0 0.0
      %3596 = vmatprep.subr.mxu0 0.0
      %3597 = vmatpush1.msra.mxu0 0.0
      %3598 = vmatprep.subr.mxu0 0.0
      %3599 = vmatpush1.msra.mxu0 0.0
      %3600 = vmatprep.subr.mxu0 0.0
      %3601 = vmatpush1.msra.mxu0 0.0
      %3602 = vmatprep.subr.mxu0 0.0
      %3603 = vmatpush1.msra.mxu0 0.0
      %3604 = vmatprep.subr.mxu0 0.0
      %3605 = vmatpush1.msra.mxu0 0.0
      %3606 = vmatprep.subr.mxu0 0.0
      %3607 = vmatpush1.msra.mxu0 0.0
      %3608 = vmatprep.subr.mxu0 0.0
      %3609 = vmatpush1.msra.mxu0 0.0
      %3610 = vmatprep.subr.mxu0 0.0
      %3611 = vmatpush1.msra.mxu0 0.0
      %3612 = vmatprep.mubr.f32.mxu0 0.0
      %3613 = vmatmul.mubr.f32.gmra.mrb[0].mxu0 %v806
      %v3614 = vpop.f32.mrb[0].mxu0
      %v3615 = vadd.f32 0.0, %v3614
      %v3616 = vpop.f32.mrb[0].mxu0
      %3617 = vmatprep.mubr.f32.mxu0 0.0
      %3618 = vmatmul.mubr.f32.gmra.mrb[0].mxu0 %v809
      %v3619 = vpop.f32.mrb[0].mxu0
      %v3620 = vadd.f32 0.0, %v3619
      %v3621 = vpop.f32.mrb[0].mxu0
      %3622 = vmatprep.mubr.f32.mxu0 0.0
      %3623 = vmatmul.mubr.f32.gmra.mrb[0].mxu0 %v812
      %v3624 = vpop.f32.mrb[0].mxu0
      %v3625 = vadd.f32 0.0, %v3624
      %v3626 = vpop.f32.mrb[0].mxu0
      %3627 = vmatprep.mubr.f32.mxu0 0.0
      %3628 = vmatmul.mubr.f32.gmra.mrb[0].mxu0 %v815
      %v3629 = vpop.f32.mrb[0].mxu0
      %v3630 = vadd.f32 0.0, %v3629
      %v3631 = vpop.f32.mrb[0].mxu0
      %3632 = vmatprep.mubr.f32.mxu0 0.0
      %3633 = vmatmul.mubr.f32.gmra.mrb[0].mxu0 %v818
      %v3634 = vpop.f32.mrb[0].mxu0
      %v3635 = vadd.f32 0.0, %v3634
      %v3636 = vpop.f32.mrb[0].mxu0
      %3637 = vmatprep.mubr.f32.mxu0 0.0
      %3638 = vmatmul.mubr.f32.gmra.mrb[0].mxu0 %v821
      %v3639 = vpop.f32.mrb[0].mxu0
      %v3640 = vadd.f32 0.0, %v3639
      %v3641 = vpop.f32.mrb[0].mxu0
      %3642 = vmatprep.mubr.f32.mxu0 0.0
      %3643 = vmatmul.mubr.f32.gmra.mrb[0].mxu0 %v824
      %v3644 = vpop.f32.mrb[0].mxu0
      %v3645 = vadd.f32 0.0, %v3644
      %v3646 = vpop.f32.mrb[0].mxu0
      %3647 = vmatprep.mubr.f32.mxu0 0.0
      %3648 = vmatmul.mubr.f32.gmra.mrb[0].mxu0 %v827
      %v3649 = vpop.f32.mrb[0].mxu0
      %v3650 = vadd.f32 0.0, %v3649
      %v3651 = vpop.f32.mrb[0].mxu0
      %3652 = vmatprep.mubr.f32.mxu0 0.0
      %3653 = vmatmul.mubr.f32.gmra.mrb[0].mxu0 %v830
      %v3654 = vpop.f32.mrb[0].mxu0
      %v3655 = vadd.f32 0.0, %v3654
      %v3656 = vpop.f32.mrb[0].mxu0
      %3657 = vmatprep.mubr.f32.mxu0 0.0
      %3658 = vmatmul.mubr.f32.gmra.mrb[0].mxu0 %v833
      %v3659 = vpop.f32.mrb[0].mxu0
      %v3660 = vadd.f32 0.0, %v3659
      %v3661 = vpop.f32.mrb[0].mxu0
      %3662 = vmatprep.mubr.f32.mxu0 0.0
      %3663 = vmatmul.mubr.f32.gmra.mrb[0].mxu0 %v836
      %v3664 = vpop.f32.mrb[0].mxu0
      %v3665 = vadd.f32 0.0, %v3664
      %v3666 = vpop.f32.mrb[0].mxu0
      %3667 = vmatprep.mubr.f32.mxu0 0.0
      %3668 = vmatmul.mubr.f32.gmra.mrb[0].mxu0 %v839
      %v3669 = vpop.f32.mrb[0].mxu0
      %v3670 = vadd.f32 0.0, %v3669
      %v3671 = vpop.f32.mrb[0].mxu0
      %3672 = vmatprep.mubr.f32.mxu0 0.0
      %3673 = vmatmul.mubr.f32.gmra.mrb[0].mxu0 %v842
      %v3674 = vpop.f32.mrb[0].mxu0
      %v3675 = vadd.f32 0.0, %v3674
      %v3676 = vpop.f32.mrb[0].mxu0
      %3677 = vmatprep.mubr.f32.mxu0 0.0
      %3678 = vmatmul.mubr.f32.gmra.mrb[0].mxu0 %v845
      %v3679 = vpop.f32.mrb[0].mxu0
      %v3680 = vadd.f32 0.0, %v3679
      %v3681 = vpop.f32.mrb[0].mxu0
      %3682 = vmatprep.mubr.f32.mxu0 0.0
      %3683 = vmatmul.mubr.f32.gmra.mrb[0].mxu0 %v848
      %v3684 = vpop.f32.mrb[0].mxu0
      %v3685 = vadd.f32 0.0, %v3684
      %v3686 = vpop.f32.mrb[0].mxu0
      %3687 = vmatprep.mubr.f32.mxu0 0.0
      %3688 = vmatmul.mubr.f32.gmra.mrb[0].mxu0 %v851
      %v3689 = vpop.f32.mrb[0].mxu0
      %v3690 = vadd.f32 0.0, %v3689
      %v3691 = vpop.f32.mrb[0].mxu0
      %3692 = vmatprep.mubr.f32.mxu0 0.0
      %3693 = vmatmul.mubr.f32.gmra.mrb[0].mxu0 %v854
      %v3694 = vpop.f32.mrb[0].mxu0
      %v3695 = vadd.f32 0.0, %v3694
      %v3696 = vpop.f32.mrb[0].mxu0
      %3697 = vmatprep.mubr.f32.mxu0 0.0
      %3698 = vmatmul.mubr.f32.gmra.mrb[0].mxu0 %v857
      %v3699 = vpop.f32.mrb[0].mxu0
      %v3700 = vadd.f32 0.0, %v3699
      %v3701 = vpop.f32.mrb[0].mxu0
      %3702 = vmatprep.mubr.f32.mxu0 0.0
      %3703 = vmatmul.mubr.f32.gmra.mrb[0].mxu0 %v860
      %v3704 = vpop.f32.mrb[0].mxu0
      %v3705 = vadd.f32 0.0, %v3704
      %v3706 = vpop.f32.mrb[0].mxu0
      %3707 = vmatprep.mubr.f32.mxu0 0.0
      %3708 = vmatmul.mubr.f32.gmra.mrb[0].mxu0 %v863
      %v3709 = vpop.f32.mrb[0].mxu0
      %v3710 = vadd.f32 0.0, %v3709
      %v3711 = vpop.f32.mrb[0].mxu0
      %3712 = vmatprep.mubr.f32.mxu0 0.0
      %3713 = vmatmul.mubr.f32.gmra.mrb[0].mxu0 %v866
      %v3714 = vpop.f32.mrb[0].mxu0
      %v3715 = vadd.f32 0.0, %v3714
      %v3716 = vpop.f32.mrb[0].mxu0
      %3717 = vmatprep.mubr.f32.mxu0 0.0
      %3718 = vmatmul.mubr.f32.gmra.mrb[0].mxu0 %v869
      %v3719 = vpop.f32.mrb[0].mxu0
      %v3720 = vadd.f32 0.0, %v3719
      %v3721 = vpop.f32.mrb[0].mxu0
      %3722 = vmatprep.mubr.f32.mxu0 0.0
      %3723 = vmatmul.mubr.f32.gmra.mrb[0].mxu0 %v872
      %v3724 = vpop.f32.mrb[0].mxu0
      %v3725 = vadd.f32 0.0, %v3724
      %v3726 = vpop.f32.mrb[0].mxu0
      %3727 = vmatprep.mubr.f32.mxu0 0.0
      %3728 = vmatmul.mubr.f32.gmra.mrb[0].mxu0 %v875
      %v3729 = vpop.f32.mrb[0].mxu0
      %v3730 = vadd.f32 0.0, %v3729
      %v3731 = vpop.f32.mrb[0].mxu0
      %3732 = vmatprep.mubr.f32.mxu0 0.0
      %3733 = vmatmul.mubr.f32.gmra.mrb[0].mxu0 %v878
      %v3734 = vpop.f32.mrb[0].mxu0
      %v3735 = vadd.f32 0.0, %v3734
      %v3736 = vpop.f32.mrb[0].mxu0
      %3737 = vmatprep.mubr.f32.mxu0 0.0
      %3738 = vmatmul.mubr.f32.gmra.mrb[0].mxu0 %v881
      %v3739 = vpop.f32.mrb[0].mxu0
      %v3740 = vadd.f32 0.0, %v3739
      %v3741 = vpop.f32.mrb[0].mxu0
      %3742 = vmatprep.mubr.f32.mxu0 0.0
      %3743 = vmatmul.mubr.f32.gmra.mrb[0].mxu0 %v884
      %v3744 = vpop.f32.mrb[0].mxu0
      %v3745 = vadd.f32 0.0, %v3744
      %v3746 = vpop.f32.mrb[0].mxu0
      %3747 = vmatprep.mubr.f32.mxu0 0.0
      %3748 = vmatmul.mubr.f32.gmra.mrb[0].mxu0 %v887
      %v3749 = vpop.f32.mrb[0].mxu0
      %v3750 = vadd.f32 0.0, %v3749
      %v3751 = vpop.f32.mrb[0].mxu0
      %3752 = vmatprep.mubr.f32.mxu0 0.0
      %3753 = vmatmul.mubr.f32.gmra.mrb[0].mxu0 %v2357
      %v3754 = vpop.f32.mrb[0].mxu0
      %v3755 = vadd.f32 0.0, %v3754
      %v3756 = vpop.f32.mrb[0].mxu0
      %3757 = vmatprep.mubr.f32.mxu0 0.0
      %3758 = vmatmul.mubr.f32.gmra.mrb[0].mxu0 %v2360
      %v3759 = vpop.f32.mrb[0].mxu0
      %v3760 = vadd.f32 0.0, %v3759
      %v3761 = vpop.f32.mrb[0].mxu0
      %3762 = vmatprep.mubr.f32.mxu0 0.0
      %3763 = vmatmul.mubr.f32.gmra.mrb[0].mxu0 %v3543
      %v3764 = vpop.f32.mrb[0].mxu0
      %v3765 = vadd.f32 0.0, %v3764
      %v3766 = vpop.f32.mrb[0].mxu0
      %3767 = vmatprep.mubr.f32.mxu0 0.0
      %3768 = vmatmul.mubr.f32.gmra.mrb[0].mxu0 %v3546
      %v3769 = vpop.f32.mrb[0].mxu0
      %v3770 = vadd.f32 0.0, %v3769
      %v3771 = vpop.f32.mrb[0].mxu0
      %3772 = vdwg.mxu0
      %3805 = vrot.lane.b32.xlu0 %v3615, 8
      %v3806 = vpop.permute.xlu0 %3805
      %3807 = vrot.lane.b32.xlu0 %v3620, 8
      %v3808 = vpop.permute.xlu0 %3807
      %3809 = vrot.lane.b32.xlu0 %v3625, 8
      %v3810 = vpop.permute.xlu0 %3809
      %3811 = vrot.lane.b32.xlu0 %v3630, 8
      %v3812 = vpop.permute.xlu0 %3811
      %3813 = vrot.lane.b32.xlu0 %v3635, 8
      %v3814 = vpop.permute.xlu0 %3813
      %3815 = vrot.lane.b32.xlu0 %v3640, 8
      %v3816 = vpop.permute.xlu0 %3815
      %3817 = vrot.lane.b32.xlu0 %v3645, 8
      %v3818 = vpop.permute.xlu0 %3817
      %3819 = vrot.lane.b32.xlu0 %v3650, 8
      %v3820 = vpop.permute.xlu0 %3819
      %3821 = vrot.lane.b32.xlu0 %v3655, 8
      %v3822 = vpop.permute.xlu0 %3821
      %3823 = vrot.lane.b32.xlu0 %v3660, 8
      %v3824 = vpop.permute.xlu0 %3823
      %3825 = vrot.lane.b32.xlu0 %v3665, 8
      %v3826 = vpop.permute.xlu0 %3825
      %3827 = vrot.lane.b32.xlu0 %v3670, 8
      %v3828 = vpop.permute.xlu0 %3827
      %3829 = vrot.lane.b32.xlu0 %v3675, 8
      %v3830 = vpop.permute.xlu0 %3829
      %3831 = vrot.lane.b32.xlu0 %v3680, 8
      %v3832 = vpop.permute.xlu0 %3831
      %3833 = vrot.lane.b32.xlu0 %v3685, 8
      %v3834 = vpop.permute.xlu0 %3833
      %3835 = vrot.lane.b32.xlu0 %v3690, 8
      %v3836 = vpop.permute.xlu0 %3835
      %3837 = vrot.lane.b32.xlu0 %v3695, 8
      %v3838 = vpop.permute.xlu0 %3837
      %3839 = vrot.lane.b32.xlu0 %v3700, 8
      %v3840 = vpop.permute.xlu0 %3839
      %3841 = vrot.lane.b32.xlu0 %v3705, 8
      %v3842 = vpop.permute.xlu0 %3841
      %3843 = vrot.lane.b32.xlu0 %v3710, 8
      %v3844 = vpop.permute.xlu0 %3843
      %3845 = vrot.lane.b32.xlu0 %v3715, 8
      %v3846 = vpop.permute.xlu0 %3845
      %3847 = vrot.lane.b32.xlu0 %v3720, 8
      %v3848 = vpop.permute.xlu0 %3847
      %3849 = vrot.lane.b32.xlu0 %v3725, 8
      %v3850 = vpop.permute.xlu0 %3849
      %3851 = vrot.lane.b32.xlu0 %v3730, 8
      %v3852 = vpop.permute.xlu0 %3851
      %3853 = vrot.lane.b32.xlu0 %v3735, 8
      %v3854 = vpop.permute.xlu0 %3853
      %3855 = vrot.lane.b32.xlu0 %v3740, 8
      %v3856 = vpop.permute.xlu0 %3855
      %3857 = vrot.lane.b32.xlu0 %v3745, 8
      %v3858 = vpop.permute.xlu0 %3857
      %3859 = vrot.lane.b32.xlu0 %v3750, 8
      %v3860 = vpop.permute.xlu0 %3859
      %3861 = vrot.lane.b32.xlu0 %v3755, 8
      %v3862 = vpop.permute.xlu0 %3861
      %3863 = vrot.lane.b32.xlu0 %v3760, 8
      %v3864 = vpop.permute.xlu0 %3863
      %3865 = vrot.lane.b32.xlu0 %v3765, 8
      %v3866 = vpop.permute.xlu0 %3865
      %3867 = vrot.lane.b32.xlu0 %v3770, 8
      %v3868 = vpop.permute.xlu0 %3867
      %v3901 = vadd.f32 %v3508, %v3806
      %v3902 = vadd.f32 %v3509, %v3808
      %v3903 = vadd.f32 %v3510, %v3810
      %v3904 = vadd.f32 %v3511, %v3812
      %v3905 = vadd.f32 %v3512, %v3814
      %v3906 = vadd.f32 %v3513, %v3816
      %v3907 = vadd.f32 %v3514, %v3818
      %v3908 = vadd.f32 %v3515, %v3820
      %v3909 = vadd.f32 %v3516, %v3822
      %v3910 = vadd.f32 %v3517, %v3824
      %v3911 = vadd.f32 %v3518, %v3826
      %v3912 = vadd.f32 %v3519, %v3828
      %v3913 = vadd.f32 %v3520, %v3830
      %v3914 = vadd.f32 %v3521, %v3832
      %v3915 = vadd.f32 %v3522, %v3834
      %v3916 = vadd.f32 %v3523, %v3836
      %v3917 = vadd.f32 %v3524, %v3838
      %v3918 = vadd.f32 %v3525, %v3840
      %v3919 = vadd.f32 %v3526, %v3842
      %v3920 = vadd.f32 %v3527, %v3844
      %v3921 = vadd.f32 %v3528, %v3846
      %v3922 = vadd.f32 %v3529, %v3848
      %v3923 = vadd.f32 %v3530, %v3850
      %v3924 = vadd.f32 %v3531, %v3852
      %v3925 = vadd.f32 %v3532, %v3854
      %v3926 = vadd.f32 %v3533, %v3856
      %v3927 = vadd.f32 %v3534, %v3858
      %v3928 = vadd.f32 %v3535, %v3860
      %v3929 = vadd.f32 %v3536, %v3862
      %v3930 = vadd.f32 %v3537, %v3864
      %v3931 = vadd.f32 %v3538, %v3866
      %v3932 = vadd.f32 %v3539, %v3868
      %v3934 = vrot.slane %v789, 1
      %v3935 = vrot.slane %v790, 1
      %v3936 = vsel %vm1290, %v3934, %v3935
      %v3937 = vrot.slane %v791, 1
      %v3938 = vsel %vm1290, %v3935, %v3937
      %s3939 = scalar_lea.vmem %s3, 56
      %v3940 = vld [vmem:[%s3939] sm:$0xff]
      %v3941 = vsel %vm659, %v3936, 0
      %v3943 = vsel %vm659, %v3938, 0
      %3945 = vmatprep.subr.mxu0 0.0
      %3946 = vmatpush1.msra.mxu0 %v3940
      %3947 = vmatprep.subr.mxu0 0.0
      %3948 = vmatpush1.msra.mxu0 0.0
      %3949 = vmatprep.subr.mxu0 0.0
      %3950 = vmatpush1.msra.mxu0 0.0
      %3951 = vmatprep.subr.mxu0 0.0
      %3952 = vmatpush1.msra.mxu0 0.0
      %3953 = vmatprep.subr.mxu0 0.0
      %3954 = vmatpush1.msra.mxu0 0.0
      %3955 = vmatprep.subr.mxu0 0.0
      %3956 = vmatpush1.msra.mxu0 0.0
      %3957 = vmatprep.subr.mxu0 0.0
      %3958 = vmatpush1.msra.mxu0 0.0
      %3959 = vmatprep.subr.mxu0 0.0
      %3960 = vmatpush1.msra.mxu0 0.0
      %3961 = vmatprep.subr.mxu0 0.0
      %3962 = vmatpush1.msra.mxu0 0.0
      %3963 = vmatprep.subr.mxu0 0.0
      %3964 = vmatpush1.msra.mxu0 0.0
      %3965 = vmatprep.subr.mxu0 0.0
      %3966 = vmatpush1.msra.mxu0 0.0
      %3967 = vmatprep.subr.mxu0 0.0
      %3968 = vmatpush1.msra.mxu0 0.0
      %3969 = vmatprep.subr.mxu0 0.0
      %3970 = vmatpush1.msra.mxu0 0.0
      %3971 = vmatprep.subr.mxu0 0.0
      %3972 = vmatpush1.msra.mxu0 0.0
      %3973 = vmatprep.subr.mxu0 0.0
      %3974 = vmatpush1.msra.mxu0 0.0
      %3975 = vmatprep.subr.mxu0 0.0
      %3976 = vmatpush1.msra.mxu0 0.0
      %3977 = vmatprep.subr.mxu0 0.0
      %3978 = vmatpush1.msra.mxu0 0.0
      %3979 = vmatprep.subr.mxu0 0.0
      %3980 = vmatpush1.msra.mxu0 0.0
      %3981 = vmatprep.subr.mxu0 0.0
      %3982 = vmatpush1.msra.mxu0 0.0
      %3983 = vmatprep.subr.mxu0 0.0
      %3984 = vmatpush1.msra.mxu0 0.0
      %3985 = vmatprep.subr.mxu0 0.0
      %3986 = vmatpush1.msra.mxu0 0.0
      %3987 = vmatprep.subr.mxu0 0.0
      %3988 = vmatpush1.msra.mxu0 0.0
      %3989 = vmatprep.subr.mxu0 0.0
      %3990 = vmatpush1.msra.mxu0 0.0
      %3991 = vmatprep.subr.mxu0 0.0
      %3992 = vmatpush1.msra.mxu0 0.0
      %3993 = vmatprep.subr.mxu0 0.0
      %3994 = vmatpush1.msra.mxu0 0.0
      %3995 = vmatprep.subr.mxu0 0.0
      %3996 = vmatpush1.msra.mxu0 0.0
      %3997 = vmatprep.subr.mxu0 0.0
      %3998 = vmatpush1.msra.mxu0 0.0
      %3999 = vmatprep.subr.mxu0 0.0
      %4000 = vmatpush1.msra.mxu0 0.0
      %4001 = vmatprep.subr.mxu0 0.0
      %4002 = vmatpush1.msra.mxu0 0.0
      %4003 = vmatprep.subr.mxu0 0.0
      %4004 = vmatpush1.msra.mxu0 0.0
      %4005 = vmatprep.subr.mxu0 0.0
      %4006 = vmatpush1.msra.mxu0 0.0
      %4007 = vmatprep.subr.mxu0 0.0
      %4008 = vmatpush1.msra.mxu0 0.0
      %4009 = vmatprep.mubr.f32.mxu0 0.0
      %4010 = vmatmul.mubr.f32.gmra.mrb[0].mxu0 %v1381
      %v4011 = vpop.f32.mrb[0].mxu0
      %v4012 = vadd.f32 0.0, %v4011
      %v4013 = vpop.f32.mrb[0].mxu0
      %4014 = vmatprep.mubr.f32.mxu0 0.0
      %4015 = vmatmul.mubr.f32.gmra.mrb[0].mxu0 %v1383
      %v4016 = vpop.f32.mrb[0].mxu0
      %v4017 = vadd.f32 0.0, %v4016
      %v4018 = vpop.f32.mrb[0].mxu0
      %4019 = vmatprep.mubr.f32.mxu0 0.0
      %4020 = vmatmul.mubr.f32.gmra.mrb[0].mxu0 %v1385
      %v4021 = vpop.f32.mrb[0].mxu0
      %v4022 = vadd.f32 0.0, %v4021
      %v4023 = vpop.f32.mrb[0].mxu0
      %4024 = vmatprep.mubr.f32.mxu0 0.0
      %4025 = vmatmul.mubr.f32.gmra.mrb[0].mxu0 %v1387
      %v4026 = vpop.f32.mrb[0].mxu0
      %v4027 = vadd.f32 0.0, %v4026
      %v4028 = vpop.f32.mrb[0].mxu0
      %4029 = vmatprep.mubr.f32.mxu0 0.0
      %4030 = vmatmul.mubr.f32.gmra.mrb[0].mxu0 %v1389
      %v4031 = vpop.f32.mrb[0].mxu0
      %v4032 = vadd.f32 0.0, %v4031
      %v4033 = vpop.f32.mrb[0].mxu0
      %4034 = vmatprep.mubr.f32.mxu0 0.0
      %4035 = vmatmul.mubr.f32.gmra.mrb[0].mxu0 %v1391
      %v4036 = vpop.f32.mrb[0].mxu0
      %v4037 = vadd.f32 0.0, %v4036
      %v4038 = vpop.f32.mrb[0].mxu0
      %4039 = vmatprep.mubr.f32.mxu0 0.0
      %4040 = vmatmul.mubr.f32.gmra.mrb[0].mxu0 %v1393
      %v4041 = vpop.f32.mrb[0].mxu0
      %v4042 = vadd.f32 0.0, %v4041
      %v4043 = vpop.f32.mrb[0].mxu0
      %4044 = vmatprep.mubr.f32.mxu0 0.0
      %4045 = vmatmul.mubr.f32.gmra.mrb[0].mxu0 %v1395
      %v4046 = vpop.f32.mrb[0].mxu0
      %v4047 = vadd.f32 0.0, %v4046
      %v4048 = vpop.f32.mrb[0].mxu0
      %4049 = vmatprep.mubr.f32.mxu0 0.0
      %4050 = vmatmul.mubr.f32.gmra.mrb[0].mxu0 %v1397
      %v4051 = vpop.f32.mrb[0].mxu0
      %v4052 = vadd.f32 0.0, %v4051
      %v4053 = vpop.f32.mrb[0].mxu0
      %4054 = vmatprep.mubr.f32.mxu0 0.0
      %4055 = vmatmul.mubr.f32.gmra.mrb[0].mxu0 %v1399
      %v4056 = vpop.f32.mrb[0].mxu0
      %v4057 = vadd.f32 0.0, %v4056
      %v4058 = vpop.f32.mrb[0].mxu0
      %4059 = vmatprep.mubr.f32.mxu0 0.0
      %4060 = vmatmul.mubr.f32.gmra.mrb[0].mxu0 %v1401
      %v4061 = vpop.f32.mrb[0].mxu0
      %v4062 = vadd.f32 0.0, %v4061
      %v4063 = vpop.f32.mrb[0].mxu0
      %4064 = vmatprep.mubr.f32.mxu0 0.0
      %4065 = vmatmul.mubr.f32.gmra.mrb[0].mxu0 %v1403
      %v4066 = vpop.f32.mrb[0].mxu0
      %v4067 = vadd.f32 0.0, %v4066
      %v4068 = vpop.f32.mrb[0].mxu0
      %4069 = vmatprep.mubr.f32.mxu0 0.0
      %4070 = vmatmul.mubr.f32.gmra.mrb[0].mxu0 %v1405
      %v4071 = vpop.f32.mrb[0].mxu0
      %v4072 = vadd.f32 0.0, %v4071
      %v4073 = vpop.f32.mrb[0].mxu0
      %4074 = vmatprep.mubr.f32.mxu0 0.0
      %4075 = vmatmul.mubr.f32.gmra.mrb[0].mxu0 %v1407
      %v4076 = vpop.f32.mrb[0].mxu0
      %v4077 = vadd.f32 0.0, %v4076
      %v4078 = vpop.f32.mrb[0].mxu0
      %4079 = vmatprep.mubr.f32.mxu0 0.0
      %4080 = vmatmul.mubr.f32.gmra.mrb[0].mxu0 %v1409
      %v4081 = vpop.f32.mrb[0].mxu0
      %v4082 = vadd.f32 0.0, %v4081
      %v4083 = vpop.f32.mrb[0].mxu0
      %4084 = vmatprep.mubr.f32.mxu0 0.0
      %4085 = vmatmul.mubr.f32.gmra.mrb[0].mxu0 %v1411
      %v4086 = vpop.f32.mrb[0].mxu0
      %v4087 = vadd.f32 0.0, %v4086
      %v4088 = vpop.f32.mrb[0].mxu0
      %4089 = vmatprep.mubr.f32.mxu0 0.0
      %4090 = vmatmul.mubr.f32.gmra.mrb[0].mxu0 %v1413
      %v4091 = vpop.f32.mrb[0].mxu0
      %v4092 = vadd.f32 0.0, %v4091
      %v4093 = vpop.f32.mrb[0].mxu0
      %4094 = vmatprep.mubr.f32.mxu0 0.0
      %4095 = vmatmul.mubr.f32.gmra.mrb[0].mxu0 %v1415
      %v4096 = vpop.f32.mrb[0].mxu0
      %v4097 = vadd.f32 0.0, %v4096
      %v4098 = vpop.f32.mrb[0].mxu0
      %4099 = vmatprep.mubr.f32.mxu0 0.0
      %4100 = vmatmul.mubr.f32.gmra.mrb[0].mxu0 %v1417
      %v4101 = vpop.f32.mrb[0].mxu0
      %v4102 = vadd.f32 0.0, %v4101
      %v4103 = vpop.f32.mrb[0].mxu0
      %4104 = vmatprep.mubr.f32.mxu0 0.0
      %4105 = vmatmul.mubr.f32.gmra.mrb[0].mxu0 %v1419
      %v4106 = vpop.f32.mrb[0].mxu0
      %v4107 = vadd.f32 0.0, %v4106
      %v4108 = vpop.f32.mrb[0].mxu0
      %4109 = vmatprep.mubr.f32.mxu0 0.0
      %4110 = vmatmul.mubr.f32.gmra.mrb[0].mxu0 %v1421
      %v4111 = vpop.f32.mrb[0].mxu0
      %v4112 = vadd.f32 0.0, %v4111
      %v4113 = vpop.f32.mrb[0].mxu0
      %4114 = vmatprep.mubr.f32.mxu0 0.0
      %4115 = vmatmul.mubr.f32.gmra.mrb[0].mxu0 %v1423
      %v4116 = vpop.f32.mrb[0].mxu0
      %v4117 = vadd.f32 0.0, %v4116
      %v4118 = vpop.f32.mrb[0].mxu0
      %4119 = vmatprep.mubr.f32.mxu0 0.0
      %4120 = vmatmul.mubr.f32.gmra.mrb[0].mxu0 %v1425
      %v4121 = vpop.f32.mrb[0].mxu0
      %v4122 = vadd.f32 0.0, %v4121
      %v4123 = vpop.f32.mrb[0].mxu0
      %4124 = vmatprep.mubr.f32.mxu0 0.0
      %4125 = vmatmul.mubr.f32.gmra.mrb[0].mxu0 %v1427
      %v4126 = vpop.f32.mrb[0].mxu0
      %v4127 = vadd.f32 0.0, %v4126
      %v4128 = vpop.f32.mrb[0].mxu0
      %4129 = vmatprep.mubr.f32.mxu0 0.0
      %4130 = vmatmul.mubr.f32.gmra.mrb[0].mxu0 %v1429
      %v4131 = vpop.f32.mrb[0].mxu0
      %v4132 = vadd.f32 0.0, %v4131
      %v4133 = vpop.f32.mrb[0].mxu0
      %4134 = vmatprep.mubr.f32.mxu0 0.0
      %4135 = vmatmul.mubr.f32.gmra.mrb[0].mxu0 %v1431
      %v4136 = vpop.f32.mrb[0].mxu0
      %v4137 = vadd.f32 0.0, %v4136
      %v4138 = vpop.f32.mrb[0].mxu0
      %4139 = vmatprep.mubr.f32.mxu0 0.0
      %4140 = vmatmul.mubr.f32.gmra.mrb[0].mxu0 %v1433
      %v4141 = vpop.f32.mrb[0].mxu0
      %v4142 = vadd.f32 0.0, %v4141
      %v4143 = vpop.f32.mrb[0].mxu0
      %4144 = vmatprep.mubr.f32.mxu0 0.0
      %4145 = vmatmul.mubr.f32.gmra.mrb[0].mxu0 %v1435
      %v4146 = vpop.f32.mrb[0].mxu0
      %v4147 = vadd.f32 0.0, %v4146
      %v4148 = vpop.f32.mrb[0].mxu0
      %4149 = vmatprep.mubr.f32.mxu0 0.0
      %4150 = vmatmul.mubr.f32.gmra.mrb[0].mxu0 %v2755
      %v4151 = vpop.f32.mrb[0].mxu0
      %v4152 = vadd.f32 0.0, %v4151
      %v4153 = vpop.f32.mrb[0].mxu0
      %4154 = vmatprep.mubr.f32.mxu0 0.0
      %4155 = vmatmul.mubr.f32.gmra.mrb[0].mxu0 %v2757
      %v4156 = vpop.f32.mrb[0].mxu0
      %v4157 = vadd.f32 0.0, %v4156
      %v4158 = vpop.f32.mrb[0].mxu0
      %4159 = vmatprep.mubr.f32.mxu0 0.0
      %4160 = vmatmul.mubr.f32.gmra.mrb[0].mxu0 %v3941
      %v4161 = vpop.f32.mrb[0].mxu0
      %v4162 = vadd.f32 0.0, %v4161
      %v4163 = vpop.f32.mrb[0].mxu0
      %4164 = vmatprep.mubr.f32.mxu0 0.0
      %4165 = vmatmul.mubr.f32.gmra.mrb[0].mxu0 %v3943
      %v4166 = vpop.f32.mrb[0].mxu0
      %v4167 = vadd.f32 0.0, %v4166
      %v4168 = vpop.f32.mrb[0].mxu0
      %4169 = vdwg.mxu0
      %4202 = vrot.lane.b32.xlu0 %v4012, 8
      %v4203 = vpop.permute.xlu0 %4202
      %4204 = vrot.lane.b32.xlu0 %v4017, 8
      %v4205 = vpop.permute.xlu0 %4204
      %4206 = vrot.lane.b32.xlu0 %v4022, 8
      %v4207 = vpop.permute.xlu0 %4206
      %4208 = vrot.lane.b32.xlu0 %v4027, 8
      %v4209 = vpop.permute.xlu0 %4208
      %4210 = vrot.lane.b32.xlu0 %v4032, 8
      %v4211 = vpop.permute.xlu0 %4210
      %4212 = vrot.lane.b32.xlu0 %v4037, 8
      %v4213 = vpop.permute.xlu0 %4212
      %4214 = vrot.lane.b32.xlu0 %v4042, 8
      %v4215 = vpop.permute.xlu0 %4214
      %4216 = vrot.lane.b32.xlu0 %v4047, 8
      %v4217 = vpop.permute.xlu0 %4216
      %4218 = vrot.lane.b32.xlu0 %v4052, 8
      %v4219 = vpop.permute.xlu0 %4218
      %4220 = vrot.lane.b32.xlu0 %v4057, 8
      %v4221 = vpop.permute.xlu0 %4220
      %4222 = vrot.lane.b32.xlu0 %v4062, 8
      %v4223 = vpop.permute.xlu0 %4222
      %4224 = vrot.lane.b32.xlu0 %v4067, 8
      %v4225 = vpop.permute.xlu0 %4224
      %4226 = vrot.lane.b32.xlu0 %v4072, 8
      %v4227 = vpop.permute.xlu0 %4226
      %4228 = vrot.lane.b32.xlu0 %v4077, 8
      %v4229 = vpop.permute.xlu0 %4228
      %4230 = vrot.lane.b32.xlu0 %v4082, 8
      %v4231 = vpop.permute.xlu0 %4230
      %4232 = vrot.lane.b32.xlu0 %v4087, 8
      %v4233 = vpop.permute.xlu0 %4232
      %4234 = vrot.lane.b32.xlu0 %v4092, 8
      %v4235 = vpop.permute.xlu0 %4234
      %4236 = vrot.lane.b32.xlu0 %v4097, 8
      %v4237 = vpop.permute.xlu0 %4236
      %4238 = vrot.lane.b32.xlu0 %v4102, 8
      %v4239 = vpop.permute.xlu0 %4238
      %4240 = vrot.lane.b32.xlu0 %v4107, 8
      %v4241 = vpop.permute.xlu0 %4240
      %4242 = vrot.lane.b32.xlu0 %v4112, 8
      %v4243 = vpop.permute.xlu0 %4242
      %4244 = vrot.lane.b32.xlu0 %v4117, 8
      %v4245 = vpop.permute.xlu0 %4244
      %4246 = vrot.lane.b32.xlu0 %v4122, 8
      %v4247 = vpop.permute.xlu0 %4246
      %4248 = vrot.lane.b32.xlu0 %v4127, 8
      %v4249 = vpop.permute.xlu0 %4248
      %4250 = vrot.lane.b32.xlu0 %v4132, 8
      %v4251 = vpop.permute.xlu0 %4250
      %4252 = vrot.lane.b32.xlu0 %v4137, 8
      %v4253 = vpop.permute.xlu0 %4252
      %4254 = vrot.lane.b32.xlu0 %v4142, 8
      %v4255 = vpop.permute.xlu0 %4254
      %4256 = vrot.lane.b32.xlu0 %v4147, 8
      %v4257 = vpop.permute.xlu0 %4256
      %4258 = vrot.lane.b32.xlu0 %v4152, 8
      %v4259 = vpop.permute.xlu0 %4258
      %4260 = vrot.lane.b32.xlu0 %v4157, 8
      %v4261 = vpop.permute.xlu0 %4260
      %4262 = vrot.lane.b32.xlu0 %v4162, 8
      %v4263 = vpop.permute.xlu0 %4262
      %4264 = vrot.lane.b32.xlu0 %v4167, 8
      %v4265 = vpop.permute.xlu0 %4264
      %v4298 = vadd.f32 %v3901, %v4203
      %v4299 = vadd.f32 %v3902, %v4205
      %v4300 = vadd.f32 %v3903, %v4207
      %v4301 = vadd.f32 %v3904, %v4209
      %v4302 = vadd.f32 %v3905, %v4211
      %v4303 = vadd.f32 %v3906, %v4213
      %v4304 = vadd.f32 %v3907, %v4215
      %v4305 = vadd.f32 %v3908, %v4217
      %v4306 = vadd.f32 %v3909, %v4219
      %v4307 = vadd.f32 %v3910, %v4221
      %v4308 = vadd.f32 %v3911, %v4223
      %v4309 = vadd.f32 %v3912, %v4225
      %v4310 = vadd.f32 %v3913, %v4227
      %v4311 = vadd.f32 %v3914, %v4229
      %v4312 = vadd.f32 %v3915, %v4231
      %v4313 = vadd.f32 %v3916, %v4233
      %v4314 = vadd.f32 %v3917, %v4235
      %v4315 = vadd.f32 %v3918, %v4237
      %v4316 = vadd.f32 %v3919, %v4239
      %v4317 = vadd.f32 %v3920, %v4241
      %v4318 = vadd.f32 %v3921, %v4243
      %v4319 = vadd.f32 %v3922, %v4245
      %v4320 = vadd.f32 %v3923, %v4247
      %v4321 = vadd.f32 %v3924, %v4249
      %v4322 = vadd.f32 %v3925, %v4251
      %v4323 = vadd.f32 %v3926, %v4253
      %v4324 = vadd.f32 %v3927, %v4255
      %v4325 = vadd.f32 %v3928, %v4257
      %v4326 = vadd.f32 %v3929, %v4259
      %v4327 = vadd.f32 %v3930, %v4261
      %v4328 = vadd.f32 %v3931, %v4263
      %v4329 = vadd.f32 %v3932, %v4265
      %v4330 = vrot.slane %v789, 2
      %v4331 = vrot.slane %v790, 2
      %v4332 = vsel %vm1822, %v4330, %v4331
      %v4333 = vrot.slane %v791, 2
      %v4334 = vsel %vm1822, %v4331, %v4333
      %s4335 = scalar_lea.vmem %s3, 64
      %v4336 = vld [vmem:[%s4335] sm:$0xff]
      %v4337 = vsel %vm659, %v4332, 0
      %v4339 = vsel %vm659, %v4334, 0
      %4341 = vmatprep.subr.mxu0 0.0
      %4342 = vmatpush1.msra.mxu0 %v4336
      %4343 = vmatprep.subr.mxu0 0.0
      %4344 = vmatpush1.msra.mxu0 0.0
      %4345 = vmatprep.subr.mxu0 0.0
      %4346 = vmatpush1.msra.mxu0 0.0
      %4347 = vmatprep.subr.mxu0 0.0
      %4348 = vmatpush1.msra.mxu0 0.0
      %4349 = vmatprep.subr.mxu0 0.0
      %4350 = vmatpush1.msra.mxu0 0.0
      %4351 = vmatprep.subr.mxu0 0.0
      %4352 = vmatpush1.msra.mxu0 0.0
      %4353 = vmatprep.subr.mxu0 0.0
      %4354 = vmatpush1.msra.mxu0 0.0
      %4355 = vmatprep.subr.mxu0 0.0
      %4356 = vmatpush1.msra.mxu0 0.0
      %4357 = vmatprep.subr.mxu0 0.0
      %4358 = vmatpush1.msra.mxu0 0.0
      %4359 = vmatprep.subr.mxu0 0.0
      %4360 = vmatpush1.msra.mxu0 0.0
      %4361 = vmatprep.subr.mxu0 0.0
      %4362 = vmatpush1.msra.mxu0 0.0
      %4363 = vmatprep.subr.mxu0 0.0
      %4364 = vmatpush1.msra.mxu0 0.0
      %4365 = vmatprep.subr.mxu0 0.0
      %4366 = vmatpush1.msra.mxu0 0.0
      %4367 = vmatprep.subr.mxu0 0.0
      %4368 = vmatpush1.msra.mxu0 0.0
      %4369 = vmatprep.subr.mxu0 0.0
      %4370 = vmatpush1.msra.mxu0 0.0
      %4371 = vmatprep.subr.mxu0 0.0
      %4372 = vmatpush1.msra.mxu0 0.0
      %4373 = vmatprep.subr.mxu0 0.0
      %4374 = vmatpush1.msra.mxu0 0.0
      %4375 = vmatprep.subr.mxu0 0.0
      %4376 = vmatpush1.msra.mxu0 0.0
      %4377 = vmatprep.subr.mxu0 0.0
      %4378 = vmatpush1.msra.mxu0 0.0
      %4379 = vmatprep.subr.mxu0 0.0
      %4380 = vmatpush1.msra.mxu0 0.0
      %4381 = vmatprep.subr.mxu0 0.0
      %4382 = vmatpush1.msra.mxu0 0.0
      %4383 = vmatprep.subr.mxu0 0.0
      %4384 = vmatpush1.msra.mxu0 0.0
      %4385 = vmatprep.subr.mxu0 0.0
      %4386 = vmatpush1.msra.mxu0 0.0
      %4387 = vmatprep.subr.mxu0 0.0
      %4388 = vmatpush1.msra.mxu0 0.0
      %4389 = vmatprep.subr.mxu0 0.0
      %4390 = vmatpush1.msra.mxu0 0.0
      %4391 = vmatprep.subr.mxu0 0.0
      %4392 = vmatpush1.msra.mxu0 0.0
      %4393 = vmatprep.subr.mxu0 0.0
      %4394 = vmatpush1.msra.mxu0 0.0
      %4395 = vmatprep.subr.mxu0 0.0
      %4396 = vmatpush1.msra.mxu0 0.0
      %4397 = vmatprep.subr.mxu0 0.0
      %4398 = vmatpush1.msra.mxu0 0.0
      %4399 = vmatprep.subr.mxu0 0.0
      %4400 = vmatpush1.msra.mxu0 0.0
      %4401 = vmatprep.subr.mxu0 0.0
      %4402 = vmatpush1.msra.mxu0 0.0
      %4403 = vmatprep.subr.mxu0 0.0
      %4404 = vmatpush1.msra.mxu0 0.0
      %4405 = vmatprep.mubr.f32.mxu0 0.0
      %4406 = vmatmul.mubr.f32.gmra.mrb[0].mxu0 %v1913
      %v4407 = vpop.f32.mrb[0].mxu0
      %v4408 = vadd.f32 0.0, %v4407
      %v4409 = vpop.f32.mrb[0].mxu0
      %4410 = vmatprep.mubr.f32.mxu0 0.0
      %4411 = vmatmul.mubr.f32.gmra.mrb[0].mxu0 %v1915
      %v4412 = vpop.f32.mrb[0].mxu0
      %v4413 = vadd.f32 0.0, %v4412
      %v4414 = vpop.f32.mrb[0].mxu0
      %4415 = vmatprep.mubr.f32.mxu0 0.0
      %4416 = vmatmul.mubr.f32.gmra.mrb[0].mxu0 %v1917
      %v4417 = vpop.f32.mrb[0].mxu0
      %v4418 = vadd.f32 0.0, %v4417
      %v4419 = vpop.f32.mrb[0].mxu0
      %4420 = vmatprep.mubr.f32.mxu0 0.0
      %4421 = vmatmul.mubr.f32.gmra.mrb[0].mxu0 %v1919
      %v4422 = vpop.f32.mrb[0].mxu0
      %v4423 = vadd.f32 0.0, %v4422
      %v4424 = vpop.f32.mrb[0].mxu0
      %4425 = vmatprep.mubr.f32.mxu0 0.0
      %4426 = vmatmul.mubr.f32.gmra.mrb[0].mxu0 %v1921
      %v4427 = vpop.f32.mrb[0].mxu0
      %v4428 = vadd.f32 0.0, %v4427
      %v4429 = vpop.f32.mrb[0].mxu0
      %4430 = vmatprep.mubr.f32.mxu0 0.0
      %4431 = vmatmul.mubr.f32.gmra.mrb[0].mxu0 %v1923
      %v4432 = vpop.f32.mrb[0].mxu0
      %v4433 = vadd.f32 0.0, %v4432
      %v4434 = vpop.f32.mrb[0].mxu0
      %4435 = vmatprep.mubr.f32.mxu0 0.0
      %4436 = vmatmul.mubr.f32.gmra.mrb[0].mxu0 %v1925
      %v4437 = vpop.f32.mrb[0].mxu0
      %v4438 = vadd.f32 0.0, %v4437
      %v4439 = vpop.f32.mrb[0].mxu0
      %4440 = vmatprep.mubr.f32.mxu0 0.0
      %4441 = vmatmul.mubr.f32.gmra.mrb[0].mxu0 %v1927
      %v4442 = vpop.f32.mrb[0].mxu0
      %v4443 = vadd.f32 0.0, %v4442
      %v4444 = vpop.f32.mrb[0].mxu0
      %4445 = vmatprep.mubr.f32.mxu0 0.0
      %4446 = vmatmul.mubr.f32.gmra.mrb[0].mxu0 %v1929
      %v4447 = vpop.f32.mrb[0].mxu0
      %v4448 = vadd.f32 0.0, %v4447
      %v4449 = vpop.f32.mrb[0].mxu0
      %4450 = vmatprep.mubr.f32.mxu0 0.0
      %4451 = vmatmul.mubr.f32.gmra.mrb[0].mxu0 %v1931
      %v4452 = vpop.f32.mrb[0].mxu0
      %v4453 = vadd.f32 0.0, %v4452
      %v4454 = vpop.f32.mrb[0].mxu0
      %4455 = vmatprep.mubr.f32.mxu0 0.0
      %4456 = vmatmul.mubr.f32.gmra.mrb[0].mxu0 %v1933
      %v4457 = vpop.f32.mrb[0].mxu0
      %v4458 = vadd.f32 0.0, %v4457
      %v4459 = vpop.f32.mrb[0].mxu0
      %4460 = vmatprep.mubr.f32.mxu0 0.0
      %4461 = vmatmul.mubr.f32.gmra.mrb[0].mxu0 %v1935
      %v4462 = vpop.f32.mrb[0].mxu0
      %v4463 = vadd.f32 0.0, %v4462
      %v4464 = vpop.f32.mrb[0].mxu0
      %4465 = vmatprep.mubr.f32.mxu0 0.0
      %4466 = vmatmul.mubr.f32.gmra.mrb[0].mxu0 %v1937
      %v4467 = vpop.f32.mrb[0].mxu0
      %v4468 = vadd.f32 0.0, %v4467
      %v4469 = vpop.f32.mrb[0].mxu0
      %4470 = vmatprep.mubr.f32.mxu0 0.0
      %4471 = vmatmul.mubr.f32.gmra.mrb[0].mxu0 %v1939
      %v4472 = vpop.f32.mrb[0].mxu0
      %v4473 = vadd.f32 0.0, %v4472
      %v4474 = vpop.f32.mrb[0].mxu0
      %4475 = vmatprep.mubr.f32.mxu0 0.0
      %4476 = vmatmul.mubr.f32.gmra.mrb[0].mxu0 %v1941
      %v4477 = vpop.f32.mrb[0].mxu0
      %v4478 = vadd.f32 0.0, %v4477
      %v4479 = vpop.f32.mrb[0].mxu0
      %4480 = vmatprep.mubr.f32.mxu0 0.0
      %4481 = vmatmul.mubr.f32.gmra.mrb[0].mxu0 %v1943
      %v4482 = vpop.f32.mrb[0].mxu0
      %v4483 = vadd.f32 0.0, %v4482
      %v4484 = vpop.f32.mrb[0].mxu0
      %4485 = vmatprep.mubr.f32.mxu0 0.0
      %4486 = vmatmul.mubr.f32.gmra.mrb[0].mxu0 %v1945
      %v4487 = vpop.f32.mrb[0].mxu0
      %v4488 = vadd.f32 0.0, %v4487
      %v4489 = vpop.f32.mrb[0].mxu0
      %4490 = vmatprep.mubr.f32.mxu0 0.0
      %4491 = vmatmul.mubr.f32.gmra.mrb[0].mxu0 %v1947
      %v4492 = vpop.f32.mrb[0].mxu0
      %v4493 = vadd.f32 0.0, %v4492
      %v4494 = vpop.f32.mrb[0].mxu0
      %4495 = vmatprep.mubr.f32.mxu0 0.0
      %4496 = vmatmul.mubr.f32.gmra.mrb[0].mxu0 %v1949
      %v4497 = vpop.f32.mrb[0].mxu0
      %v4498 = vadd.f32 0.0, %v4497
      %v4499 = vpop.f32.mrb[0].mxu0
      %4500 = vmatprep.mubr.f32.mxu0 0.0
      %4501 = vmatmul.mubr.f32.gmra.mrb[0].mxu0 %v1951
      %v4502 = vpop.f32.mrb[0].mxu0
      %v4503 = vadd.f32 0.0, %v4502
      %v4504 = vpop.f32.mrb[0].mxu0
      %4505 = vmatprep.mubr.f32.mxu0 0.0
      %4506 = vmatmul.mubr.f32.gmra.mrb[0].mxu0 %v1953
      %v4507 = vpop.f32.mrb[0].mxu0
      %v4508 = vadd.f32 0.0, %v4507
      %v4509 = vpop.f32.mrb[0].mxu0
      %4510 = vmatprep.mubr.f32.mxu0 0.0
      %4511 = vmatmul.mubr.f32.gmra.mrb[0].mxu0 %v1955
      %v4512 = vpop.f32.mrb[0].mxu0
      %v4513 = vadd.f32 0.0, %v4512
      %v4514 = vpop.f32.mrb[0].mxu0
      %4515 = vmatprep.mubr.f32.mxu0 0.0
      %4516 = vmatmul.mubr.f32.gmra.mrb[0].mxu0 %v1957
      %v4517 = vpop.f32.mrb[0].mxu0
      %v4518 = vadd.f32 0.0, %v4517
      %v4519 = vpop.f32.mrb[0].mxu0
      %4520 = vmatprep.mubr.f32.mxu0 0.0
      %4521 = vmatmul.mubr.f32.gmra.mrb[0].mxu0 %v1959
      %v4522 = vpop.f32.mrb[0].mxu0
      %v4523 = vadd.f32 0.0, %v4522
      %v4524 = vpop.f32.mrb[0].mxu0
      %4525 = vmatprep.mubr.f32.mxu0 0.0
      %4526 = vmatmul.mubr.f32.gmra.mrb[0].mxu0 %v1961
      %v4527 = vpop.f32.mrb[0].mxu0
      %v4528 = vadd.f32 0.0, %v4527
      %v4529 = vpop.f32.mrb[0].mxu0
      %4530 = vmatprep.mubr.f32.mxu0 0.0
      %4531 = vmatmul.mubr.f32.gmra.mrb[0].mxu0 %v1963
      %v4532 = vpop.f32.mrb[0].mxu0
      %v4533 = vadd.f32 0.0, %v4532
      %v4534 = vpop.f32.mrb[0].mxu0
      %4535 = vmatprep.mubr.f32.mxu0 0.0
      %4536 = vmatmul.mubr.f32.gmra.mrb[0].mxu0 %v1965
      %v4537 = vpop.f32.mrb[0].mxu0
      %v4538 = vadd.f32 0.0, %v4537
      %v4539 = vpop.f32.mrb[0].mxu0
      %4540 = vmatprep.mubr.f32.mxu0 0.0
      %4541 = vmatmul.mubr.f32.gmra.mrb[0].mxu0 %v1967
      %v4542 = vpop.f32.mrb[0].mxu0
      %v4543 = vadd.f32 0.0, %v4542
      %v4544 = vpop.f32.mrb[0].mxu0
      %4545 = vmatprep.mubr.f32.mxu0 0.0
      %4546 = vmatmul.mubr.f32.gmra.mrb[0].mxu0 %v3151
      %v4547 = vpop.f32.mrb[0].mxu0
      %v4548 = vadd.f32 0.0, %v4547
      %v4549 = vpop.f32.mrb[0].mxu0
      %4550 = vmatprep.mubr.f32.mxu0 0.0
      %4551 = vmatmul.mubr.f32.gmra.mrb[0].mxu0 %v3153
      %v4552 = vpop.f32.mrb[0].mxu0
      %v4553 = vadd.f32 0.0, %v4552
      %v4554 = vpop.f32.mrb[0].mxu0
      %4555 = vmatprep.mubr.f32.mxu0 0.0
      %4556 = vmatmul.mubr.f32.gmra.mrb[0].mxu0 %v4337
      %v4557 = vpop.f32.mrb[0].mxu0
      %v4558 = vadd.f32 0.0, %v4557
      %v4559 = vpop.f32.mrb[0].mxu0
      %4560 = vmatprep.mubr.f32.mxu0 0.0
      %4561 = vmatmul.mubr.f32.gmra.mrb[0].mxu0 %v4339
      %v4562 = vpop.f32.mrb[0].mxu0
      %v4563 = vadd.f32 0.0, %v4562
      %v4564 = vpop.f32.mrb[0].mxu0
      %4565 = vdwg.mxu0
      %4598 = vrot.lane.b32.xlu0 %v4408, 8
      %v4599 = vpop.permute.xlu0 %4598
      %4600 = vrot.lane.b32.xlu0 %v4413, 8
      %v4601 = vpop.permute.xlu0 %4600
      %4602 = vrot.lane.b32.xlu0 %v4418, 8
      %v4603 = vpop.permute.xlu0 %4602
      %4604 = vrot.lane.b32.xlu0 %v4423, 8
      %v4605 = vpop.permute.xlu0 %4604
      %4606 = vrot.lane.b32.xlu0 %v4428, 8
      %v4607 = vpop.permute.xlu0 %4606
      %4608 = vrot.lane.b32.xlu0 %v4433, 8
      %v4609 = vpop.permute.xlu0 %4608
      %4610 = vrot.lane.b32.xlu0 %v4438, 8
      %v4611 = vpop.permute.xlu0 %4610
      %4612 = vrot.lane.b32.xlu0 %v4443, 8
      %v4613 = vpop.permute.xlu0 %4612
      %4614 = vrot.lane.b32.xlu0 %v4448, 8
      %v4615 = vpop.permute.xlu0 %4614
      %4616 = vrot.lane.b32.xlu0 %v4453, 8
      %v4617 = vpop.permute.xlu0 %4616
      %4618 = vrot.lane.b32.xlu0 %v4458, 8
      %v4619 = vpop.permute.xlu0 %4618
      %4620 = vrot.lane.b32.xlu0 %v4463, 8
      %v4621 = vpop.permute.xlu0 %4620
      %4622 = vrot.lane.b32.xlu0 %v4468, 8
      %v4623 = vpop.permute.xlu0 %4622
      %4624 = vrot.lane.b32.xlu0 %v4473, 8
      %v4625 = vpop.permute.xlu0 %4624
      %4626 = vrot.lane.b32.xlu0 %v4478, 8
      %v4627 = vpop.permute.xlu0 %4626
      %4628 = vrot.lane.b32.xlu0 %v4483, 8
      %v4629 = vpop.permute.xlu0 %4628
      %4630 = vrot.lane.b32.xlu0 %v4488, 8
      %v4631 = vpop.permute.xlu0 %4630
      %4632 = vrot.lane.b32.xlu0 %v4493, 8
      %v4633 = vpop.permute.xlu0 %4632
      %4634 = vrot.lane.b32.xlu0 %v4498, 8
      %v4635 = vpop.permute.xlu0 %4634
      %4636 = vrot.lane.b32.xlu0 %v4503, 8
      %v4637 = vpop.permute.xlu0 %4636
      %4638 = vrot.lane.b32.xlu0 %v4508, 8
      %v4639 = vpop.permute.xlu0 %4638
      %4640 = vrot.lane.b32.xlu0 %v4513, 8
      %v4641 = vpop.permute.xlu0 %4640
      %4642 = vrot.lane.b32.xlu0 %v4518, 8
      %v4643 = vpop.permute.xlu0 %4642
      %4644 = vrot.lane.b32.xlu0 %v4523, 8
      %v4645 = vpop.permute.xlu0 %4644
      %4646 = vrot.lane.b32.xlu0 %v4528, 8
      %v4647 = vpop.permute.xlu0 %4646
      %4648 = vrot.lane.b32.xlu0 %v4533, 8
      %v4649 = vpop.permute.xlu0 %4648
      %4650 = vrot.lane.b32.xlu0 %v4538, 8
      %v4651 = vpop.permute.xlu0 %4650
      %4652 = vrot.lane.b32.xlu0 %v4543, 8
      %v4653 = vpop.permute.xlu0 %4652
      %4654 = vrot.lane.b32.xlu0 %v4548, 8
      %v4655 = vpop.permute.xlu0 %4654
      %4656 = vrot.lane.b32.xlu0 %v4553, 8
      %v4657 = vpop.permute.xlu0 %4656
      %4658 = vrot.lane.b32.xlu0 %v4558, 8
      %v4659 = vpop.permute.xlu0 %4658
      %4660 = vrot.lane.b32.xlu0 %v4563, 8
      %v4661 = vpop.permute.xlu0 %4660
      %v4694 = vadd.f32 %v4298, %v4599
      %v4695 = vadd.f32 %v4299, %v4601
      %v4696 = vadd.f32 %v4300, %v4603
      %v4697 = vadd.f32 %v4301, %v4605
      %v4698 = vadd.f32 %v4302, %v4607
      %v4699 = vadd.f32 %v4303, %v4609
      %v4700 = vadd.f32 %v4304, %v4611
      %v4701 = vadd.f32 %v4305, %v4613
      %v4702 = vadd.f32 %v4306, %v4615
      %v4703 = vadd.f32 %v4307, %v4617
      %v4704 = vadd.f32 %v4308, %v4619
      %v4705 = vadd.f32 %v4309, %v4621
      %v4706 = vadd.f32 %v4310, %v4623
      %v4707 = vadd.f32 %v4311, %v4625
      %v4708 = vadd.f32 %v4312, %v4627
      %v4709 = vadd.f32 %v4313, %v4629
      %v4710 = vadd.f32 %v4314, %v4631
      %v4711 = vadd.f32 %v4315, %v4633
      %v4712 = vadd.f32 %v4316, %v4635
      %v4713 = vadd.f32 %v4317, %v4637
      %v4714 = vadd.f32 %v4318, %v4639
      %v4715 = vadd.f32 %v4319, %v4641
      %v4716 = vadd.f32 %v4320, %v4643
      %v4717 = vadd.f32 %v4321, %v4645
      %v4718 = vadd.f32 %v4322, %v4647
      %v4719 = vadd.f32 %v4323, %v4649
      %v4720 = vadd.f32 %v4324, %v4651
      %v4721 = vadd.f32 %v4325, %v4653
      %v4722 = vadd.f32 %v4326, %v4655
      %v4723 = vadd.f32 %v4327, %v4657
      %v4724 = vadd.f32 %v4328, %v4659
      %v4725 = vadd.f32 %v4329, %v4661
      %vm4726 = vcmask 130112
      %v4727 = vsel %vm4726, %v4694, 0.0
      %v4728 = vsel %vm4726, %v4696, 0.0
      %v4729 = vadd.f32 %v4727, %v4728
      %v4730 = vsel %vm4726, %v4695, 0.0
      %v4731 = vsel %vm4726, %v4697, 0.0
      %v4732 = vadd.f32 %v4730, %v4731
      %v4733 = vsel %vm4726, %v4698, 0.0
      %v4734 = vsel %vm4726, %v4700, 0.0
      %v4735 = vadd.f32 %v4733, %v4734
      %v4736 = vsel %vm4726, %v4699, 0.0
      %v4737 = vsel %vm4726, %v4701, 0.0
      %v4738 = vadd.f32 %v4736, %v4737
      %v4739 = vsel %vm4726, %v4702, 0.0
      %v4740 = vsel %vm4726, %v4704, 0.0
      %v4741 = vadd.f32 %v4739, %v4740
      %v4742 = vsel %vm4726, %v4703, 0.0
      %v4743 = vsel %vm4726, %v4705, 0.0
      %v4744 = vadd.f32 %v4742, %v4743
      %v4745 = vsel %vm4726, %v4706, 0.0
      %v4746 = vsel %vm4726, %v4708, 0.0
      %v4747 = vadd.f32 %v4745, %v4746
      %v4748 = vsel %vm4726, %v4707, 0.0
      %v4749 = vsel %vm4726, %v4709, 0.0
      %v4750 = vadd.f32 %v4748, %v4749
      %v4751 = vsel %vm4726, %v4710, 0.0
      %v4752 = vsel %vm4726, %v4712, 0.0
      %v4753 = vadd.f32 %v4751, %v4752
      %v4754 = vsel %vm4726, %v4711, 0.0
      %v4755 = vsel %vm4726, %v4713, 0.0
      %v4756 = vadd.f32 %v4754, %v4755
      %v4757 = vsel %vm4726, %v4714, 0.0
      %v4758 = vsel %vm4726, %v4716, 0.0
      %v4759 = vadd.f32 %v4757, %v4758
      %v4760 = vsel %vm4726, %v4715, 0.0
      %v4761 = vsel %vm4726, %v4717, 0.0
      %v4762 = vadd.f32 %v4760, %v4761
      %v4763 = vsel %vm4726, %v4718, 0.0
      %v4764 = vsel %vm4726, %v4720, 0.0
      %v4765 = vadd.f32 %v4763, %v4764
      %v4766 = vsel %vm4726, %v4719, 0.0
      %v4767 = vsel %vm4726, %v4721, 0.0
      %v4768 = vadd.f32 %v4766, %v4767
      %v4769 = vsel %vm4726, %v4722, 0.0
      %v4770 = vsel %vm4726, %v4724, 0.0
      %v4771 = vadd.f32 %v4769, %v4770
      %v4772 = vsel %vm4726, %v4723, 0.0
      %v4773 = vsel %vm4726, %v4725, 0.0
      %v4774 = vadd.f32 %v4772, %v4773
      %v4791 = vcombine.high %v4729, %v4729
      %v4793 = vunpack.c.l.s4 1983009808
      %v4794 = vunpack.c.0.s8 %v4793
      %v4795 = vlaneseq
      %v4796 = vshrl.u32 %v4795, 7
      %v4797 = vsub.s32 %v4794, %v4796
      %v4798 = vrot.slane %v4729, %v4797
      %v4800 = vunpack.c.l.s4 1983009808
      %v4801 = vunpack.c.0.s8 %v4800
      %v4802 = vlaneseq
      %v4803 = vshrl.u32 %v4802, 7
      %v4804 = vsub.s32 %v4801, %v4803
      %v4805 = vrot.slane %v4791, %v4804
      %v4806 = vcombine.high %v4798, %v4798
      %v4807 = vcombine.high %v4805, %v4805
      %v4808 = vcombine.high %v4732, %v4732
      %v4810 = vunpack.c.l.s4 1983009808
      %v4811 = vunpack.c.0.s8 %v4810
      %v4812 = vlaneseq
      %v4813 = vshrl.u32 %v4812, 7
      %v4814 = vsub.s32 %v4811, %v4813
      %v4815 = vrot.slane %v4732, %v4814
      %v4817 = vunpack.c.l.s4 1983009808
      %v4818 = vunpack.c.0.s8 %v4817
      %v4819 = vlaneseq
      %v4820 = vshrl.u32 %v4819, 7
      %v4821 = vsub.s32 %v4818, %v4820
      %v4822 = vrot.slane %v4808, %v4821
      %v4823 = vcombine.high %v4815, %v4815
      %v4824 = vcombine.high %v4822, %v4822
      %v4825 = vcombine.high %v4735, %v4735
      %v4827 = vunpack.c.l.s4 1983009808
      %v4828 = vunpack.c.0.s8 %v4827
      %v4829 = vlaneseq
      %v4830 = vshrl.u32 %v4829, 7
      %v4831 = vsub.s32 %v4828, %v4830
      %v4832 = vrot.slane %v4735, %v4831
      %v4834 = vunpack.c.l.s4 1983009808
      %v4835 = vunpack.c.0.s8 %v4834
      %v4836 = vlaneseq
      %v4837 = vshrl.u32 %v4836, 7
      %v4838 = vsub.s32 %v4835, %v4837
      %v4839 = vrot.slane %v4825, %v4838
      %v4840 = vcombine.high %v4832, %v4832
      %v4841 = vcombine.high %v4839, %v4839
      %v4842 = vcombine.high %v4738, %v4738
      %v4844 = vunpack.c.l.s4 1983009808
      %v4845 = vunpack.c.0.s8 %v4844
      %v4846 = vlaneseq
      %v4847 = vshrl.u32 %v4846, 7
      %v4848 = vsub.s32 %v4845, %v4847
      %v4849 = vrot.slane %v4738, %v4848
      %v4851 = vunpack.c.l.s4 1983009808
      %v4852 = vunpack.c.0.s8 %v4851
      %v4853 = vlaneseq
      %v4854 = vshrl.u32 %v4853, 7
      %v4855 = vsub.s32 %v4852, %v4854
      %v4856 = vrot.slane %v4842, %v4855
      %v4857 = vcombine.high %v4849, %v4849
      %v4858 = vcombine.high %v4856, %v4856
      %v4859 = vcombine.high %v4741, %v4741
      %v4861 = vunpack.c.l.s4 1983009808
      %v4862 = vunpack.c.0.s8 %v4861
      %v4863 = vlaneseq
      %v4864 = vshrl.u32 %v4863, 7
      %v4865 = vsub.s32 %v4862, %v4864
      %v4866 = vrot.slane %v4741, %v4865
      %v4868 = vunpack.c.l.s4 1983009808
      %v4869 = vunpack.c.0.s8 %v4868
      %v4870 = vlaneseq
      %v4871 = vshrl.u32 %v4870, 7
      %v4872 = vsub.s32 %v4869, %v4871
      %v4873 = vrot.slane %v4859, %v4872
      %v4874 = vcombine.high %v4866, %v4866
      %v4875 = vcombine.high %v4873, %v4873
      %v4876 = vcombine.high %v4744, %v4744
      %v4878 = vunpack.c.l.s4 1983009808
      %v4879 = vunpack.c.0.s8 %v4878
      %v4880 = vlaneseq
      %v4881 = vshrl.u32 %v4880, 7
      %v4882 = vsub.s32 %v4879, %v4881
      %v4883 = vrot.slane %v4744, %v4882
      %v4885 = vunpack.c.l.s4 1983009808
      %v4886 = vunpack.c.0.s8 %v4885
      %v4887 = vlaneseq
      %v4888 = vshrl.u32 %v4887, 7
      %v4889 = vsub.s32 %v4886, %v4888
      %v4890 = vrot.slane %v4876, %v4889
      %v4891 = vcombine.high %v4883, %v4883
      %v4892 = vcombine.high %v4890, %v4890
      %v4893 = vcombine.high %v4747, %v4747
      %v4895 = vunpack.c.l.s4 1983009808
      %v4896 = vunpack.c.0.s8 %v4895
      %v4897 = vlaneseq
      %v4898 = vshrl.u32 %v4897, 7
      %v4899 = vsub.s32 %v4896, %v4898
      %v4900 = vrot.slane %v4747, %v4899
      %v4902 = vunpack.c.l.s4 1983009808
      %v4903 = vunpack.c.0.s8 %v4902
      %v4904 = vlaneseq
      %v4905 = vshrl.u32 %v4904, 7
      %v4906 = vsub.s32 %v4903, %v4905
      %v4907 = vrot.slane %v4893, %v4906
      %v4908 = vcombine.high %v4900, %v4900
      %v4909 = vcombine.high %v4907, %v4907
      %v4910 = vcombine.high %v4750, %v4750
      %v4912 = vunpack.c.l.s4 1983009808
      %v4913 = vunpack.c.0.s8 %v4912
      %v4914 = vlaneseq
      %v4915 = vshrl.u32 %v4914, 7
      %v4916 = vsub.s32 %v4913, %v4915
      %v4917 = vrot.slane %v4750, %v4916
      %v4919 = vunpack.c.l.s4 1983009808
      %v4920 = vunpack.c.0.s8 %v4919
      %v4921 = vlaneseq
      %v4922 = vshrl.u32 %v4921, 7
      %v4923 = vsub.s32 %v4920, %v4922
      %v4924 = vrot.slane %v4910, %v4923
      %v4925 = vcombine.high %v4917, %v4917
      %v4926 = vcombine.high %v4924, %v4924
      %v4927 = vcombine.high %v4753, %v4753
      %v4929 = vunpack.c.l.s4 1983009808
      %v4930 = vunpack.c.0.s8 %v4929
      %v4931 = vlaneseq
      %v4932 = vshrl.u32 %v4931, 7
      %v4933 = vsub.s32 %v4930, %v4932
      %v4934 = vrot.slane %v4753, %v4933
      %v4936 = vunpack.c.l.s4 1983009808
      %v4937 = vunpack.c.0.s8 %v4936
      %v4938 = vlaneseq
      %v4939 = vshrl.u32 %v4938, 7
      %v4940 = vsub.s32 %v4937, %v4939
      %v4941 = vrot.slane %v4927, %v4940
      %v4942 = vcombine.high %v4934, %v4934
      %v4943 = vcombine.high %v4941, %v4941
      %v4944 = vcombine.high %v4756, %v4756
      %v4946 = vunpack.c.l.s4 1983009808
      %v4947 = vunpack.c.0.s8 %v4946
      %v4948 = vlaneseq
      %v4949 = vshrl.u32 %v4948, 7
      %v4950 = vsub.s32 %v4947, %v4949
      %v4951 = vrot.slane %v4756, %v4950
      %v4953 = vunpack.c.l.s4 1983009808
      %v4954 = vunpack.c.0.s8 %v4953
      %v4955 = vlaneseq
      %v4956 = vshrl.u32 %v4955, 7
      %v4957 = vsub.s32 %v4954, %v4956
      %v4958 = vrot.slane %v4944, %v4957
      %v4959 = vcombine.high %v4951, %v4951
      %v4960 = vcombine.high %v4958, %v4958
      %v4961 = vcombine.high %v4759, %v4759
      %v4963 = vunpack.c.l.s4 1983009808
      %v4964 = vunpack.c.0.s8 %v4963
      %v4965 = vlaneseq
      %v4966 = vshrl.u32 %v4965, 7
      %v4967 = vsub.s32 %v4964, %v4966
      %v4968 = vrot.slane %v4759, %v4967
      %v4970 = vunpack.c.l.s4 1983009808
      %v4971 = vunpack.c.0.s8 %v4970
      %v4972 = vlaneseq
      %v4973 = vshrl.u32 %v4972, 7
      %v4974 = vsub.s32 %v4971, %v4973
      %v4975 = vrot.slane %v4961, %v4974
      %v4976 = vcombine.high %v4968, %v4968
      %v4977 = vcombine.high %v4975, %v4975
      %v4978 = vcombine.high %v4762, %v4762
      %v4980 = vunpack.c.l.s4 1983009808
      %v4981 = vunpack.c.0.s8 %v4980
      %v4982 = vlaneseq
      %v4983 = vshrl.u32 %v4982, 7
      %v4984 = vsub.s32 %v4981, %v4983
      %v4985 = vrot.slane %v4762, %v4984
      %v4987 = vunpack.c.l.s4 1983009808
      %v4988 = vunpack.c.0.s8 %v4987
      %v4989 = vlaneseq
      %v4990 = vshrl.u32 %v4989, 7
      %v4991 = vsub.s32 %v4988, %v4990
      %v4992 = vrot.slane %v4978, %v4991
      %v4993 = vcombine.high %v4985, %v4985
      %v4994 = vcombine.high %v4992, %v4992
      %v4995 = vcombine.high %v4765, %v4765
      %v4997 = vunpack.c.l.s4 1983009808
      %v4998 = vunpack.c.0.s8 %v4997
      %v4999 = vlaneseq
      %v5000 = vshrl.u32 %v4999, 7
      %v5001 = vsub.s32 %v4998, %v5000
      %v5002 = vrot.slane %v4765, %v5001
      %v5004 = vunpack.c.l.s4 1983009808
      %v5005 = vunpack.c.0.s8 %v5004
      %v5006 = vlaneseq
      %v5007 = vshrl.u32 %v5006, 7
      %v5008 = vsub.s32 %v5005, %v5007
      %v5009 = vrot.slane %v4995, %v5008
      %v5010 = vcombine.high %v5002, %v5002
      %v5011 = vcombine.high %v5009, %v5009
      %v5012 = vcombine.high %v4768, %v4768
      %v5014 = vunpack.c.l.s4 1983009808
      %v5015 = vunpack.c.0.s8 %v5014
      %v5016 = vlaneseq
      %v5017 = vshrl.u32 %v5016, 7
      %v5018 = vsub.s32 %v5015, %v5017
      %v5019 = vrot.slane %v4768, %v5018
      %v5021 = vunpack.c.l.s4 1983009808
      %v5022 = vunpack.c.0.s8 %v5021
      %v5023 = vlaneseq
      %v5024 = vshrl.u32 %v5023, 7
      %v5025 = vsub.s32 %v5022, %v5024
      %v5026 = vrot.slane %v5012, %v5025
      %v5027 = vcombine.high %v5019, %v5019
      %v5028 = vcombine.high %v5026, %v5026
      %v5029 = vcombine.high %v4771, %v4771
      %v5031 = vunpack.c.l.s4 1983009808
      %v5032 = vunpack.c.0.s8 %v5031
      %v5033 = vlaneseq
      %v5034 = vshrl.u32 %v5033, 7
      %v5035 = vsub.s32 %v5032, %v5034
      %v5036 = vrot.slane %v4771, %v5035
      %v5038 = vunpack.c.l.s4 1983009808
      %v5039 = vunpack.c.0.s8 %v5038
      %v5040 = vlaneseq
      %v5041 = vshrl.u32 %v5040, 7
      %v5042 = vsub.s32 %v5039, %v5041
      %v5043 = vrot.slane %v5029, %v5042
      %v5044 = vcombine.high %v5036, %v5036
      %v5045 = vcombine.high %v5043, %v5043
      %v5046 = vcombine.high %v4774, %v4774
      %v5048 = vunpack.c.l.s4 1983009808
      %v5049 = vunpack.c.0.s8 %v5048
      %v5050 = vlaneseq
      %v5051 = vshrl.u32 %v5050, 7
      %v5052 = vsub.s32 %v5049, %v5051
      %v5053 = vrot.slane %v4774, %v5052
      %v5055 = vunpack.c.l.s4 1983009808
      %v5056 = vunpack.c.0.s8 %v5055
      %v5057 = vlaneseq
      %v5058 = vshrl.u32 %v5057, 7
      %v5059 = vsub.s32 %v5056, %v5058
      %v5060 = vrot.slane %v5046, %v5059
      %v5061 = vcombine.high %v5053, %v5053
      %v5062 = vcombine.high %v5060, %v5060
      %vm5127 = vcmask 123968
      %v5128 = vsel %vm5127, %v4798, 0.0
      %v5129 = vrot.slane %v5128, 4
      %v5130 = vadd.f32 %v5128, %v5129
      %v5131 = vrot.slane %v5130, 2
      %v5132 = vadd.f32 %v5130, %v5131
      %v5133 = vrot.slane %v5132, 1
      %v5134 = vadd.f32 %v5132, %v5133
      %v5135 = vsel %vm5127, %v4806, 0.0
      %v5136 = vrot.slane %v5135, 4
      %v5137 = vadd.f32 %v5135, %v5136
      %v5138 = vrot.slane %v5137, 2
      %v5139 = vadd.f32 %v5137, %v5138
      %v5140 = vrot.slane %v5139, 1
      %v5141 = vadd.f32 %v5139, %v5140
      %v5142 = vsel %vm5127, %v4805, 0.0
      %v5143 = vrot.slane %v5142, 4
      %v5144 = vadd.f32 %v5142, %v5143
      %v5145 = vrot.slane %v5144, 2
      %v5146 = vadd.f32 %v5144, %v5145
      %v5147 = vrot.slane %v5146, 1
      %v5148 = vadd.f32 %v5146, %v5147
      %v5149 = vsel %vm5127, %v4807, 0.0
      %v5150 = vrot.slane %v5149, 4
      %v5151 = vadd.f32 %v5149, %v5150
      %v5152 = vrot.slane %v5151, 2
      %v5153 = vadd.f32 %v5151, %v5152
      %v5154 = vrot.slane %v5153, 1
      %v5155 = vadd.f32 %v5153, %v5154
      %v5156 = vsel %vm5127, %v4815, 0.0
      %v5157 = vrot.slane %v5156, 4
      %v5158 = vadd.f32 %v5156, %v5157
      %v5159 = vrot.slane %v5158, 2
      %v5160 = vadd.f32 %v5158, %v5159
      %v5161 = vrot.slane %v5160, 1
      %v5162 = vadd.f32 %v5160, %v5161
      %v5163 = vsel %vm5127, %v4823, 0.0
      %v5164 = vrot.slane %v5163, 4
      %v5165 = vadd.f32 %v5163, %v5164
      %v5166 = vrot.slane %v5165, 2
      %v5167 = vadd.f32 %v5165, %v5166
      %v5168 = vrot.slane %v5167, 1
      %v5169 = vadd.f32 %v5167, %v5168
      %v5170 = vsel %vm5127, %v4822, 0.0
      %v5171 = vrot.slane %v5170, 4
      %v5172 = vadd.f32 %v5170, %v5171
      %v5173 = vrot.slane %v5172, 2
      %v5174 = vadd.f32 %v5172, %v5173
      %v5175 = vrot.slane %v5174, 1
      %v5176 = vadd.f32 %v5174, %v5175
      %v5177 = vsel %vm5127, %v4824, 0.0
      %v5178 = vrot.slane %v5177, 4
      %v5179 = vadd.f32 %v5177, %v5178
      %v5180 = vrot.slane %v5179, 2
      %v5181 = vadd.f32 %v5179, %v5180
      %v5182 = vrot.slane %v5181, 1
      %v5183 = vadd.f32 %v5181, %v5182
      %v5184 = vsel %vm5127, %v4832, 0.0
      %v5185 = vrot.slane %v5184, 4
      %v5186 = vadd.f32 %v5184, %v5185
      %v5187 = vrot.slane %v5186, 2
      %v5188 = vadd.f32 %v5186, %v5187
      %v5189 = vrot.slane %v5188, 1
      %v5190 = vadd.f32 %v5188, %v5189
      %v5191 = vsel %vm5127, %v4840, 0.0
      %v5192 = vrot.slane %v5191, 4
      %v5193 = vadd.f32 %v5191, %v5192
      %v5194 = vrot.slane %v5193, 2
      %v5195 = vadd.f32 %v5193, %v5194
      %v5196 = vrot.slane %v5195, 1
      %v5197 = vadd.f32 %v5195, %v5196
      %v5198 = vsel %vm5127, %v4839, 0.0
      %v5199 = vrot.slane %v5198, 4
      %v5200 = vadd.f32 %v5198, %v5199
      %v5201 = vrot.slane %v5200, 2
      %v5202 = vadd.f32 %v5200, %v5201
      %v5203 = vrot.slane %v5202, 1
      %v5204 = vadd.f32 %v5202, %v5203
      %v5205 = vsel %vm5127, %v4841, 0.0
      %v5206 = vrot.slane %v5205, 4
      %v5207 = vadd.f32 %v5205, %v5206
      %v5208 = vrot.slane %v5207, 2
      %v5209 = vadd.f32 %v5207, %v5208
      %v5210 = vrot.slane %v5209, 1
      %v5211 = vadd.f32 %v5209, %v5210
      %v5212 = vsel %vm5127, %v4849, 0.0
      %v5213 = vrot.slane %v5212, 4
      %v5214 = vadd.f32 %v5212, %v5213
      %v5215 = vrot.slane %v5214, 2
      %v5216 = vadd.f32 %v5214, %v5215
      %v5217 = vrot.slane %v5216, 1
      %v5218 = vadd.f32 %v5216, %v5217
      %v5219 = vsel %vm5127, %v4857, 0.0
      %v5220 = vrot.slane %v5219, 4
      %v5221 = vadd.f32 %v5219, %v5220
      %v5222 = vrot.slane %v5221, 2
      %v5223 = vadd.f32 %v5221, %v5222
      %v5224 = vrot.slane %v5223, 1
      %v5225 = vadd.f32 %v5223, %v5224
      %v5226 = vsel %vm5127, %v4856, 0.0
      %v5227 = vrot.slane %v5226, 4
      %v5228 = vadd.f32 %v5226, %v5227
      %v5229 = vrot.slane %v5228, 2
      %v5230 = vadd.f32 %v5228, %v5229
      %v5231 = vrot.slane %v5230, 1
      %v5232 = vadd.f32 %v5230, %v5231
      %v5233 = vsel %vm5127, %v4858, 0.0
      %v5234 = vrot.slane %v5233, 4
      %v5235 = vadd.f32 %v5233, %v5234
      %v5236 = vrot.slane %v5235, 2
      %v5237 = vadd.f32 %v5235, %v5236
      %v5238 = vrot.slane %v5237, 1
      %v5239 = vadd.f32 %v5237, %v5238
      %v5240 = vsel %vm5127, %v4866, 0.0
      %v5241 = vrot.slane %v5240, 4
      %v5242 = vadd.f32 %v5240, %v5241
      %v5243 = vrot.slane %v5242, 2
      %v5244 = vadd.f32 %v5242, %v5243
      %v5245 = vrot.slane %v5244, 1
      %v5246 = vadd.f32 %v5244, %v5245
      %v5247 = vsel %vm5127, %v4874, 0.0
      %v5248 = vrot.slane %v5247, 4
      %v5249 = vadd.f32 %v5247, %v5248
      %v5250 = vrot.slane %v5249, 2
      %v5251 = vadd.f32 %v5249, %v5250
      %v5252 = vrot.slane %v5251, 1
      %v5253 = vadd.f32 %v5251, %v5252
      %v5254 = vsel %vm5127, %v4873, 0.0
      %v5255 = vrot.slane %v5254, 4
      %v5256 = vadd.f32 %v5254, %v5255
      %v5257 = vrot.slane %v5256, 2
      %v5258 = vadd.f32 %v5256, %v5257
      %v5259 = vrot.slane %v5258, 1
      %v5260 = vadd.f32 %v5258, %v5259
      %v5261 = vsel %vm5127, %v4875, 0.0
      %v5262 = vrot.slane %v5261, 4
      %v5263 = vadd.f32 %v5261, %v5262
      %v5264 = vrot.slane %v5263, 2
      %v5265 = vadd.f32 %v5263, %v5264
      %v5266 = vrot.slane %v5265, 1
      %v5267 = vadd.f32 %v5265, %v5266
      %v5268 = vsel %vm5127, %v4883, 0.0
      %v5269 = vrot.slane %v5268, 4
      %v5270 = vadd.f32 %v5268, %v5269
      %v5271 = vrot.slane %v5270, 2
      %v5272 = vadd.f32 %v5270, %v5271
      %v5273 = vrot.slane %v5272, 1
      %v5274 = vadd.f32 %v5272, %v5273
      %v5275 = vsel %vm5127, %v4891, 0.0
      %v5276 = vrot.slane %v5275, 4
      %v5277 = vadd.f32 %v5275, %v5276
      %v5278 = vrot.slane %v5277, 2
      %v5279 = vadd.f32 %v5277, %v5278
      %v5280 = vrot.slane %v5279, 1
      %v5281 = vadd.f32 %v5279, %v5280
      %v5282 = vsel %vm5127, %v4890, 0.0
      %v5283 = vrot.slane %v5282, 4
      %v5284 = vadd.f32 %v5282, %v5283
      %v5285 = vrot.slane %v5284, 2
      %v5286 = vadd.f32 %v5284, %v5285
      %v5287 = vrot.slane %v5286, 1
      %v5288 = vadd.f32 %v5286, %v5287
      %v5289 = vsel %vm5127, %v4892, 0.0
      %v5290 = vrot.slane %v5289, 4
      %v5291 = vadd.f32 %v5289, %v5290
      %v5292 = vrot.slane %v5291, 2
      %v5293 = vadd.f32 %v5291, %v5292
      %v5294 = vrot.slane %v5293, 1
      %v5295 = vadd.f32 %v5293, %v5294
      %v5296 = vsel %vm5127, %v4900, 0.0
      %v5297 = vrot.slane %v5296, 4
      %v5298 = vadd.f32 %v5296, %v5297
      %v5299 = vrot.slane %v5298, 2
      %v5300 = vadd.f32 %v5298, %v5299
      %v5301 = vrot.slane %v5300, 1
      %v5302 = vadd.f32 %v5300, %v5301
      %v5303 = vsel %vm5127, %v4908, 0.0
      %v5304 = vrot.slane %v5303, 4
      %v5305 = vadd.f32 %v5303, %v5304
      %v5306 = vrot.slane %v5305, 2
      %v5307 = vadd.f32 %v5305, %v5306
      %v5308 = vrot.slane %v5307, 1
      %v5309 = vadd.f32 %v5307, %v5308
      %v5310 = vsel %vm5127, %v4907, 0.0
      %v5311 = vrot.slane %v5310, 4
      %v5312 = vadd.f32 %v5310, %v5311
      %v5313 = vrot.slane %v5312, 2
      %v5314 = vadd.f32 %v5312, %v5313
      %v5315 = vrot.slane %v5314, 1
      %v5316 = vadd.f32 %v5314, %v5315
      %v5317 = vsel %vm5127, %v4909, 0.0
      %v5318 = vrot.slane %v5317, 4
      %v5319 = vadd.f32 %v5317, %v5318
      %v5320 = vrot.slane %v5319, 2
      %v5321 = vadd.f32 %v5319, %v5320
      %v5322 = vrot.slane %v5321, 1
      %v5323 = vadd.f32 %v5321, %v5322
      %v5324 = vsel %vm5127, %v4917, 0.0
      %v5325 = vrot.slane %v5324, 4
      %v5326 = vadd.f32 %v5324, %v5325
      %v5327 = vrot.slane %v5326, 2
      %v5328 = vadd.f32 %v5326, %v5327
      %v5329 = vrot.slane %v5328, 1
      %v5330 = vadd.f32 %v5328, %v5329
      %v5331 = vsel %vm5127, %v4925, 0.0
      %v5332 = vrot.slane %v5331, 4
      %v5333 = vadd.f32 %v5331, %v5332
      %v5334 = vrot.slane %v5333, 2
      %v5335 = vadd.f32 %v5333, %v5334
      %v5336 = vrot.slane %v5335, 1
      %v5337 = vadd.f32 %v5335, %v5336
      %v5338 = vsel %vm5127, %v4924, 0.0
      %v5339 = vrot.slane %v5338, 4
      %v5340 = vadd.f32 %v5338, %v5339
      %v5341 = vrot.slane %v5340, 2
      %v5342 = vadd.f32 %v5340, %v5341
      %v5343 = vrot.slane %v5342, 1
      %v5344 = vadd.f32 %v5342, %v5343
      %v5345 = vsel %vm5127, %v4926, 0.0
      %v5346 = vrot.slane %v5345, 4
      %v5347 = vadd.f32 %v5345, %v5346
      %v5348 = vrot.slane %v5347, 2
      %v5349 = vadd.f32 %v5347, %v5348
      %v5350 = vrot.slane %v5349, 1
      %v5351 = vadd.f32 %v5349, %v5350
      %v5352 = vsel %vm5127, %v4934, 0.0
      %v5353 = vrot.slane %v5352, 4
      %v5354 = vadd.f32 %v5352, %v5353
      %v5355 = vrot.slane %v5354, 2
      %v5356 = vadd.f32 %v5354, %v5355
      %v5357 = vrot.slane %v5356, 1
      %v5358 = vadd.f32 %v5356, %v5357
      %v5359 = vsel %vm5127, %v4942, 0.0
      %v5360 = vrot.slane %v5359, 4
      %v5361 = vadd.f32 %v5359, %v5360
      %v5362 = vrot.slane %v5361, 2
      %v5363 = vadd.f32 %v5361, %v5362
      %v5364 = vrot.slane %v5363, 1
      %v5365 = vadd.f32 %v5363, %v5364
      %v5366 = vsel %vm5127, %v4941, 0.0
      %v5367 = vrot.slane %v5366, 4
      %v5368 = vadd.f32 %v5366, %v5367
      %v5369 = vrot.slane %v5368, 2
      %v5370 = vadd.f32 %v5368, %v5369
      %v5371 = vrot.slane %v5370, 1
      %v5372 = vadd.f32 %v5370, %v5371
      %v5373 = vsel %vm5127, %v4943, 0.0
      %v5374 = vrot.slane %v5373, 4
      %v5375 = vadd.f32 %v5373, %v5374
      %v5376 = vrot.slane %v5375, 2
      %v5377 = vadd.f32 %v5375, %v5376
      %v5378 = vrot.slane %v5377, 1
      %v5379 = vadd.f32 %v5377, %v5378
      %v5380 = vsel %vm5127, %v4951, 0.0
      %v5381 = vrot.slane %v5380, 4
      %v5382 = vadd.f32 %v5380, %v5381
      %v5383 = vrot.slane %v5382, 2
      %v5384 = vadd.f32 %v5382, %v5383
      %v5385 = vrot.slane %v5384, 1
      %v5386 = vadd.f32 %v5384, %v5385
      %v5387 = vsel %vm5127, %v4959, 0.0
      %v5388 = vrot.slane %v5387, 4
      %v5389 = vadd.f32 %v5387, %v5388
      %v5390 = vrot.slane %v5389, 2
      %v5391 = vadd.f32 %v5389, %v5390
      %v5392 = vrot.slane %v5391, 1
      %v5393 = vadd.f32 %v5391, %v5392
      %v5394 = vsel %vm5127, %v4958, 0.0
      %v5395 = vrot.slane %v5394, 4
      %v5396 = vadd.f32 %v5394, %v5395
      %v5397 = vrot.slane %v5396, 2
      %v5398 = vadd.f32 %v5396, %v5397
      %v5399 = vrot.slane %v5398, 1
      %v5400 = vadd.f32 %v5398, %v5399
      %v5401 = vsel %vm5127, %v4960, 0.0
      %v5402 = vrot.slane %v5401, 4
      %v5403 = vadd.f32 %v5401, %v5402
      %v5404 = vrot.slane %v5403, 2
      %v5405 = vadd.f32 %v5403, %v5404
      %v5406 = vrot.slane %v5405, 1
      %v5407 = vadd.f32 %v5405, %v5406
      %v5408 = vsel %vm5127, %v4968, 0.0
      %v5409 = vrot.slane %v5408, 4
      %v5410 = vadd.f32 %v5408, %v5409
      %v5411 = vrot.slane %v5410, 2
      %v5412 = vadd.f32 %v5410, %v5411
      %v5413 = vrot.slane %v5412, 1
      %v5414 = vadd.f32 %v5412, %v5413
      %v5415 = vsel %vm5127, %v4976, 0.0
      %v5416 = vrot.slane %v5415, 4
      %v5417 = vadd.f32 %v5415, %v5416
      %v5418 = vrot.slane %v5417, 2
      %v5419 = vadd.f32 %v5417, %v5418
      %v5420 = vrot.slane %v5419, 1
      %v5421 = vadd.f32 %v5419, %v5420
      %v5422 = vsel %vm5127, %v4975, 0.0
      %v5423 = vrot.slane %v5422, 4
      %v5424 = vadd.f32 %v5422, %v5423
      %v5425 = vrot.slane %v5424, 2
      %v5426 = vadd.f32 %v5424, %v5425
      %v5427 = vrot.slane %v5426, 1
      %v5428 = vadd.f32 %v5426, %v5427
      %v5429 = vsel %vm5127, %v4977, 0.0
      %v5430 = vrot.slane %v5429, 4
      %v5431 = vadd.f32 %v5429, %v5430
      %v5432 = vrot.slane %v5431, 2
      %v5433 = vadd.f32 %v5431, %v5432
      %v5434 = vrot.slane %v5433, 1
      %v5435 = vadd.f32 %v5433, %v5434
      %v5436 = vsel %vm5127, %v4985, 0.0
      %v5437 = vrot.slane %v5436, 4
      %v5438 = vadd.f32 %v5436, %v5437
      %v5439 = vrot.slane %v5438, 2
      %v5440 = vadd.f32 %v5438, %v5439
      %v5441 = vrot.slane %v5440, 1
      %v5442 = vadd.f32 %v5440, %v5441
      %v5443 = vsel %vm5127, %v4993, 0.0
      %v5444 = vrot.slane %v5443, 4
      %v5445 = vadd.f32 %v5443, %v5444
      %v5446 = vrot.slane %v5445, 2
      %v5447 = vadd.f32 %v5445, %v5446
      %v5448 = vrot.slane %v5447, 1
      %v5449 = vadd.f32 %v5447, %v5448
      %v5450 = vsel %vm5127, %v4992, 0.0
      %v5451 = vrot.slane %v5450, 4
      %v5452 = vadd.f32 %v5450, %v5451
      %v5453 = vrot.slane %v5452, 2
      %v5454 = vadd.f32 %v5452, %v5453
      %v5455 = vrot.slane %v5454, 1
      %v5456 = vadd.f32 %v5454, %v5455
      %v5457 = vsel %vm5127, %v4994, 0.0
      %v5458 = vrot.slane %v5457, 4
      %v5459 = vadd.f32 %v5457, %v5458
      %v5460 = vrot.slane %v5459, 2
      %v5461 = vadd.f32 %v5459, %v5460
      %v5462 = vrot.slane %v5461, 1
      %v5463 = vadd.f32 %v5461, %v5462
      %v5464 = vsel %vm5127, %v5002, 0.0
      %v5465 = vrot.slane %v5464, 4
      %v5466 = vadd.f32 %v5464, %v5465
      %v5467 = vrot.slane %v5466, 2
      %v5468 = vadd.f32 %v5466, %v5467
      %v5469 = vrot.slane %v5468, 1
      %v5470 = vadd.f32 %v5468, %v5469
      %v5471 = vsel %vm5127, %v5010, 0.0
      %v5472 = vrot.slane %v5471, 4
      %v5473 = vadd.f32 %v5471, %v5472
      %v5474 = vrot.slane %v5473, 2
      %v5475 = vadd.f32 %v5473, %v5474
      %v5476 = vrot.slane %v5475, 1
      %v5477 = vadd.f32 %v5475, %v5476
      %v5478 = vsel %vm5127, %v5009, 0.0
      %v5479 = vrot.slane %v5478, 4
      %v5480 = vadd.f32 %v5478, %v5479
      %v5481 = vrot.slane %v5480, 2
      %v5482 = vadd.f32 %v5480, %v5481
      %v5483 = vrot.slane %v5482, 1
      %v5484 = vadd.f32 %v5482, %v5483
      %v5485 = vsel %vm5127, %v5011, 0.0
      %v5486 = vrot.slane %v5485, 4
      %v5487 = vadd.f32 %v5485, %v5486
      %v5488 = vrot.slane %v5487, 2
      %v5489 = vadd.f32 %v5487, %v5488
      %v5490 = vrot.slane %v5489, 1
      %v5491 = vadd.f32 %v5489, %v5490
      %v5492 = vsel %vm5127, %v5019, 0.0
      %v5493 = vrot.slane %v5492, 4
      %v5494 = vadd.f32 %v5492, %v5493
      %v5495 = vrot.slane %v5494, 2
      %v5496 = vadd.f32 %v5494, %v5495
      %v5497 = vrot.slane %v5496, 1
      %v5498 = vadd.f32 %v5496, %v5497
      %v5499 = vsel %vm5127, %v5027, 0.0
      %v5500 = vrot.slane %v5499, 4
      %v5501 = vadd.f32 %v5499, %v5500
      %v5502 = vrot.slane %v5501, 2
      %v5503 = vadd.f32 %v5501, %v5502
      %v5504 = vrot.slane %v5503, 1
      %v5505 = vadd.f32 %v5503, %v5504
      %v5506 = vsel %vm5127, %v5026, 0.0
      %v5507 = vrot.slane %v5506, 4
      %v5508 = vadd.f32 %v5506, %v5507
      %v5509 = vrot.slane %v5508, 2
      %v5510 = vadd.f32 %v5508, %v5509
      %v5511 = vrot.slane %v5510, 1
      %v5512 = vadd.f32 %v5510, %v5511
      %v5513 = vsel %vm5127, %v5028, 0.0
      %v5514 = vrot.slane %v5513, 4
      %v5515 = vadd.f32 %v5513, %v5514
      %v5516 = vrot.slane %v5515, 2
      %v5517 = vadd.f32 %v5515, %v5516
      %v5518 = vrot.slane %v5517, 1
      %v5519 = vadd.f32 %v5517, %v5518
      %v5520 = vsel %vm5127, %v5036, 0.0
      %v5521 = vrot.slane %v5520, 4
      %v5522 = vadd.f32 %v5520, %v5521
      %v5523 = vrot.slane %v5522, 2
      %v5524 = vadd.f32 %v5522, %v5523
      %v5525 = vrot.slane %v5524, 1
      %v5526 = vadd.f32 %v5524, %v5525
      %v5527 = vsel %vm5127, %v5044, 0.0
      %v5528 = vrot.slane %v5527, 4
      %v5529 = vadd.f32 %v5527, %v5528
      %v5530 = vrot.slane %v5529, 2
      %v5531 = vadd.f32 %v5529, %v5530
      %v5532 = vrot.slane %v5531, 1
      %v5533 = vadd.f32 %v5531, %v5532
      %v5534 = vsel %vm5127, %v5043, 0.0
      %v5535 = vrot.slane %v5534, 4
      %v5536 = vadd.f32 %v5534, %v5535
      %v5537 = vrot.slane %v5536, 2
      %v5538 = vadd.f32 %v5536, %v5537
      %v5539 = vrot.slane %v5538, 1
      %v5540 = vadd.f32 %v5538, %v5539
      %v5541 = vsel %vm5127, %v5045, 0.0
      %v5542 = vrot.slane %v5541, 4
      %v5543 = vadd.f32 %v5541, %v5542
      %v5544 = vrot.slane %v5543, 2
      %v5545 = vadd.f32 %v5543, %v5544
      %v5546 = vrot.slane %v5545, 1
      %v5547 = vadd.f32 %v5545, %v5546
      %v5548 = vsel %vm5127, %v5053, 0.0
      %v5549 = vrot.slane %v5548, 4
      %v5550 = vadd.f32 %v5548, %v5549
      %v5551 = vrot.slane %v5550, 2
      %v5552 = vadd.f32 %v5550, %v5551
      %v5553 = vrot.slane %v5552, 1
      %v5554 = vadd.f32 %v5552, %v5553
      %v5555 = vsel %vm5127, %v5061, 0.0
      %v5556 = vrot.slane %v5555, 4
      %v5557 = vadd.f32 %v5555, %v5556
      %v5558 = vrot.slane %v5557, 2
      %v5559 = vadd.f32 %v5557, %v5558
      %v5560 = vrot.slane %v5559, 1
      %v5561 = vadd.f32 %v5559, %v5560
      %v5562 = vsel %vm5127, %v5060, 0.0
      %v5563 = vrot.slane %v5562, 4
      %v5564 = vadd.f32 %v5562, %v5563
      %v5565 = vrot.slane %v5564, 2
      %v5566 = vadd.f32 %v5564, %v5565
      %v5567 = vrot.slane %v5566, 1
      %v5568 = vadd.f32 %v5566, %v5567
      %v5569 = vsel %vm5127, %v5062, 0.0
      %v5570 = vrot.slane %v5569, 4
      %v5571 = vadd.f32 %v5569, %v5570
      %v5572 = vrot.slane %v5571, 2
      %v5573 = vadd.f32 %v5571, %v5572
      %v5574 = vrot.slane %v5573, 1
      %v5575 = vadd.f32 %v5573, %v5574
      %v5576 = vmul.f32 %v5134, 0.25
      %v5577 = vmul.f32 %v5141, 0.25
      %v5578 = vmul.f32 %v5148, 0.25
      %v5579 = vmul.f32 %v5155, 0.25
      %v5580 = vmul.f32 %v5162, 0.25
      %v5581 = vmul.f32 %v5169, 0.25
      %v5582 = vmul.f32 %v5176, 0.25
      %v5583 = vmul.f32 %v5183, 0.25
      %v5584 = vmul.f32 %v5190, 0.25
      %v5585 = vmul.f32 %v5197, 0.25
      %v5586 = vmul.f32 %v5204, 0.25
      %v5587 = vmul.f32 %v5211, 0.25
      %v5588 = vmul.f32 %v5218, 0.25
      %v5589 = vmul.f32 %v5225, 0.25
      %v5590 = vmul.f32 %v5232, 0.25
      %v5591 = vmul.f32 %v5239, 0.25
      %v5592 = vmul.f32 %v5246, 0.25
      %v5593 = vmul.f32 %v5253, 0.25
      %v5594 = vmul.f32 %v5260, 0.25
      %v5595 = vmul.f32 %v5267, 0.25
      %v5596 = vmul.f32 %v5274, 0.25
      %v5597 = vmul.f32 %v5281, 0.25
      %v5598 = vmul.f32 %v5288, 0.25
      %v5599 = vmul.f32 %v5295, 0.25
      %v5600 = vmul.f32 %v5302, 0.25
      %v5601 = vmul.f32 %v5309, 0.25
      %v5602 = vmul.f32 %v5316, 0.25
      %v5603 = vmul.f32 %v5323, 0.25
      %v5604 = vmul.f32 %v5330, 0.25
      %v5605 = vmul.f32 %v5337, 0.25
      %v5606 = vmul.f32 %v5344, 0.25
      %v5607 = vmul.f32 %v5351, 0.25
      %v5608 = vmul.f32 %v5358, 0.25
      %v5609 = vmul.f32 %v5365, 0.25
      %v5610 = vmul.f32 %v5372, 0.25
      %v5611 = vmul.f32 %v5379, 0.25
      %v5612 = vmul.f32 %v5386, 0.25
      %v5613 = vmul.f32 %v5393, 0.25
      %v5614 = vmul.f32 %v5400, 0.25
      %v5615 = vmul.f32 %v5407, 0.25
      %v5616 = vmul.f32 %v5414, 0.25
      %v5617 = vmul.f32 %v5421, 0.25
      %v5618 = vmul.f32 %v5428, 0.25
      %v5619 = vmul.f32 %v5435, 0.25
      %v5620 = vmul.f32 %v5442, 0.25
      %v5621 = vmul.f32 %v5449, 0.25
      %v5622 = vmul.f32 %v5456, 0.25
      %v5623 = vmul.f32 %v5463, 0.25
      %v5624 = vmul.f32 %v5470, 0.25
      %v5625 = vmul.f32 %v5477, 0.25
      %v5626 = vmul.f32 %v5484, 0.25
      %v5627 = vmul.f32 %v5491, 0.25
      %v5628 = vmul.f32 %v5498, 0.25
      %v5629 = vmul.f32 %v5505, 0.25
      %v5630 = vmul.f32 %v5512, 0.25
      %v5631 = vmul.f32 %v5519, 0.25
      %v5632 = vmul.f32 %v5526, 0.25
      %v5633 = vmul.f32 %v5533, 0.25
      %v5634 = vmul.f32 %v5540, 0.25
      %v5635 = vmul.f32 %v5547, 0.25
      %v5636 = vmul.f32 %v5554, 0.25
      %v5637 = vmul.f32 %v5561, 0.25
      %v5638 = vmul.f32 %v5568, 0.25
      %v5639 = vmul.f32 %v5575, 0.25
      %v5640 = vld [vmem:[%s4] sm:$0x1]
      %v5642 = vlaneseq
      %v5643 = vshrl.u32 %v5642, 7
      %v5644 = vsub.s32 0, %v5643
      %v5645 = vrot.slane %v5640, %v5644
      %5646 = vrot.lane.b32.xlu0 %v5645, 8
      %v5647 = vpop.permute.xlu0 %5646
      %v5649 = vadd.f32 %v5576, %v5647
      %v5650 = vadd.f32 %v5577, %v5647
      %v5651 = vadd.f32 %v5578, %v5647
      %v5652 = vadd.f32 %v5579, %v5647
      %v5653 = vadd.f32 %v5580, %v5647
      %v5654 = vadd.f32 %v5581, %v5647
      %v5655 = vadd.f32 %v5582, %v5647
      %v5656 = vadd.f32 %v5583, %v5647
      %v5657 = vadd.f32 %v5584, %v5647
      %v5658 = vadd.f32 %v5585, %v5647
      %v5659 = vadd.f32 %v5586, %v5647
      %v5660 = vadd.f32 %v5587, %v5647
      %v5661 = vadd.f32 %v5588, %v5647
      %v5662 = vadd.f32 %v5589, %v5647
      %v5663 = vadd.f32 %v5590, %v5647
      %v5664 = vadd.f32 %v5591, %v5647
      %v5665 = vadd.f32 %v5592, %v5647
      %v5666 = vadd.f32 %v5593, %v5647
      %v5667 = vadd.f32 %v5594, %v5647
      %v5668 = vadd.f32 %v5595, %v5647
      %v5669 = vadd.f32 %v5596, %v5647
      %v5670 = vadd.f32 %v5597, %v5647
      %v5671 = vadd.f32 %v5598, %v5647
      %v5672 = vadd.f32 %v5599, %v5647
      %v5673 = vadd.f32 %v5600, %v5647
      %v5674 = vadd.f32 %v5601, %v5647
      %v5675 = vadd.f32 %v5602, %v5647
      %v5676 = vadd.f32 %v5603, %v5647
      %v5677 = vadd.f32 %v5604, %v5647
      %v5678 = vadd.f32 %v5605, %v5647
      %v5679 = vadd.f32 %v5606, %v5647
      %v5680 = vadd.f32 %v5607, %v5647
      %v5681 = vadd.f32 %v5608, %v5647
      %v5682 = vadd.f32 %v5609, %v5647
      %v5683 = vadd.f32 %v5610, %v5647
      %v5684 = vadd.f32 %v5611, %v5647
      %v5685 = vadd.f32 %v5612, %v5647
      %v5686 = vadd.f32 %v5613, %v5647
      %v5687 = vadd.f32 %v5614, %v5647
      %v5688 = vadd.f32 %v5615, %v5647
      %v5689 = vadd.f32 %v5616, %v5647
      %v5690 = vadd.f32 %v5617, %v5647
      %v5691 = vadd.f32 %v5618, %v5647
      %v5692 = vadd.f32 %v5619, %v5647
      %v5693 = vadd.f32 %v5620, %v5647
      %v5694 = vadd.f32 %v5621, %v5647
      %v5695 = vadd.f32 %v5622, %v5647
      %v5696 = vadd.f32 %v5623, %v5647
      %v5697 = vadd.f32 %v5624, %v5647
      %v5698 = vadd.f32 %v5625, %v5647
      %v5699 = vadd.f32 %v5626, %v5647
      %v5700 = vadd.f32 %v5627, %v5647
      %v5701 = vadd.f32 %v5628, %v5647
      %v5702 = vadd.f32 %v5629, %v5647
      %v5703 = vadd.f32 %v5630, %v5647
      %v5704 = vadd.f32 %v5631, %v5647
      %v5705 = vadd.f32 %v5632, %v5647
      %v5706 = vadd.f32 %v5633, %v5647
      %v5707 = vadd.f32 %v5634, %v5647
      %v5708 = vadd.f32 %v5635, %v5647
      %v5709 = vadd.f32 %v5636, %v5647
      %v5710 = vadd.f32 %v5637, %v5647
      %v5711 = vadd.f32 %v5638, %v5647
      %v5712 = vadd.f32 %v5639, %v5647
      %v5777 = vrot.slane %v5650, 7
      %vm5778 = vcmask 1041409
      %v5779 = vsel %vm5778, %v5777, %v5649
      %v5780 = vrot.slane %v5651, 6
      %vm5781 = vcmask 1042434
      %v5782 = vsel %vm5781, %v5780, %v5779
      %v5783 = vrot.slane %v5652, 5
      %vm5784 = vcmask 1043459
      %v5785 = vsel %vm5784, %v5783, %v5782
      %v5786 = vrot.slane %v5653, 4
      %vm5787 = vcmask 1044484
      %v5788 = vsel %vm5787, %v5786, %v5785
      %v5789 = vrot.slane %v5654, 3
      %vm5790 = vcmask 1045509
      %v5791 = vsel %vm5790, %v5789, %v5788
      %v5792 = vrot.slane %v5655, 2
      %vm5793 = vcmask 1046534
      %v5794 = vsel %vm5793, %v5792, %v5791
      %v5795 = vrot.slane %v5656, 1
      %vm5796 = vcmask 1047559
      %v5797 = vsel %vm5796, %v5795, %v5794
      %v5798 = vrot.slane %v5658, 7
      %v5799 = vsel %vm5778, %v5798, %v5657
      %v5800 = vrot.slane %v5659, 6
      %v5801 = vsel %vm5781, %v5800, %v5799
      %v5802 = vrot.slane %v5660, 5
      %v5803 = vsel %vm5784, %v5802, %v5801
      %v5804 = vrot.slane %v5661, 4
      %v5805 = vsel %vm5787, %v5804, %v5803
      %v5806 = vrot.slane %v5662, 3
      %v5807 = vsel %vm5790, %v5806, %v5805
      %v5808 = vrot.slane %v5663, 2
      %v5809 = vsel %vm5793, %v5808, %v5807
      %v5810 = vrot.slane %v5664, 1
      %v5811 = vsel %vm5796, %v5810, %v5809
      %v5812 = vrot.slane %v5666, 7
      %v5813 = vsel %vm5778, %v5812, %v5665
      %v5814 = vrot.slane %v5667, 6
      %v5815 = vsel %vm5781, %v5814, %v5813
      %v5816 = vrot.slane %v5668, 5
      %v5817 = vsel %vm5784, %v5816, %v5815
      %v5818 = vrot.slane %v5669, 4
      %v5819 = vsel %vm5787, %v5818, %v5817
      %v5820 = vrot.slane %v5670, 3
      %v5821 = vsel %vm5790, %v5820, %v5819
      %v5822 = vrot.slane %v5671, 2
      %v5823 = vsel %vm5793, %v5822, %v5821
      %v5824 = vrot.slane %v5672, 1
      %v5825 = vsel %vm5796, %v5824, %v5823
      %v5826 = vrot.slane %v5674, 7
      %v5827 = vsel %vm5778, %v5826, %v5673
      %v5828 = vrot.slane %v5675, 6
      %v5829 = vsel %vm5781, %v5828, %v5827
      %v5830 = vrot.slane %v5676, 5
      %v5831 = vsel %vm5784, %v5830, %v5829
      %v5832 = vrot.slane %v5677, 4
      %v5833 = vsel %vm5787, %v5832, %v5831
      %v5834 = vrot.slane %v5678, 3
      %v5835 = vsel %vm5790, %v5834, %v5833
      %v5836 = vrot.slane %v5679, 2
      %v5837 = vsel %vm5793, %v5836, %v5835
      %v5838 = vrot.slane %v5680, 1
      %v5839 = vsel %vm5796, %v5838, %v5837
      %v5840 = vrot.slane %v5682, 7
      %v5841 = vsel %vm5778, %v5840, %v5681
      %v5842 = vrot.slane %v5683, 6
      %v5843 = vsel %vm5781, %v5842, %v5841
      %v5844 = vrot.slane %v5684, 5
      %v5845 = vsel %vm5784, %v5844, %v5843
      %v5846 = vrot.slane %v5685, 4
      %v5847 = vsel %vm5787, %v5846, %v5845
      %v5848 = vrot.slane %v5686, 3
      %v5849 = vsel %vm5790, %v5848, %v5847
      %v5850 = vrot.slane %v5687, 2
      %v5851 = vsel %vm5793, %v5850, %v5849
      %v5852 = vrot.slane %v5688, 1
      %v5853 = vsel %vm5796, %v5852, %v5851
      %v5854 = vrot.slane %v5690, 7
      %v5855 = vsel %vm5778, %v5854, %v5689
      %v5856 = vrot.slane %v5691, 6
      %v5857 = vsel %vm5781, %v5856, %v5855
      %v5858 = vrot.slane %v5692, 5
      %v5859 = vsel %vm5784, %v5858, %v5857
      %v5860 = vrot.slane %v5693, 4
      %v5861 = vsel %vm5787, %v5860, %v5859
      %v5862 = vrot.slane %v5694, 3
      %v5863 = vsel %vm5790, %v5862, %v5861
      %v5864 = vrot.slane %v5695, 2
      %v5865 = vsel %vm5793, %v5864, %v5863
      %v5866 = vrot.slane %v5696, 1
      %v5867 = vsel %vm5796, %v5866, %v5865
      %v5868 = vrot.slane %v5698, 7
      %v5869 = vsel %vm5778, %v5868, %v5697
      %v5870 = vrot.slane %v5699, 6
      %v5871 = vsel %vm5781, %v5870, %v5869
      %v5872 = vrot.slane %v5700, 5
      %v5873 = vsel %vm5784, %v5872, %v5871
      %v5874 = vrot.slane %v5701, 4
      %v5875 = vsel %vm5787, %v5874, %v5873
      %v5876 = vrot.slane %v5702, 3
      %v5877 = vsel %vm5790, %v5876, %v5875
      %v5878 = vrot.slane %v5703, 2
      %v5879 = vsel %vm5793, %v5878, %v5877
      %v5880 = vrot.slane %v5704, 1
      %v5881 = vsel %vm5796, %v5880, %v5879
      %v5882 = vrot.slane %v5706, 7
      %v5883 = vsel %vm5778, %v5882, %v5705
      %v5884 = vrot.slane %v5707, 6
      %v5885 = vsel %vm5781, %v5884, %v5883
      %v5886 = vrot.slane %v5708, 5
      %v5887 = vsel %vm5784, %v5886, %v5885
      %v5888 = vrot.slane %v5709, 4
      %v5889 = vsel %vm5787, %v5888, %v5887
      %v5890 = vrot.slane %v5710, 3
      %v5891 = vsel %vm5790, %v5890, %v5889
      %v5892 = vrot.slane %v5711, 2
      %v5893 = vsel %vm5793, %v5892, %v5891
      %v5894 = vrot.slane %v5712, 1
      %v5895 = vsel %vm5796, %v5894, %v5893
      %5896 = vrot.lane.b32.xlu0 %v5797, 120
      %v5897 = vpop.permute.xlu0 %5896
      %5898 = vrot.lane.b32.xlu0 %v5811, 120
      %v5899 = vpop.permute.xlu0 %5898
      %5900 = vrot.lane.b32.xlu0 %v5825, 120
      %v5901 = vpop.permute.xlu0 %5900
      %5902 = vrot.lane.b32.xlu0 %v5839, 120
      %v5903 = vpop.permute.xlu0 %5902
      %5904 = vrot.lane.b32.xlu0 %v5853, 120
      %v5905 = vpop.permute.xlu0 %5904
      %5906 = vrot.lane.b32.xlu0 %v5867, 120
      %v5907 = vpop.permute.xlu0 %5906
      %5908 = vrot.lane.b32.xlu0 %v5881, 120
      %v5909 = vpop.permute.xlu0 %5908
      %5910 = vrot.lane.b32.xlu0 %v5895, 120
      %v5911 = vpop.permute.xlu0 %5910
      %5920 = vst.msk [vmem:[%s224] sm:$0xff] %vm659, %v5897
      %5921 = vst.msk [vmem:[%s224 + $0x8] sm:$0xff] %vm659, %v5899
      %5922 = vst.msk [vmem:[%s224 + $0x10] sm:$0xff] %vm659, %v5901
      %5923 = vst.msk [vmem:[%s224 + $0x18] sm:$0xff] %vm659, %v5903
      %5924 = vst.msk [vmem:[%s224 + $0x20] sm:$0xff] %vm659, %v5905
      %5925 = vst.msk [vmem:[%s224 + $0x28] sm:$0xff] %vm659, %v5907
      %5926 = vst.msk [vmem:[%s224 + $0x30] sm:$0xff] %vm659, %v5909
      %5927 = vst.msk [vmem:[%s224 + $0x38] sm:$0xff] %vm659, %v5911
      %p5928 = scmp.lt.s32.totalorder %s16, 1
      %s5929 = scalar_select %p5928, %s16, 1
      %s5930 = smul.addr %s5929, 8
      %s5931 = smul.addr %s5930, 8
      %s5932 = scalar_lea.vmem %s5, %s5931
      // Predicated region
      $region41: #{optimized_dis_block.1} parent=39 // pred_check
        %p5933 = pneg %p144
      $region42: #{optimized_dis_block.1} parent=39 // pred_check_branch
        %5935 = sbr.rel (%p5933) target = $region44
      $region43: #{optimized_dis_block.1} parent=39 // pred_region
        _
      $region44: #{optimized_dis_block.1} parent=39 // pred_fallthru
        _
    $region40: #{optimized_dis_block.1} parent=5 // pred_fallthru
      _
    %p5936 = scmp.le.s32.totalorder 2, %s11
    // Predicated region
    $region45: #{optimized_dis_block.1} parent=5 // pred_check
      %p5937 = pneg %p5936
    $region46: #{optimized_dis_block.1} parent=5 // pred_check_branch
      %5939 = sbr.rel (%p5937) target = $region48
    $region47: #{optimized_dis_block.1} parent=5 // pred_region
      %s5940 = ssub.s32 %s11, 2
      // Predicated region
      $region49: #{optimized_dis_block.1} parent=47 // pred_check
        %p5941 = pneg %p150
      $region50: #{optimized_dis_block.1} parent=47 // pred_check_branch
        %5943 = sbr.rel (%p5941) target = $region52
      $region51: #{optimized_dis_block.1} parent=47 // pred_region
        %p5944 = scmp.lt.s32.totalorder %s17, 1
        %s5945 = scalar_select %p5944, %s17, 1
        %s5946 = smul.addr %s5945, 8
        %s5947 = smul.addr %s5946, 8
        %s5948 = scalar_lea.vmem %s5, %s5947
      $region52: #{optimized_dis_block.1} parent=47 // pred_fallthru
        _
    $region48: #{optimized_dis_block.1} parent=5 // pred_fallthru
      _
  $region6: #{optimized_dis_block.1} parent=0 // loop_footer
    %s15 = sadd.s32 1, %s11
  $region7: #{optimized_dis_block.1} parent=0 // loop_footer_branch
    %10 = sbr.rel target = $region3
  $region8: #{optimized_dis_block.1} parent=0 // loop_exit
    _

</llo_original>
